<compile_context>
chip_gen: v7x
topology: tpu7x:2x2x1
jax: 0.10.0
libtpu: 0.0.40
codegen_flags: <defaults>
</compile_context>

<pallas_src>
from functools import partial

import jax
import jax.numpy as jnp
import numpy as np
from jax.experimental import pallas as pl
from jax.experimental.pallas import tpu as pltpu


def _round_up(v, m):
    return (v + m - 1) // m * m


# ---------------------------------------------------------------------------
# Fused kernel: 1x1 conv + BN + ABF fuse + 3x3 conv (pad=1) + BN, per image.
# ---------------------------------------------------------------------------
def _abf_fused_kernel(*refs, fuse, cmid, cpad):
    if fuse:
        (x_ref, y_ref, w1_ref, b1_ref, w2_ref, b2_ref,
         out_ref, xf_ref, xfs_ref) = refs
    else:
        (x_ref, w1_ref, b1_ref, w2_ref, b2_ref,
         out_ref, xf_ref, xfs_ref) = refs
        y_ref = None

    _, h, w, cin = x_ref.shape
    cout = w2_ref.shape[-1]

    # ---- 1x1 conv (bf16 MXU, f32 accumulate); BN scale pre-folded into w1 ---
    x_flat = x_ref[0].reshape(h * w, cin)                            # bf16
    x1 = jnp.dot(x_flat, w1_ref[...], preferred_element_type=jnp.float32)
    x1 = x1 + b1_ref[0:1, :]                                         # f32

    # ---- ABF fuse: z = cat([x1, y]) -> z[:,0]/z[:,1] are x1 channels 0/1 ----
    if fuse:
        y_flat = y_ref[0].reshape(h * w, cmid).astype(jnp.float32)
        xf = x1 * x1[:, 0:1] + y_flat * x1[:, 1:2]
    else:
        xf = x1
    xf3 = xf.reshape(h, w, cmid)
    xf_ref[0] = xf3                                                  # module output (f32)

    # ---- stage xf (bf16, cast once) into an H-padded scratch whose lane axis
    # concatenates the three W-shifts at 128-aligned offsets:
    #   xfs[1+i, j, dw*cpad + c] == xf[i, j + dw - 1, c]   (zero outside image)
    xf_bf = xf3.astype(jnp.bfloat16)

    # Halo zeroing every step (cheap: 2 rows + 2 thin columns + pad strips).
    # NOTE: a once-only `pl.when(program_id(0)==0)` zero would break if the
    # "parallel" batch axis is split across cores (each core has its own
    # scratch), so the halo is refreshed per image instead of the whole buffer.
    zrow = jnp.zeros((w, 3 * cpad), jnp.bfloat16)
    xfs_ref[0, :, :] = zrow
    xfs_ref[h + 1, :, :] = zrow
    zcol = jnp.zeros((h, 1, cmid), jnp.bfloat16)
    xfs_ref[1:h + 1, 0:1, 0:cmid] = zcol                             # left shift halo
    xfs_ref[1:h + 1, w - 1:w, 2 * cpad:2 * cpad + cmid] = zcol       # right shift halo
    if cpad != cmid:                                                 # toy sizes only
        zpad = jnp.zeros((h, w, cpad - cmid), jnp.bfloat16)
        for dw in range(3):
            xfs_ref[1:h + 1, :, dw * cpad + cmid:(dw + 1) * cpad] = zpad

    xfs_ref[1:h + 1, :, cpad:cpad + cmid] = xf_bf                    # dw = 1 (center)
    xfs_ref[1:h + 1, 1:w, 0:cmid] = xf_bf[:, :w - 1, :]              # dw = 0 (xf[., j-1])
    xfs_ref[1:h + 1, 0:w - 1, 2 * cpad:2 * cpad + cmid] = xf_bf[:, 1:, :]  # dw = 2

    # ---- 3x3 conv (pad=1) as 3 MXU matmuls with K = 3*cpad; BN scale is in
    # w2 already, bias add fused into the final output store. ----------------
    acc = None
    for dh in range(3):
        patch = xfs_ref[dh:dh + h].reshape(h * w, 3 * cpad)          # bf16, outer-H slice
        contrib = jnp.dot(patch, w2_ref[dh], preferred_element_type=jnp.float32)
        acc = contrib if acc is None else acc + contrib
    out = acc + b2_ref[0:1, :]
    out_ref[0] = out.reshape(h, w, cout)


# ---------------------------------------------------------------------------
# Glue
# ---------------------------------------------------------------------------
def nearest_resize_nhwc(y, out_h, out_w):
    # F.interpolate(mode='nearest'): src = floor(dst * in / out)
    _, h_in, w_in, _ = y.shape
    hi = (jnp.arange(out_h) * h_in) // out_h
    wi = (jnp.arange(out_w) * w_in) // out_w
    return y[:, hi][:, :, wi]


def abf_forward(params, x_nchw, y_nchw=None):
    n, cin, h, w = x_nchw.shape
    cmid = params["w1"].shape[1]
    cout = params["w2"].shape[-1]
    fuse = params["fuse"]
    cpad = _round_up(cmid, 128)   # keep the lane-concat offsets vreg-aligned

    # NCHW -> NHWC at the module boundary (PyTorch interface is NCHW).
    # TODO(synk): keep NHWC (and optionally bf16) end-to-end to drop the two
    # full-tensor f32 transposes and halve output HBM writeback if the caller
    # allows; they remain XLA edge ops here to preserve the module interface.
    x_nhwc = jnp.transpose(x_nchw, (0, 2, 3, 1)).astype(jnp.bfloat16)

    operands = [x_nhwc]
    in_specs = [pl.BlockSpec((1, h, w, cin), lambda i: (i, 0, 0, 0))]
    if fuse:
        assert cmid >= 2, "fuse path reads x1 channels 0 and 1 (needs mid_channel >= 2)"
        # TODO(synk): fold the nearest-upsample of y into the kernel (integer
        # replication in VMEM or scalar-prefetched index tables) to cut y's HBM
        # traffic by the upsample factor squared; it stays an XLA edge op here.
        y_nhwc = jnp.transpose(y_nchw, (0, 2, 3, 1)).astype(jnp.bfloat16)
        y_nhwc = nearest_resize_nhwc(y_nhwc, h, w)
        operands.append(y_nhwc)
        in_specs.append(pl.BlockSpec((1, h, w, cmid), lambda i: (i, 0, 0, 0)))

    # Fold eval-mode BN scales into the conv weights in f32, then cast to bf16;
    # only the bias adds remain in the kernel.
    w1 = (params["w1"] * params["scale1"][None, :]).astype(jnp.bfloat16)
    b1 = params["bias1"].reshape(1, cmid).astype(jnp.float32)
    w2s = params["w2"] * params["scale2"][None, None, None, :]        # (3,3,cmid,cout) f32
    w2r = jnp.zeros((3, 3, cpad, cout), jnp.float32).at[:, :, :cmid, :].set(w2s)
    w2r = w2r.reshape(3, 3 * cpad, cout).astype(jnp.bfloat16)         # K = 3*cpad
    b2 = params["bias2"].reshape(1, cout).astype(jnp.float32)

    operands += [w1, b1, w2r, b2]
    in_specs += [
        pl.BlockSpec((cin, cmid), lambda i: (0, 0)),
        pl.BlockSpec((1, cmid), lambda i: (0, 0)),
        pl.BlockSpec((3, 3 * cpad, cout), lambda i: (0, 0, 0)),
        pl.BlockSpec((1, cout), lambda i: (0, 0)),
    ]

    # Scoped VMEM: ~3/4 of physical capacity (96 MiB-class on v5e/v6e, ~48 MiB
    # on v7x), capped at 100 MiB.
    try:
        vmem_cap = pltpu.get_tpu_info().vmem_capacity_bytes
    except Exception:
        vmem_cap = 64 * 1024 * 1024
    vmem_limit = min(int(vmem_cap) * 3 // 4, 100 * 1024 * 1024)

    # TODO(synk): for very large H*W (v7x 64 MiB VMEM) tile the spatial H axis
    # with a 1-row halo instead of whole-image-per-batch-element blocks.
    out, xf = pl.pallas_call(
        partial(_abf_fused_kernel, fuse=fuse, cmid=cmid, cpad=cpad),
        out_shape=(jax.ShapeDtypeStruct((n, h, w, cout), jnp.float32),
                   jax.ShapeDtypeStruct((n, h, w, cmid), jnp.float32)),
        grid=(n,),
        in_specs=in_specs,
        out_specs=(pl.BlockSpec((1, h, w, cout), lambda i: (i, 0, 0, 0)),
                   pl.BlockSpec((1, h, w, cmid), lambda i: (i, 0, 0, 0))),
        scratch_shapes=[pltpu.VMEM((h + 2, w, 3 * cpad), jnp.bfloat16)],
        compiler_params=pltpu.CompilerParams(
            dimension_semantics=("parallel",),
            vmem_limit_bytes=vmem_limit),
    )(*operands)

    # Module returns (y, x) in NCHW.
    return jnp.transpose(out, (0, 3, 1, 2)), jnp.transpose(xf, (0, 3, 1, 2))


def init_params(key, in_channel, mid_channel, out_channel, fuse, eps=1e-5):
    ks = jax.random.split(key, 6)
    # kaiming_uniform_(a=1): bound = sqrt(3 / fan_in)
    b1 = (3.0 / in_channel) ** 0.5
    w1 = jax.random.uniform(ks[0], (in_channel, mid_channel), jnp.float32, -b1, b1)
    b2 = (3.0 / (mid_channel * 9)) ** 0.5
    w2 = jax.random.uniform(ks[1], (3, 3, mid_channel, out_channel), jnp.float32, -b2, b2)

    def bn(kg, kb, c):
        gamma = 1.0 + 0.1 * jax.random.normal(kg, (c,), jnp.float32)
        beta = 0.05 * jax.random.normal(kb, (c,), jnp.float32)
        mean = 0.1 * jnp.arange(c, dtype=jnp.float32) - 0.2
        var = 1.0 + 0.05 * jnp.arange(c, dtype=jnp.float32)
        scale = gamma / jnp.sqrt(var + eps)      # eval-mode BN folded into scale/bias
        return scale, beta - mean * scale

    scale1, bias1 = bn(ks[2], ks[3], mid_channel)
    scale2, bias2 = bn(ks[4], ks[5], out_channel)
    # TODO(synk): self.att_conv is constructed when fuse=True but never applied
    # in the given forward (z = torch.cat([x, y]) is used directly), so it has
    # no effect on the output and no weights are created here.
    return dict(w1=w1, w2=w2,
                scale1=scale1, bias1=bias1, scale2=scale2, bias2=bias2, fuse=fuse)


def reference_forward(params, x_nchw, y_nchw):
    # Pure-JAX reference. It mirrors the kernel's quantization choices (x, y,
    # scale-folded w1/w2 in bf16; conv2 LHS re-quantized to bf16) so both sides
    # see the same quantized inputs and only accumulation order differs.
    n, cin, h, w = x_nchw.shape
    cmid = params["w1"].shape[1]
    f32 = jnp.float32
    dn = ("NHWC", "HWIO", "NHWC")
    x = jnp.transpose(x_nchw, (0, 2, 3, 1)).astype(jnp.bfloat16).astype(f32)
    w1 = (params["w1"] * params["scale1"][None, :]).astype(jnp.bfloat16).astype(f32)
    x1 = jax.lax.conv_general_dilated(x, w1.reshape(1, 1, cin, cmid), (1, 1), "VALID",
                                      dimension_numbers=dn)
    x1 = x1 + params["bias1"]
    if params["fuse"]:
        y = jnp.transpose(y_nchw, (0, 2, 3, 1)).astype(jnp.bfloat16).astype(f32)
        y = nearest_resize_nhwc(y, h, w)
        z = jnp.concatenate([x1, y], axis=-1)
        xf = x1 * z[..., 0:1] + y * z[..., 1:2]
    else:
        xf = x1
    xf_q = xf.astype(jnp.bfloat16).astype(f32)   # kernel casts the conv2 lhs to bf16
    w2 = (params["w2"] * params["scale2"][None, None, None, :]
          ).astype(jnp.bfloat16).astype(f32)
    y2 = jax.lax.conv_general_dilated(xf_q, w2, (1, 1), "SAME", dimension_numbers=dn)
    y2 = y2 + params["bias2"]
    return jnp.transpose(y2, (0, 3, 1, 2)), jnp.transpose(xf, (0, 3, 1, 2))


if __name__ == "__main__":
    in_channel, mid_channel, out_channel = 4, 8, 4
    N, H, W = 2, 16, 16
    Hy, Wy = 8, 8                                 # y gets nearest-upsampled to 16x16

    key = jax.random.PRNGKey(0)
    kp, kx, ky = jax.random.split(key, 3)
    params = init_params(kp, in_channel, mid_channel, out_channel, fuse=True)
    x = jax.random.normal(kx, (N, in_channel, H, W), jnp.float32)
    y = jax.random.normal(ky, (N, mid_channel, Hy, Wy), jnp.float32)

    out_y, out_x = abf_forward(params, x, y)
    jax.block_until_ready((out_y, out_x))

    ref_y, ref_x = reference_forward(params, x, y)
    # xf has no extra quantization beyond the shared bf16 inputs -> tight check.
    np.testing.assert_allclose(np.asarray(out_x), np.asarray(ref_x), rtol=1e-4, atol=1e-4)
    # out goes through a bf16 re-quantization of xf on both sides; a rare 1-ulp
    # difference in xf can round differently, so use a looser (still
    # structure-detecting) tolerance here.
    np.testing.assert_allclose(np.asarray(out_y), np.asarray(ref_y), rtol=1e-2, atol=1e-2)

    print("KERNEL_OK")
</pallas_src>

<mosaic_0001>
module attributes {stable_mosaic.version = 11 : i64} {
  func.func @_abf_fused_kernel(%arg0: i32, %arg1: memref<1x16x16x4xbf16, #tpu.memory_space<vmem>>, %arg2: memref<1x16x16x8xbf16, #tpu.memory_space<vmem>>, %arg3: memref<4x8xbf16, #tpu.memory_space<vmem>>, %arg4: memref<1x8xf32, #tpu.memory_space<vmem>>, %arg5: memref<3x384x4xbf16, #tpu.memory_space<vmem>>, %arg6: memref<1x4xf32, #tpu.memory_space<vmem>>, %arg7: memref<1x16x16x4xf32, #tpu.memory_space<vmem>>, %arg8: memref<1x16x16x8xf32, #tpu.memory_space<vmem>>, %arg9: memref<18x16x384xbf16, #tpu.memory_space<vmem>>) attributes {dimension_semantics = [#tpu.dimension_semantics<parallel>], iteration_bounds = array<i64: 2>, scalar_prefetch = 0 : i64, scratch_operands = 1 : i64, tpu.core_type = #tpu.core_type<tc>, window_params = [{transform_indices = @transform_0, window_bounds = array<i64: 1, 16, 16, 4>}, {transform_indices = @transform_1, window_bounds = array<i64: 1, 16, 16, 8>}, {pipeline_mode = #tpu.pipeline_mode<synchronous>, transform_indices = @transform_2, window_bounds = array<i64: 4, 8>}, {pipeline_mode = #tpu.pipeline_mode<synchronous>, transform_indices = @transform_3, window_bounds = array<i64: 1, 8>}, {pipeline_mode = #tpu.pipeline_mode<synchronous>, transform_indices = @transform_4, window_bounds = array<i64: 3, 384, 4>}, {pipeline_mode = #tpu.pipeline_mode<synchronous>, transform_indices = @transform_5, window_bounds = array<i64: 1, 4>}, {transform_indices = @transform_6, window_bounds = array<i64: 1, 16, 16, 4>}, {transform_indices = @transform_7, window_bounds = array<i64: 1, 16, 16, 8>}]} {
    %c0 = arith.constant 0 : index
    %c0_0 = arith.constant 0 : index
    %c0_1 = arith.constant 0 : index
    %c0_2 = arith.constant 0 : index
    %0 = vector.load %arg1[%c0, %c0_0, %c0_1, %c0_2] : memref<1x16x16x4xbf16, #tpu.memory_space<vmem>>, vector<1x16x16x4xbf16>
    %1 = vector.shape_cast %0 : vector<1x16x16x4xbf16> to vector<16x16x4xbf16>
    %2 = vector.shape_cast %1 : vector<16x16x4xbf16> to vector<256x4xbf16>
    %c0_3 = arith.constant 0 : index
    %c0_4 = arith.constant 0 : index
    %3 = vector.load %arg3[%c0_3, %c0_4] : memref<4x8xbf16, #tpu.memory_space<vmem>>, vector<4x8xbf16>
    %cst = arith.constant dense<0.000000e+00> : vector<256x8xf32>
    %4 = tpu.matmul %2, %3, %cst {dimension_numbers = #tpu.dot_dimension_numbers<[1], [0], [0], [1], [0, 0, 1, 1], [], []>} : vector<256x4xbf16>, vector<4x8xbf16>, vector<256x8xf32> -> vector<256x8xf32>
    %c0_5 = arith.constant 0 : index
    %c0_6 = arith.constant 0 : index
    %5 = vector.load %arg4[%c0_5, %c0_6] : memref<1x8xf32, #tpu.memory_space<vmem>>, vector<1x8xf32>
    %6 = vector.broadcast %5 : vector<1x8xf32> to vector<256x8xf32>
    %7 = arith.addf %4, %6 : vector<256x8xf32>
    %c0_7 = arith.constant 0 : index
    %c0_8 = arith.constant 0 : index
    %c0_9 = arith.constant 0 : index
    %c0_10 = arith.constant 0 : index
    %8 = vector.load %arg2[%c0_7, %c0_8, %c0_9, %c0_10] : memref<1x16x16x8xbf16, #tpu.memory_space<vmem>>, vector<1x16x16x8xbf16>
    %9 = vector.shape_cast %8 : vector<1x16x16x8xbf16> to vector<16x16x8xbf16>
    %10 = vector.shape_cast %9 : vector<16x16x8xbf16> to vector<256x8xbf16>
    %11 = arith.extf %10 : vector<256x8xbf16> to vector<256x8xf32>
    %12 = vector.extract_strided_slice %7 {offsets = [0, 0], sizes = [256, 1], strides = [1, 1]} : vector<256x8xf32> to vector<256x1xf32>
    %13 = vector.broadcast %12 : vector<256x1xf32> to vector<256x8xf32>
    %14 = arith.mulf %7, %13 : vector<256x8xf32>
    %15 = vector.extract_strided_slice %7 {offsets = [0, 1], sizes = [256, 1], strides = [1, 1]} : vector<256x8xf32> to vector<256x1xf32>
    %16 = vector.broadcast %15 : vector<256x1xf32> to vector<256x8xf32>
    %17 = arith.mulf %11, %16 : vector<256x8xf32>
    %18 = arith.addf %14, %17 : vector<256x8xf32>
    %19 = vector.shape_cast %18 : vector<256x8xf32> to vector<16x16x8xf32>
    %c0_11 = arith.constant 0 : index
    %c0_12 = arith.constant 0 : index
    %c0_13 = arith.constant 0 : index
    %c0_14 = arith.constant 0 : index
    %20 = vector.load %arg8[%c0_11, %c0_12, %c0_13, %c0_14] : memref<1x16x16x8xf32, #tpu.memory_space<vmem>>, vector<1x16x16x8xf32>
    %21 = vector.shape_cast %20 : vector<1x16x16x8xf32> to vector<16x16x8xf32>
    %22 = vector.shape_cast %19 : vector<16x16x8xf32> to vector<1x16x16x8xf32>
    tpu.vector_store %arg8[%c0_11, %c0_12, %c0_13, %c0_14], %22 {strides = array<i32>} : memref<1x16x16x8xf32, #tpu.memory_space<vmem>>, vector<1x16x16x8xf32>,
    %23 = arith.truncf %19 : vector<16x16x8xf32> to vector<16x16x8xbf16>
    %cst_15 = arith.constant 0.000000e+00 : bf16
    %24 = vector.broadcast %cst_15 : bf16 to vector<16x384xbf16>
    %c0_16 = arith.constant 0 : index
    %c0_17 = arith.constant 0 : index
    %c0_18 = arith.constant 0 : index
    %25 = vector.load %arg9[%c0_16, %c0_17, %c0_18] : memref<18x16x384xbf16, #tpu.memory_space<vmem>>, vector<1x16x384xbf16>
    %26 = vector.shape_cast %25 : vector<1x16x384xbf16> to vector<16x384xbf16>
    %27 = vector.shape_cast %24 : vector<16x384xbf16> to vector<1x16x384xbf16>
    tpu.vector_store %arg9[%c0_16, %c0_17, %c0_18], %27 {strides = array<i32>} : memref<18x16x384xbf16, #tpu.memory_space<vmem>>, vector<1x16x384xbf16>,
    %c17 = arith.constant 17 : index
    %c0_19 = arith.constant 0 : index
    %c0_20 = arith.constant 0 : index
    %28 = vector.load %arg9[%c17, %c0_19, %c0_20] : memref<18x16x384xbf16, #tpu.memory_space<vmem>>, vector<1x16x384xbf16>
    %29 = vector.shape_cast %28 : vector<1x16x384xbf16> to vector<16x384xbf16>
    %30 = vector.shape_cast %24 : vector<16x384xbf16> to vector<1x16x384xbf16>
    tpu.vector_store %arg9[%c17, %c0_19, %c0_20], %30 {strides = array<i32>} : memref<18x16x384xbf16, #tpu.memory_space<vmem>>, vector<1x16x384xbf16>,
    %cst_21 = arith.constant 0.000000e+00 : bf16
    %31 = vector.broadcast %cst_21 : bf16 to vector<16x1x8xbf16>
    %c1 = arith.constant 1 : index
    %c0_22 = arith.constant 0 : index
    %c0_23 = arith.constant 0 : index
    %32 = vector.load %arg9[%c1, %c0_22, %c0_23] : memref<18x16x384xbf16, #tpu.memory_space<vmem>>, vector<16x1x8xbf16>
    tpu.vector_store %arg9[%c1, %c0_22, %c0_23], %31 {strides = array<i32>} : memref<18x16x384xbf16, #tpu.memory_space<vmem>>, vector<16x1x8xbf16>,
    %c1_24 = arith.constant 1 : index
    %c15 = arith.constant 15 : index
    %c256 = arith.constant 256 : index
    %33 = vector.load %arg9[%c1_24, %c15, %c256] : memref<18x16x384xbf16, #tpu.memory_space<vmem>>, vector<16x1x8xbf16>
    tpu.vector_store %arg9[%c1_24, %c15, %c256], %31 {strides = array<i32>} : memref<18x16x384xbf16, #tpu.memory_space<vmem>>, vector<16x1x8xbf16>,
    %cst_25 = arith.constant 0.000000e+00 : bf16
    %34 = vector.broadcast %cst_25 : bf16 to vector<16x16x120xbf16>
    %c1_26 = arith.constant 1 : index
    %c0_27 = arith.constant 0 : index
    %c8 = arith.constant 8 : index
    %35 = vector.load %arg9[%c1_26, %c0_27, %c8] : memref<18x16x384xbf16, #tpu.memory_space<vmem>>, vector<16x16x120xbf16>
    tpu.vector_store %arg9[%c1_26, %c0_27, %c8], %34 {strides = array<i32>} : memref<18x16x384xbf16, #tpu.memory_space<vmem>>, vector<16x16x120xbf16>,
    %c1_28 = arith.constant 1 : index
    %c0_29 = arith.constant 0 : index
    %c136 = arith.constant 136 : index
    %36 = vector.load %arg9[%c1_28, %c0_29, %c136] : memref<18x16x384xbf16, #tpu.memory_space<vmem>>, vector<16x16x120xbf16>
    tpu.vector_store %arg9[%c1_28, %c0_29, %c136], %34 {strides = array<i32>} : memref<18x16x384xbf16, #tpu.memory_space<vmem>>, vector<16x16x120xbf16>,
    %c1_30 = arith.constant 1 : index
    %c0_31 = arith.constant 0 : index
    %c264 = arith.constant 264 : index
    %37 = vector.load %arg9[%c1_30, %c0_31, %c264] : memref<18x16x384xbf16, #tpu.memory_space<vmem>>, vector<16x16x120xbf16>
    tpu.vector_store %arg9[%c1_30, %c0_31, %c264], %34 {strides = array<i32>} : memref<18x16x384xbf16, #tpu.memory_space<vmem>>, vector<16x16x120xbf16>,
    %c1_32 = arith.constant 1 : index
    %c0_33 = arith.constant 0 : index
    %c128 = arith.constant 128 : index
    %38 = vector.load %arg9[%c1_32, %c0_33, %c128] : memref<18x16x384xbf16, #tpu.memory_space<vmem>>, vector<16x16x8xbf16>
    tpu.vector_store %arg9[%c1_32, %c0_33, %c128], %23 {strides = array<i32>} : memref<18x16x384xbf16, #tpu.memory_space<vmem>>, vector<16x16x8xbf16>,
    %39 = vector.extract_strided_slice %23 {offsets = [0, 0, 0], sizes = [16, 15, 8], strides = [1, 1, 1]} : vector<16x16x8xbf16> to vector<16x15x8xbf16>
    %c1_34 = arith.constant 1 : index
    %c1_35 = arith.constant 1 : index
    %c0_36 = arith.constant 0 : index
    %40 = vector.load %arg9[%c1_34, %c1_35, %c0_36] : memref<18x16x384xbf16, #tpu.memory_space<vmem>>, vector<16x15x8xbf16>
    tpu.vector_store %arg9[%c1_34, %c1_35, %c0_36], %39 {strides = array<i32>} : memref<18x16x384xbf16, #tpu.memory_space<vmem>>, vector<16x15x8xbf16>,
    %41 = vector.extract_strided_slice %23 {offsets = [0, 1, 0], sizes = [16, 15, 8], strides = [1, 1, 1]} : vector<16x16x8xbf16> to vector<16x15x8xbf16>
    %c1_37 = arith.constant 1 : index
    %c0_38 = arith.constant 0 : index
    %c256_39 = arith.constant 256 : index
    %42 = vector.load %arg9[%c1_37, %c0_38, %c256_39] : memref<18x16x384xbf16, #tpu.memory_space<vmem>>, vector<16x15x8xbf16>
    tpu.vector_store %arg9[%c1_37, %c0_38, %c256_39], %41 {strides = array<i32>} : memref<18x16x384xbf16, #tpu.memory_space<vmem>>, vector<16x15x8xbf16>,
    %c0_40 = arith.constant 0 : index
    %c0_41 = arith.constant 0 : index
    %c0_42 = arith.constant 0 : index
    %43 = vector.load %arg9[%c0_40, %c0_41, %c0_42] : memref<18x16x384xbf16, #tpu.memory_space<vmem>>, vector<16x16x384xbf16>
    %44 = vector.shape_cast %43 : vector<16x16x384xbf16> to vector<256x384xbf16>
    %c0_43 = arith.constant 0 : index
    %c0_44 = arith.constant 0 : index
    %c0_45 = arith.constant 0 : index
    %45 = vector.load %arg5[%c0_43, %c0_44, %c0_45] : memref<3x384x4xbf16, #tpu.memory_space<vmem>>, vector<1x384x4xbf16>
    %46 = vector.shape_cast %45 : vector<1x384x4xbf16> to vector<384x4xbf16>
    %cst_46 = arith.constant dense<0.000000e+00> : vector<256x4xf32>
    %47 = tpu.matmul %44, %46, %cst_46 {dimension_numbers = #tpu.dot_dimension_numbers<[1], [0], [0], [1], [0, 0, 1, 1], [], []>} : vector<256x384xbf16>, vector<384x4xbf16>, vector<256x4xf32> -> vector<256x4xf32>
    %c1_47 = arith.constant 1 : index
    %c0_48 = arith.constant 0 : index
    %c0_49 = arith.constant 0 : index
    %48 = vector.load %arg9[%c1_47, %c0_48, %c0_49] : memref<18x16x384xbf16, #tpu.memory_space<vmem>>, vector<16x16x384xbf16>
    %49 = vector.shape_cast %48 : vector<16x16x384xbf16> to vector<256x384xbf16>
    %c1_50 = arith.constant 1 : index
    %c0_51 = arith.constant 0 : index
    %c0_52 = arith.constant 0 : index
    %50 = vector.load %arg5[%c1_50, %c0_51, %c0_52] : memref<3x384x4xbf16, #tpu.memory_space<vmem>>, vector<1x384x4xbf16>
    %51 = vector.shape_cast %50 : vector<1x384x4xbf16> to vector<384x4xbf16>
    %cst_53 = arith.constant dense<0.000000e+00> : vector<256x4xf32>
    %52 = tpu.matmul %49, %51, %cst_53 {dimension_numbers = #tpu.dot_dimension_numbers<[1], [0], [0], [1], [0, 0, 1, 1], [], []>} : vector<256x384xbf16>, vector<384x4xbf16>, vector<256x4xf32> -> vector<256x4xf32>
    %53 = arith.addf %47, %52 : vector<256x4xf32>
    %c2 = arith.constant 2 : index
    %c0_54 = arith.constant 0 : index
    %c0_55 = arith.constant 0 : index
    %54 = vector.load %arg9[%c2, %c0_54, %c0_55] : memref<18x16x384xbf16, #tpu.memory_space<vmem>>, vector<16x16x384xbf16>
    %55 = vector.shape_cast %54 : vector<16x16x384xbf16> to vector<256x384xbf16>
    %c2_56 = arith.constant 2 : index
    %c0_57 = arith.constant 0 : index
    %c0_58 = arith.constant 0 : index
    %56 = vector.load %arg5[%c2_56, %c0_57, %c0_58] : memref<3x384x4xbf16, #tpu.memory_space<vmem>>, vector<1x384x4xbf16>
    %57 = vector.shape_cast %56 : vector<1x384x4xbf16> to vector<384x4xbf16>
    %cst_59 = arith.constant dense<0.000000e+00> : vector<256x4xf32>
    %58 = tpu.matmul %55, %57, %cst_59 {dimension_numbers = #tpu.dot_dimension_numbers<[1], [0], [0], [1], [0, 0, 1, 1], [], []>} : vector<256x384xbf16>, vector<384x4xbf16>, vector<256x4xf32> -> vector<256x4xf32>
    %59 = arith.addf %53, %58 : vector<256x4xf32>
    %c0_60 = arith.constant 0 : index
    %c0_61 = arith.constant 0 : index
    %60 = vector.load %arg6[%c0_60, %c0_61] : memref<1x4xf32, #tpu.memory_space<vmem>>, vector<1x4xf32>
    %61 = vector.broadcast %60 : vector<1x4xf32> to vector<256x4xf32>
    %62 = arith.addf %59, %61 : vector<256x4xf32>
    %63 = vector.shape_cast %62 : vector<256x4xf32> to vector<16x16x4xf32>
    %c0_62 = arith.constant 0 : index
    %c0_63 = arith.constant 0 : index
    %c0_64 = arith.constant 0 : index
    %c0_65 = arith.constant 0 : index
    %64 = vector.load %arg7[%c0_62, %c0_63, %c0_64, %c0_65] : memref<1x16x16x4xf32, #tpu.memory_space<vmem>>, vector<1x16x16x4xf32>
    %65 = vector.shape_cast %64 : vector<1x16x16x4xf32> to vector<16x16x4xf32>
    %66 = vector.shape_cast %63 : vector<16x16x4xf32> to vector<1x16x16x4xf32>
    tpu.vector_store %arg7[%c0_62, %c0_63, %c0_64, %c0_65], %66 {strides = array<i32>} : memref<1x16x16x4xf32, #tpu.memory_space<vmem>>, vector<1x16x16x4xf32>,
    return
  }
  func.func @transform_0(%arg0: i32) -> (i32, i32, i32, i32) {
    %c0_i32 = arith.constant 0 : i32
    %c0_i32_0 = arith.constant 0 : i32
    %c0_i32_1 = arith.constant 0 : i32
    %c0_i32_2 = arith.constant 0 : i32
    return %arg0, %c0_i32, %c0_i32_0, %c0_i32_1 : i32, i32, i32, i32
  }
  func.func @transform_1(%arg0: i32) -> (i32, i32, i32, i32) {
    %c0_i32 = arith.constant 0 : i32
    %c0_i32_0 = arith.constant 0 : i32
    %c0_i32_1 = arith.constant 0 : i32
    %c0_i32_2 = arith.constant 0 : i32
    return %arg0, %c0_i32, %c0_i32_0, %c0_i32_1 : i32, i32, i32, i32
  }
  func.func @transform_2(%arg0: i32) -> (i32, i32) {
    %c0_i32 = arith.constant 0 : i32
    %c0_i32_0 = arith.constant 0 : i32
    %c0_i32_1 = arith.constant 0 : i32
    return %c0_i32, %c0_i32_0 : i32, i32
  }
  func.func @transform_3(%arg0: i32) -> (i32, i32) {
    %c0_i32 = arith.constant 0 : i32
    %c0_i32_0 = arith.constant 0 : i32
    %c0_i32_1 = arith.constant 0 : i32
    return %c0_i32, %c0_i32_0 : i32, i32
  }
  func.func @transform_4(%arg0: i32) -> (i32, i32, i32) {
    %c0_i32 = arith.constant 0 : i32
    %c0_i32_0 = arith.constant 0 : i32
    %c0_i32_1 = arith.constant 0 : i32
    %c0_i32_2 = arith.constant 0 : i32
    return %c0_i32, %c0_i32_0, %c0_i32_1 : i32, i32, i32
  }
  func.func @transform_5(%arg0: i32) -> (i32, i32) {
    %c0_i32 = arith.constant 0 : i32
    %c0_i32_0 = arith.constant 0 : i32
    %c0_i32_1 = arith.constant 0 : i32
    return %c0_i32, %c0_i32_0 : i32, i32
  }
  func.func @transform_6(%arg0: i32) -> (i32, i32, i32, i32) {
    %c0_i32 = arith.constant 0 : i32
    %c0_i32_0 = arith.constant 0 : i32
    %c0_i32_1 = arith.constant 0 : i32
    %c0_i32_2 = arith.constant 0 : i32
    return %arg0, %c0_i32, %c0_i32_0, %c0_i32_1 : i32, i32, i32, i32
  }
  func.func @transform_7(%arg0: i32) -> (i32, i32, i32, i32) {
    %c0_i32 = arith.constant 0 : i32
    %c0_i32_0 = arith.constant 0 : i32
    %c0_i32_1 = arith.constant 0 : i32
    %c0_i32_2 = arith.constant 0 : i32
    return %arg0, %c0_i32, %c0_i32_0, %c0_i32_1 : i32, i32, i32, i32
  }
}

</mosaic_0001>

<llo_original>
// kernel: tpu_custom_call.1
$region0: #{tpu_custom_call.1}
  #allocation0 [shape = 'u32[]', space=smem, size = 0x4, offset = 0x4, fixed_abs, tag = 'smem constant byte address 0x4 - core index']
  #allocation1 [shape = 'u32[144,128]{1,0:T(1,128)}', space=vmem, size = 0x12000, scoped, tag = 'internal scratch']
  #allocation2 [shape = 'bf16[18,16,384]{2,1,0:T(16,128)(2,1)}', space=vmem, size = 0x36000, scoped, tag = 'scratch operand']
  %s0 = inlined_call_operand.vmem [shape: bf16[2,16,16,4], index: 0, kind: input, shape index: {}]
  %s1 = inlined_call_operand.vmem [shape: bf16[2,16,16,8], index: 1, kind: input, shape index: {}]
  %s2 = inlined_call_operand.vmem [shape: bf16[4,8], index: 2, kind: input, shape index: {}]
  %s3 = inlined_call_operand.vmem [shape: f32[1,8], index: 3, kind: input, shape index: {}]
  %s4 = inlined_call_operand.vmem [shape: bf16[3,384,4], index: 4, kind: input, shape index: {}]
  %s5 = inlined_call_operand.vmem [shape: f32[1,4], index: 5, kind: input, shape index: {}]
  %s6 = inlined_call_operand.vmem [shape: f32[2,16,16,4], index: 6, kind: output, shape index: {0}]
  %s7 = inlined_call_operand.vmem [shape: f32[2,16,16,8], index: 7, kind: output, shape index: {1}]
  %8 = xla_tuple %s6, %s7
  %s9 = sld [smem:[#allocation0]]
  $region65: #{tpu_custom_call.1} parent=0
    _
  %s11 = ssub.s32 1, %s9
  %s12 = scalar_select 0, %s11, %s9
  loop: start=0, step=1, limit=4
  $region2: #{tpu_custom_call.1} parent=0 // loop_pre_header
    _
  $region3: #{tpu_custom_call.1} parent=0 // loop_header
    %s14 = sphi 0, %s18
    %p15 = scmp.ge.s32.totalorder %s14, 4
    %s24 = sphi 0, %s26
    %s27 = sphi 0, %s24
    %s28 = sphi 0, %s27
    %s44 = sphi 0, %s28
    %s50 = sphi 0, %s52
    %s53 = sphi 0, %s50
    %s54 = sphi 0, %s53
    %s70 = sphi 0, %s54
    %s74 = sphi 0, %s74
    %s76 = sphi 0, %s74
    %s77 = sphi 0, %s76
    %s91 = sphi 0, %s77
    %s95 = sphi 0, %s95
    %s97 = sphi 0, %s95
    %s98 = sphi 0, %s97
    %s112 = sphi 0, %s98
    %s116 = sphi 0, %s116
    %s118 = sphi 0, %s116
    %s119 = sphi 0, %s118
    %s133 = sphi 0, %s119
    %s137 = sphi 0, %s137
    %s139 = sphi 0, %s137
    %s140 = sphi 0, %s139
    %s154 = sphi 0, %s140
    %s160 = sphi 0, %s162
    %s163 = sphi 0, %s160
    %s164 = sphi 0, %s163
    %s180 = sphi 0, %s164
    %s186 = sphi 0, %s188
    %s189 = sphi 0, %s186
    %s190 = sphi 0, %s189
    %s206 = sphi 0, %s190
  $region4: #{tpu_custom_call.1} parent=0 // loop_header_branch
    %17 = sbr.rel (%p15) target = $region8
  $region5: #{tpu_custom_call.1} parent=0 // loop_body
    %s19 = ssub.s32 %s14, 1
    %s20 = ssub.s32 %s14, 2
    %s21 = sadd.s32 %s14, 1
    %s22 = ssub.s32 %s14, %s21
    %p23 = scmp.eq.s32.totalorder %s22, 0
    %s25 = sadd.s32 %s24, 1
    %s26 = scalar_select %p23, %s24, %s25
    %p29 = pneg %p23
    %p30 = scmp.eq.s32.totalorder %s14, 1
    %p31 = por %p29, %p30
    %p32 = scmp.ne.s32.totalorder %s24, %s27
    %p33 = scmp.eq.s32.totalorder %s14, 0
    %p34 = por %p32, %p33
    %p35 = scmp.ne.s32.totalorder %s24, %s27
    %p36 = scmp.eq.s32.totalorder %s19, 1
    %p37 = por %p35, %p36
    %p38 = scmp.ne.s32.totalorder %s27, %s28
    %p39 = scmp.eq.s32.totalorder %s19, 0
    %p40 = por %p38, %p39
    %p41 = scmp.ne.s32.totalorder %s27, %s28
    %p42 = scmp.eq.s32.totalorder %s20, 1
    %p43 = por %p41, %p42
    %p45 = scmp.ne.s32.totalorder %s28, %s44
    %p46 = scmp.eq.s32.totalorder %s20, 0
    %p47 = por %p45, %p46
    %s48 = ssub.s32 %s14, %s21
    %p49 = scmp.eq.s32.totalorder %s48, 0
    %s51 = sadd.s32 %s50, 1
    %s52 = scalar_select %p49, %s50, %s51
    %p55 = pneg %p49
    %p56 = scmp.eq.s32.totalorder %s14, 1
    %p57 = por %p55, %p56
    %p58 = scmp.ne.s32.totalorder %s50, %s53
    %p59 = scmp.eq.s32.totalorder %s14, 0
    %p60 = por %p58, %p59
    %p61 = scmp.ne.s32.totalorder %s50, %s53
    %p62 = scmp.eq.s32.totalorder %s19, 1
    %p63 = por %p61, %p62
    %p64 = scmp.ne.s32.totalorder %s53, %s54
    %p65 = scmp.eq.s32.totalorder %s19, 0
    %p66 = por %p64, %p65
    %p67 = scmp.ne.s32.totalorder %s53, %s54
    %p68 = scmp.eq.s32.totalorder %s20, 1
    %p69 = por %p67, %p68
    %p71 = scmp.ne.s32.totalorder %s54, %s70
    %p72 = scmp.eq.s32.totalorder %s20, 0
    %p73 = por %p71, %p72
    %s75 = sadd.s32 %s74, 1
    %p78 = scmp.eq.s32.totalorder %s14, 1
    %p79 = scmp.ne.s32.totalorder %s74, %s76
    %p80 = scmp.eq.s32.totalorder %s14, 0
    %p81 = por %p79, %p80
    %p82 = scmp.ne.s32.totalorder %s74, %s76
    %p83 = scmp.eq.s32.totalorder %s19, 1
    %p84 = por %p82, %p83
    %p85 = scmp.ne.s32.totalorder %s76, %s77
    %p86 = scmp.eq.s32.totalorder %s19, 0
    %p87 = por %p85, %p86
    %p88 = scmp.ne.s32.totalorder %s76, %s77
    %p89 = scmp.eq.s32.totalorder %s20, 1
    %p90 = por %p88, %p89
    %p92 = scmp.ne.s32.totalorder %s77, %s91
    %p93 = scmp.eq.s32.totalorder %s20, 0
    %p94 = por %p92, %p93
    %s96 = sadd.s32 %s95, 1
    %p99 = scmp.eq.s32.totalorder %s14, 1
    %p100 = scmp.ne.s32.totalorder %s95, %s97
    %p101 = scmp.eq.s32.totalorder %s14, 0
    %p102 = por %p100, %p101
    %p103 = scmp.ne.s32.totalorder %s95, %s97
    %p104 = scmp.eq.s32.totalorder %s19, 1
    %p105 = por %p103, %p104
    %p106 = scmp.ne.s32.totalorder %s97, %s98
    %p107 = scmp.eq.s32.totalorder %s19, 0
    %p108 = por %p106, %p107
    %p109 = scmp.ne.s32.totalorder %s97, %s98
    %p110 = scmp.eq.s32.totalorder %s20, 1
    %p111 = por %p109, %p110
    %p113 = scmp.ne.s32.totalorder %s98, %s112
    %p114 = scmp.eq.s32.totalorder %s20, 0
    %p115 = por %p113, %p114
    %s117 = sadd.s32 %s116, 1
    %p120 = scmp.eq.s32.totalorder %s14, 1
    %p121 = scmp.ne.s32.totalorder %s116, %s118
    %p122 = scmp.eq.s32.totalorder %s14, 0
    %p123 = por %p121, %p122
    %p124 = scmp.ne.s32.totalorder %s116, %s118
    %p125 = scmp.eq.s32.totalorder %s19, 1
    %p126 = por %p124, %p125
    %p127 = scmp.ne.s32.totalorder %s118, %s119
    %p128 = scmp.eq.s32.totalorder %s19, 0
    %p129 = por %p127, %p128
    %p130 = scmp.ne.s32.totalorder %s118, %s119
    %p131 = scmp.eq.s32.totalorder %s20, 1
    %p132 = por %p130, %p131
    %p134 = scmp.ne.s32.totalorder %s119, %s133
    %p135 = scmp.eq.s32.totalorder %s20, 0
    %p136 = por %p134, %p135
    %s138 = sadd.s32 %s137, 1
    %p141 = scmp.eq.s32.totalorder %s14, 1
    %p142 = scmp.ne.s32.totalorder %s137, %s139
    %p143 = scmp.eq.s32.totalorder %s14, 0
    %p144 = por %p142, %p143
    %p145 = scmp.ne.s32.totalorder %s137, %s139
    %p146 = scmp.eq.s32.totalorder %s19, 1
    %p147 = por %p145, %p146
    %p148 = scmp.ne.s32.totalorder %s139, %s140
    %p149 = scmp.eq.s32.totalorder %s19, 0
    %p150 = por %p148, %p149
    %p151 = scmp.ne.s32.totalorder %s139, %s140
    %p152 = scmp.eq.s32.totalorder %s20, 1
    %p153 = por %p151, %p152
    %p155 = scmp.ne.s32.totalorder %s140, %s154
    %p156 = scmp.eq.s32.totalorder %s20, 0
    %p157 = por %p155, %p156
    %s158 = ssub.s32 %s14, %s21
    %p159 = scmp.eq.s32.totalorder %s158, 0
    %s161 = sadd.s32 %s160, 1
    %s162 = scalar_select %p159, %s160, %s161
    %p165 = pneg %p159
    %p166 = scmp.eq.s32.totalorder %s14, 1
    %p167 = por %p165, %p166
    %p168 = scmp.ne.s32.totalorder %s160, %s163
    %p169 = scmp.eq.s32.totalorder %s14, 0
    %p170 = por %p168, %p169
    %p171 = scmp.ne.s32.totalorder %s160, %s163
    %p172 = scmp.eq.s32.totalorder %s19, 1
    %p173 = por %p171, %p172
    %p174 = scmp.ne.s32.totalorder %s163, %s164
    %p175 = scmp.eq.s32.totalorder %s19, 0
    %p176 = por %p174, %p175
    %p177 = scmp.ne.s32.totalorder %s163, %s164
    %p178 = scmp.eq.s32.totalorder %s20, 1
    %p179 = por %p177, %p178
    %p181 = scmp.ne.s32.totalorder %s164, %s180
    %p182 = scmp.eq.s32.totalorder %s20, 0
    %p183 = por %p181, %p182
    %s184 = ssub.s32 %s14, %s21
    %p185 = scmp.eq.s32.totalorder %s184, 0
    %s187 = sadd.s32 %s186, 1
    %s188 = scalar_select %p185, %s186, %s187
    %p191 = pneg %p185
    %p192 = scmp.eq.s32.totalorder %s14, 1
    %p193 = por %p191, %p192
    %p194 = scmp.ne.s32.totalorder %s186, %s189
    %p195 = scmp.eq.s32.totalorder %s14, 0
    %p196 = por %p194, %p195
    %p197 = scmp.ne.s32.totalorder %s186, %s189
    %p198 = scmp.eq.s32.totalorder %s19, 1
    %p199 = por %p197, %p198
    %p200 = scmp.ne.s32.totalorder %s189, %s190
    %p201 = scmp.eq.s32.totalorder %s19, 0
    %p202 = por %p200, %p201
    %p203 = scmp.ne.s32.totalorder %s189, %s190
    %p204 = scmp.eq.s32.totalorder %s20, 1
    %p205 = por %p203, %p204
    %p207 = scmp.ne.s32.totalorder %s190, %s206
    %p208 = scmp.eq.s32.totalorder %s20, 0
    %p209 = por %p207, %p208
    %p210 = scmp.le.s32.totalorder 1, %s14
    %p211 = scmp.lt.s32.totalorder %s14, 3
    %p212 = pnand %p210, %p211
    %p213 = pneg %p212
    // Predicated region
    $region9: #{tpu_custom_call.1} parent=5 // pred_check
      _
    $region10: #{tpu_custom_call.1} parent=5 // pred_check_branch
      %215 = sbr.rel (%p212) target = $region12
    $region11: #{tpu_custom_call.1} parent=5 // pred_region
      %s216 = ssub.s32 %s14, 1
      // Predicated region
      $region13: #{tpu_custom_call.1} parent=11 // pred_check
        %p217 = pneg %p87
      $region14: #{tpu_custom_call.1} parent=11 // pred_check_branch
        %219 = sbr.rel (%p217) target = $region16
      $region15: #{tpu_custom_call.1} parent=11 // pred_region
        _
      $region16: #{tpu_custom_call.1} parent=11 // pred_fallthru
        _
      // Predicated region
      $region17: #{tpu_custom_call.1} parent=11 // pred_check
        %p220 = pneg %p108
      $region18: #{tpu_custom_call.1} parent=11 // pred_check_branch
        %222 = sbr.rel (%p220) target = $region20
      $region19: #{tpu_custom_call.1} parent=11 // pred_region
        _
      $region20: #{tpu_custom_call.1} parent=11 // pred_fallthru
        _
      // Predicated region
      $region21: #{tpu_custom_call.1} parent=11 // pred_check
        %p223 = pneg %p129
      $region22: #{tpu_custom_call.1} parent=11 // pred_check_branch
        %225 = sbr.rel (%p223) target = $region24
      $region23: #{tpu_custom_call.1} parent=11 // pred_region
        _
      $region24: #{tpu_custom_call.1} parent=11 // pred_fallthru
        _
      // Predicated region
      $region25: #{tpu_custom_call.1} parent=11 // pred_check
        %p226 = pneg %p150
      $region26: #{tpu_custom_call.1} parent=11 // pred_check_branch
        %228 = sbr.rel (%p226) target = $region28
      $region27: #{tpu_custom_call.1} parent=11 // pred_region
        _
      $region28: #{tpu_custom_call.1} parent=11 // pred_fallthru
        _
    $region12: #{tpu_custom_call.1} parent=5 // pred_fallthru
      _
    %p229 = scmp.lt.s32.totalorder %s14, 2
    // Predicated region
    $region29: #{tpu_custom_call.1} parent=5 // pred_check
      %p230 = pneg %p229
    $region30: #{tpu_custom_call.1} parent=5 // pred_check_branch
      %232 = sbr.rel (%p230) target = $region32
    $region31: #{tpu_custom_call.1} parent=5 // pred_region
      // Predicated region
      $region33: #{tpu_custom_call.1} parent=31 // pred_check
        %p233 = pneg %p34
      $region34: #{tpu_custom_call.1} parent=31 // pred_check_branch
        %235 = sbr.rel (%p233) target = $region36
      $region35: #{tpu_custom_call.1} parent=31 // pred_region
        %p236 = scmp.lt.s32.totalorder %s14, 1
        %s237 = scalar_select %p236, %s14, 1
        %s238 = smul.addr %s237, 32
        %s239 = smul.addr %s238, 4
        %s240 = scalar_lea.vmem %s0, %s239
      $region36: #{tpu_custom_call.1} parent=31 // pred_fallthru
        _
      // Predicated region
      $region37: #{tpu_custom_call.1} parent=31 // pred_check
        %p241 = pneg %p60
      $region38: #{tpu_custom_call.1} parent=31 // pred_check_branch
        %243 = sbr.rel (%p241) target = $region40
      $region39: #{tpu_custom_call.1} parent=31 // pred_region
        %p244 = scmp.lt.s32.totalorder %s14, 1
        %s245 = scalar_select %p244, %s14, 1
        %s246 = smul.addr %s245, 32
        %s247 = smul.addr %s246, 4
        %s248 = scalar_lea.vmem %s1, %s247
      $region40: #{tpu_custom_call.1} parent=31 // pred_fallthru
        _
    $region32: #{tpu_custom_call.1} parent=5 // pred_fallthru
      _
    %p249 = scmp.le.s32.totalorder 1, %s14
    %p250 = scmp.lt.s32.totalorder %s14, 3
    %p251 = pnand %p249, %p250
    %p252 = pneg %p251
    // Predicated region
    $region41: #{tpu_custom_call.1} parent=5 // pred_check
      _
    $region42: #{tpu_custom_call.1} parent=5 // pred_check_branch
      %254 = sbr.rel (%p251) target = $region44
    $region43: #{tpu_custom_call.1} parent=5 // pred_region
      %s255 = ssub.s32 %s14, 1
      %p256 = scmp.lt.s32.totalorder %s19, 1
      %s257 = scalar_select %p256, %s19, 1
      %s258 = smul.addr %s257, 32
      %s259 = smul.addr %s258, 4
      %s260 = scalar_lea.vmem %s0, %s259
      %p261 = pneg %p40
      %p262 = pneg %p37
      %p263 = scmp.lt.s32.totalorder %s19, 1
      %s264 = scalar_select %p263, %s19, 1
      %s265 = smul.addr %s264, 32
      %s266 = smul.addr %s265, 4
      %s267 = scalar_lea.vmem %s1, %s266
      %p268 = pneg %p66
      %p269 = pneg %p63
      %p270 = pneg %p87
      %p271 = pneg %p84
      %p272 = pneg %p108
      %p273 = pneg %p105
      %p274 = pneg %p129
      %p275 = pneg %p126
      %p276 = pneg %p150
      %p277 = pneg %p147
      %p278 = pneg %p176
      %p279 = pneg %p173
      %p280 = scmp.lt.s32.totalorder %s19, 1
      %s281 = scalar_select %p280, %s19, 1
      %s282 = smul.addr %s281, 32
      %s283 = smul.addr %s282, 8
      %s284 = scalar_lea.vmem %s6, %s283
      %p285 = pneg %p202
      %p286 = pneg %p199
      %p287 = scmp.lt.s32.totalorder %s19, 1
      %s288 = scalar_select %p287, %s19, 1
      %s289 = smul.addr %s288, 32
      %s290 = smul.addr %s289, 8
      %s291 = scalar_lea.vmem %s7, %s290
      %p292 = scmp.lt.s32.totalorder %s19, 1
      %s293 = scalar_select %p292, %s19, 1
      %s294 = smul.addr %s293, 32
      %s295 = smul.addr %s294, 4
      %s296 = scalar_lea.vmem %s0, %s295
      %p297 = scmp.lt.s32.totalorder %s19, 1
      %s298 = scalar_select %p297, %s19, 1
      %s299 = smul.addr %s298, 32
      %s300 = smul.addr %s299, 4
      %s301 = scalar_lea.vmem %s1, %s300
      %p302 = scmp.lt.s32.totalorder %s19, 1
      %s303 = scalar_select %p302, %s19, 1
      %s304 = smul.addr %s303, 32
      %s305 = smul.addr %s304, 8
      %s306 = scalar_lea.vmem %s6, %s305
      %p307 = scmp.lt.s32.totalorder %s19, 1
      %s308 = scalar_select %p307, %s19, 1
      %s309 = smul.addr %s308, 32
      %s310 = smul.addr %s309, 8
      %s311 = scalar_lea.vmem %s7, %s310
      %v313 = vld [vmem:[%s296] sm:$0xf]
      %v314 = vld [vmem:[%s296 + $0x4] sm:$0xf]
      %v315 = vld [vmem:[%s296 + $0x8] sm:$0xf]
      %v316 = vld [vmem:[%s296 + $0xc] sm:$0xf]
      %v317 = vld [vmem:[%s296 + $0x10] sm:$0xf]
      %v318 = vld [vmem:[%s296 + $0x14] sm:$0xf]
      %v319 = vld [vmem:[%s296 + $0x18] sm:$0xf]
      %v320 = vld [vmem:[%s296 + $0x1c] sm:$0xf]
      %v321 = vld [vmem:[%s296 + $0x20] sm:$0xf]
      %v322 = vld [vmem:[%s296 + $0x24] sm:$0xf]
      %v323 = vld [vmem:[%s296 + $0x28] sm:$0xf]
      %v324 = vld [vmem:[%s296 + $0x2c] sm:$0xf]
      %v325 = vld [vmem:[%s296 + $0x30] sm:$0xf]
      %v326 = vld [vmem:[%s296 + $0x34] sm:$0xf]
      %v327 = vld [vmem:[%s296 + $0x38] sm:$0xf]
      %v328 = vld [vmem:[%s296 + $0x3c] sm:$0xf]
      %v329 = vld [vmem:[%s296 + $0x40] sm:$0xf]
      %v330 = vld [vmem:[%s296 + $0x44] sm:$0xf]
      %v331 = vld [vmem:[%s296 + $0x48] sm:$0xf]
      %v332 = vld [vmem:[%s296 + $0x4c] sm:$0xf]
      %v333 = vld [vmem:[%s296 + $0x50] sm:$0xf]
      %v334 = vld [vmem:[%s296 + $0x54] sm:$0xf]
      %v335 = vld [vmem:[%s296 + $0x58] sm:$0xf]
      %v336 = vld [vmem:[%s296 + $0x5c] sm:$0xf]
      %v337 = vld [vmem:[%s296 + $0x60] sm:$0xf]
      %v338 = vld [vmem:[%s296 + $0x64] sm:$0xf]
      %v339 = vld [vmem:[%s296 + $0x68] sm:$0xf]
      %v340 = vld [vmem:[%s296 + $0x6c] sm:$0xf]
      %v341 = vld [vmem:[%s296 + $0x70] sm:$0xf]
      %v342 = vld [vmem:[%s296 + $0x74] sm:$0xf]
      %v343 = vld [vmem:[%s296 + $0x78] sm:$0xf]
      %v344 = vld [vmem:[%s296 + $0x7c] sm:$0xf]
      %v345 = vld [vmem:[%s2] sm:$0x3]
      %v346 = vld [vmem:[%s3] sm:$0x1]
      %v348 = vlaneseq
      %v349 = vshrl.u32 %v348, 7
      %v350 = vsub.s32 0, %v349
      %v351 = vrot.slane %v346, %v350
      %v385 = vunpack.c.l.b16 %v313
      %v386 = vunpack.c.l.b16 %v314
      %v387 = vunpack.c.l.b16 %v315
      %v388 = vunpack.c.l.b16 %v316
      %v389 = vunpack.c.l.b16 %v317
      %v390 = vunpack.c.l.b16 %v318
      %v391 = vunpack.c.l.b16 %v319
      %v392 = vunpack.c.l.b16 %v320
      %v393 = vunpack.c.l.b16 %v321
      %v394 = vunpack.c.l.b16 %v322
      %v395 = vunpack.c.l.b16 %v323
      %v396 = vunpack.c.l.b16 %v324
      %v397 = vunpack.c.l.b16 %v325
      %v398 = vunpack.c.l.b16 %v326
      %v399 = vunpack.c.l.b16 %v327
      %v400 = vunpack.c.l.b16 %v328
      %v401 = vunpack.c.l.b16 %v329
      %v402 = vunpack.c.l.b16 %v330
      %v403 = vunpack.c.l.b16 %v331
      %v404 = vunpack.c.l.b16 %v332
      %v405 = vunpack.c.l.b16 %v333
      %v406 = vunpack.c.l.b16 %v334
      %v407 = vunpack.c.l.b16 %v335
      %v408 = vunpack.c.l.b16 %v336
      %v409 = vunpack.c.l.b16 %v337
      %v410 = vunpack.c.l.b16 %v338
      %v411 = vunpack.c.l.b16 %v339
      %v412 = vunpack.c.l.b16 %v340
      %v413 = vunpack.c.l.b16 %v341
      %v414 = vunpack.c.l.b16 %v342
      %v415 = vunpack.c.l.b16 %v343
      %v416 = vunpack.c.l.b16 %v344
      %v417 = vpack.c.b16 %v386, %v385
      %v418 = vpack.c.b16 %v388, %v387
      %v419 = vpack.c.b16 %v390, %v389
      %v420 = vpack.c.b16 %v392, %v391
      %v421 = vpack.c.b16 %v394, %v393
      %v422 = vpack.c.b16 %v396, %v395
      %v423 = vpack.c.b16 %v398, %v397
      %v424 = vpack.c.b16 %v400, %v399
      %v425 = vpack.c.b16 %v402, %v401
      %v426 = vpack.c.b16 %v404, %v403
      %v427 = vpack.c.b16 %v406, %v405
      %v428 = vpack.c.b16 %v408, %v407
      %v429 = vpack.c.b16 %v410, %v409
      %v430 = vpack.c.b16 %v412, %v411
      %v431 = vpack.c.b16 %v414, %v413
      %v432 = vpack.c.b16 %v416, %v415
      %vm433 = vcmask 31744
      %v435 = vsel %vm433, %v417, 0
      %v438 = vsel %vm433, %v418, 0
      %v441 = vsel %vm433, %v419, 0
      %v444 = vsel %vm433, %v420, 0
      %v447 = vsel %vm433, %v421, 0
      %v450 = vsel %vm433, %v422, 0
      %v453 = vsel %vm433, %v423, 0
      %v456 = vsel %vm433, %v424, 0
      %v459 = vsel %vm433, %v425, 0
      %v462 = vsel %vm433, %v426, 0
      %v465 = vsel %vm433, %v427, 0
      %v468 = vsel %vm433, %v428, 0
      %v471 = vsel %vm433, %v429, 0
      %v474 = vsel %vm433, %v430, 0
      %v477 = vsel %vm433, %v431, 0
      %v480 = vsel %vm433, %v432, 0
      %vm482 = vcmask 1041408
      %v484 = vsel %vm482, %v345, 0
      %486 = vmatprep.subr.bf16.mxu0 0
      %487 = vmatpush1.bf16.msra.mxu0 %v484
      %488 = vmatprep.subr.bf16.mxu0 0
      %489 = vmatpush1.bf16.msra.mxu0 0
      %490 = vmatprep.subr.bf16.mxu0 0
      %491 = vmatpush1.bf16.msra.mxu0 0
      %492 = vmatprep.subr.bf16.mxu0 0
      %493 = vmatpush1.bf16.msra.mxu0 0
      %494 = vmatprep.subr.bf16.mxu0 0
      %495 = vmatpush1.bf16.msra.mxu0 0
      %496 = vmatprep.subr.bf16.mxu0 0
      %497 = vmatpush1.bf16.msra.mxu0 0
      %498 = vmatprep.subr.bf16.mxu0 0
      %499 = vmatpush1.bf16.msra.mxu0 0
      %500 = vmatprep.subr.bf16.mxu0 0
      %501 = vmatpush1.bf16.msra.mxu0 0
      %502 = vmatprep.subr.bf16.mxu0 0
      %503 = vmatpush1.bf16.msra.mxu0 0
      %504 = vmatprep.subr.bf16.mxu0 0
      %505 = vmatpush1.bf16.msra.mxu0 0
      %506 = vmatprep.subr.bf16.mxu0 0
      %507 = vmatpush1.bf16.msra.mxu0 0
      %508 = vmatprep.subr.bf16.mxu0 0
      %509 = vmatpush1.bf16.msra.mxu0 0
      %510 = vmatprep.subr.bf16.mxu0 0
      %511 = vmatpush1.bf16.msra.mxu0 0
      %512 = vmatprep.subr.bf16.mxu0 0
      %513 = vmatpush1.bf16.msra.mxu0 0
      %514 = vmatprep.subr.bf16.mxu0 0
      %515 = vmatpush1.bf16.msra.mxu0 0
      %516 = vmatprep.subr.bf16.mxu0 0
      %517 = vmatpush1.bf16.msra.mxu0 0
      %518 = vmatprep.mubr.bf16.mxu0 0
      %519 = vmatmul.mubr.bf16.gmra.mrb[0].mxu0 %v435
      %v520 = vpop.f32.mrb[0].mxu0
      %v521 = vadd.f32 %v351, %v520
      %v522 = vpop.f32.mrb[0].mxu0
      %v523 = vpop.f32.mrb[0].mxu0
      %v524 = vadd.f32 %v351, %v523
      %v525 = vpop.f32.mrb[0].mxu0
      %526 = vmatprep.mubr.bf16.mxu0 0
      %527 = vmatmul.mubr.bf16.gmra.mrb[0].mxu0 %v438
      %v528 = vpop.f32.mrb[0].mxu0
      %v529 = vadd.f32 %v351, %v528
      %v530 = vpop.f32.mrb[0].mxu0
      %v531 = vpop.f32.mrb[0].mxu0
      %v532 = vadd.f32 %v351, %v531
      %v533 = vpop.f32.mrb[0].mxu0
      %534 = vmatprep.mubr.bf16.mxu0 0
      %535 = vmatmul.mubr.bf16.gmra.mrb[0].mxu0 %v441
      %v536 = vpop.f32.mrb[0].mxu0
      %v537 = vadd.f32 %v351, %v536
      %v538 = vpop.f32.mrb[0].mxu0
      %v539 = vpop.f32.mrb[0].mxu0
      %v540 = vadd.f32 %v351, %v539
      %v541 = vpop.f32.mrb[0].mxu0
      %542 = vmatprep.mubr.bf16.mxu0 0
      %543 = vmatmul.mubr.bf16.gmra.mrb[0].mxu0 %v444
      %v544 = vpop.f32.mrb[0].mxu0
      %v545 = vadd.f32 %v351, %v544
      %v546 = vpop.f32.mrb[0].mxu0
      %v547 = vpop.f32.mrb[0].mxu0
      %v548 = vadd.f32 %v351, %v547
      %v549 = vpop.f32.mrb[0].mxu0
      %550 = vmatprep.mubr.bf16.mxu0 0
      %551 = vmatmul.mubr.bf16.gmra.mrb[0].mxu0 %v447
      %v552 = vpop.f32.mrb[0].mxu0
      %v553 = vadd.f32 %v351, %v552
      %v554 = vpop.f32.mrb[0].mxu0
      %v555 = vpop.f32.mrb[0].mxu0
      %v556 = vadd.f32 %v351, %v555
      %v557 = vpop.f32.mrb[0].mxu0
      %558 = vmatprep.mubr.bf16.mxu0 0
      %559 = vmatmul.mubr.bf16.gmra.mrb[0].mxu0 %v450
      %v560 = vpop.f32.mrb[0].mxu0
      %v561 = vadd.f32 %v351, %v560
      %v562 = vpop.f32.mrb[0].mxu0
      %v563 = vpop.f32.mrb[0].mxu0
      %v564 = vadd.f32 %v351, %v563
      %v565 = vpop.f32.mrb[0].mxu0
      %566 = vmatprep.mubr.bf16.mxu0 0
      %567 = vmatmul.mubr.bf16.gmra.mrb[0].mxu0 %v453
      %v568 = vpop.f32.mrb[0].mxu0
      %v569 = vadd.f32 %v351, %v568
      %v570 = vpop.f32.mrb[0].mxu0
      %v571 = vpop.f32.mrb[0].mxu0
      %v572 = vadd.f32 %v351, %v571
      %v573 = vpop.f32.mrb[0].mxu0
      %574 = vmatprep.mubr.bf16.mxu0 0
      %575 = vmatmul.mubr.bf16.gmra.mrb[0].mxu0 %v456
      %v576 = vpop.f32.mrb[0].mxu0
      %v577 = vadd.f32 %v351, %v576
      %v578 = vpop.f32.mrb[0].mxu0
      %v579 = vpop.f32.mrb[0].mxu0
      %v580 = vadd.f32 %v351, %v579
      %v581 = vpop.f32.mrb[0].mxu0
      %582 = vmatprep.mubr.bf16.mxu0 0
      %583 = vmatmul.mubr.bf16.gmra.mrb[0].mxu0 %v459
      %v584 = vpop.f32.mrb[0].mxu0
      %v585 = vadd.f32 %v351, %v584
      %v586 = vpop.f32.mrb[0].mxu0
      %v587 = vpop.f32.mrb[0].mxu0
      %v588 = vadd.f32 %v351, %v587
      %v589 = vpop.f32.mrb[0].mxu0
      %590 = vmatprep.mubr.bf16.mxu0 0
      %591 = vmatmul.mubr.bf16.gmra.mrb[0].mxu0 %v462
      %v592 = vpop.f32.mrb[0].mxu0
      %v593 = vadd.f32 %v351, %v592
      %v594 = vpop.f32.mrb[0].mxu0
      %v595 = vpop.f32.mrb[0].mxu0
      %v596 = vadd.f32 %v351, %v595
      %v597 = vpop.f32.mrb[0].mxu0
      %598 = vmatprep.mubr.bf16.mxu0 0
      %599 = vmatmul.mubr.bf16.gmra.mrb[0].mxu0 %v465
      %v600 = vpop.f32.mrb[0].mxu0
      %v601 = vadd.f32 %v351, %v600
      %v602 = vpop.f32.mrb[0].mxu0
      %v603 = vpop.f32.mrb[0].mxu0
      %v604 = vadd.f32 %v351, %v603
      %v605 = vpop.f32.mrb[0].mxu0
      %606 = vmatprep.mubr.bf16.mxu0 0
      %607 = vmatmul.mubr.bf16.gmra.mrb[0].mxu0 %v468
      %v608 = vpop.f32.mrb[0].mxu0
      %v609 = vadd.f32 %v351, %v608
      %v610 = vpop.f32.mrb[0].mxu0
      %v611 = vpop.f32.mrb[0].mxu0
      %v612 = vadd.f32 %v351, %v611
      %v613 = vpop.f32.mrb[0].mxu0
      %614 = vmatprep.mubr.bf16.mxu0 0
      %615 = vmatmul.mubr.bf16.gmra.mrb[0].mxu0 %v471
      %v616 = vpop.f32.mrb[0].mxu0
      %v617 = vadd.f32 %v351, %v616
      %v618 = vpop.f32.mrb[0].mxu0
      %v619 = vpop.f32.mrb[0].mxu0
      %v620 = vadd.f32 %v351, %v619
      %v621 = vpop.f32.mrb[0].mxu0
      %622 = vmatprep.mubr.bf16.mxu0 0
      %623 = vmatmul.mubr.bf16.gmra.mrb[0].mxu0 %v474
      %v624 = vpop.f32.mrb[0].mxu0
      %v625 = vadd.f32 %v351, %v624
      %v626 = vpop.f32.mrb[0].mxu0
      %v627 = vpop.f32.mrb[0].mxu0
      %v628 = vadd.f32 %v351, %v627
      %v629 = vpop.f32.mrb[0].mxu0
      %630 = vmatprep.mubr.bf16.mxu0 0
      %631 = vmatmul.mubr.bf16.gmra.mrb[0].mxu0 %v477
      %v632 = vpop.f32.mrb[0].mxu0
      %v633 = vadd.f32 %v351, %v632
      %v634 = vpop.f32.mrb[0].mxu0
      %v635 = vpop.f32.mrb[0].mxu0
      %v636 = vadd.f32 %v351, %v635
      %v637 = vpop.f32.mrb[0].mxu0
      %638 = vmatprep.mubr.bf16.mxu0 0
      %639 = vmatmul.mubr.bf16.gmra.mrb[0].mxu0 %v480
      %v640 = vpop.f32.mrb[0].mxu0
      %v641 = vadd.f32 %v351, %v640
      %v642 = vpop.f32.mrb[0].mxu0
      %v643 = vpop.f32.mrb[0].mxu0
      %v644 = vadd.f32 %v351, %v643
      %v645 = vpop.f32.mrb[0].mxu0
      %646 = vdwg.mxu0
      %v647 = vld [vmem:[%s301] sm:$0xf]
      %v648 = vld [vmem:[%s301 + $0x4] sm:$0xf]
      %v649 = vld [vmem:[%s301 + $0x8] sm:$0xf]
      %v650 = vld [vmem:[%s301 + $0xc] sm:$0xf]
      %v651 = vld [vmem:[%s301 + $0x10] sm:$0xf]
      %v652 = vld [vmem:[%s301 + $0x14] sm:$0xf]
      %v653 = vld [vmem:[%s301 + $0x18] sm:$0xf]
      %v654 = vld [vmem:[%s301 + $0x1c] sm:$0xf]
      %v655 = vld [vmem:[%s301 + $0x20] sm:$0xf]
      %v656 = vld [vmem:[%s301 + $0x24] sm:$0xf]
      %v657 = vld [vmem:[%s301 + $0x28] sm:$0xf]
      %v658 = vld [vmem:[%s301 + $0x2c] sm:$0xf]
      %v659 = vld [vmem:[%s301 + $0x30] sm:$0xf]
      %v660 = vld [vmem:[%s301 + $0x34] sm:$0xf]
      %v661 = vld [vmem:[%s301 + $0x38] sm:$0xf]
      %v662 = vld [vmem:[%s301 + $0x3c] sm:$0xf]
      %v663 = vld [vmem:[%s301 + $0x40] sm:$0xf]
      %v664 = vld [vmem:[%s301 + $0x44] sm:$0xf]
      %v665 = vld [vmem:[%s301 + $0x48] sm:$0xf]
      %v666 = vld [vmem:[%s301 + $0x4c] sm:$0xf]
      %v667 = vld [vmem:[%s301 + $0x50] sm:$0xf]
      %v668 = vld [vmem:[%s301 + $0x54] sm:$0xf]
      %v669 = vld [vmem:[%s301 + $0x58] sm:$0xf]
      %v670 = vld [vmem:[%s301 + $0x5c] sm:$0xf]
      %v671 = vld [vmem:[%s301 + $0x60] sm:$0xf]
      %v672 = vld [vmem:[%s301 + $0x64] sm:$0xf]
      %v673 = vld [vmem:[%s301 + $0x68] sm:$0xf]
      %v674 = vld [vmem:[%s301 + $0x6c] sm:$0xf]
      %v675 = vld [vmem:[%s301 + $0x70] sm:$0xf]
      %v676 = vld [vmem:[%s301 + $0x74] sm:$0xf]
      %v677 = vld [vmem:[%s301 + $0x78] sm:$0xf]
      %v678 = vld [vmem:[%s301 + $0x7c] sm:$0xf]
      %v679 = vunpack.c.l.bf16 %v647
      %v680 = vunpack.c.l.bf16 %v648
      %v681 = vunpack.c.l.bf16 %v649
      %v682 = vunpack.c.l.bf16 %v650
      %v683 = vunpack.c.l.bf16 %v651
      %v684 = vunpack.c.l.bf16 %v652
      %v685 = vunpack.c.l.bf16 %v653
      %v686 = vunpack.c.l.bf16 %v654
      %v687 = vunpack.c.l.bf16 %v655
      %v688 = vunpack.c.l.bf16 %v656
      %v689 = vunpack.c.l.bf16 %v657
      %v690 = vunpack.c.l.bf16 %v658
      %v691 = vunpack.c.l.bf16 %v659
      %v692 = vunpack.c.l.bf16 %v660
      %v693 = vunpack.c.l.bf16 %v661
      %v694 = vunpack.c.l.bf16 %v662
      %v695 = vunpack.c.l.bf16 %v663
      %v696 = vunpack.c.l.bf16 %v664
      %v697 = vunpack.c.l.bf16 %v665
      %v698 = vunpack.c.l.bf16 %v666
      %v699 = vunpack.c.l.bf16 %v667
      %v700 = vunpack.c.l.bf16 %v668
      %v701 = vunpack.c.l.bf16 %v669
      %v702 = vunpack.c.l.bf16 %v670
      %v703 = vunpack.c.l.bf16 %v671
      %v704 = vunpack.c.l.bf16 %v672
      %v705 = vunpack.c.l.bf16 %v673
      %v706 = vunpack.c.l.bf16 %v674
      %v707 = vunpack.c.l.bf16 %v675
      %v708 = vunpack.c.l.bf16 %v676
      %v709 = vunpack.c.l.bf16 %v677
      %v710 = vunpack.c.l.bf16 %v678
      %712 = vset.pattern.permute.xlu0 0
      %713 = vperm.xlu0 %712, %v521
      %v714 = vpop.permute.xlu0 %713
      %717 = vset.pattern.permute.xlu0 0
      %718 = vperm.xlu0 %717, %v524
      %v719 = vpop.permute.xlu0 %718
      %722 = vset.pattern.permute.xlu0 0
      %723 = vperm.xlu0 %722, %v529
      %v724 = vpop.permute.xlu0 %723
      %727 = vset.pattern.permute.xlu0 0
      %728 = vperm.xlu0 %727, %v532
      %v729 = vpop.permute.xlu0 %728
      %732 = vset.pattern.permute.xlu0 0
      %733 = vperm.xlu0 %732, %v537
      %v734 = vpop.permute.xlu0 %733
      %737 = vset.pattern.permute.xlu0 0
      %738 = vperm.xlu0 %737, %v540
      %v739 = vpop.permute.xlu0 %738
      %742 = vset.pattern.permute.xlu0 0
      %743 = vperm.xlu0 %742, %v545
      %v744 = vpop.permute.xlu0 %743
      %747 = vset.pattern.permute.xlu0 0
      %748 = vperm.xlu0 %747, %v548
      %v749 = vpop.permute.xlu0 %748
      %752 = vset.pattern.permute.xlu0 0
      %753 = vperm.xlu0 %752, %v553
      %v754 = vpop.permute.xlu0 %753
      %757 = vset.pattern.permute.xlu0 0
      %758 = vperm.xlu0 %757, %v556
      %v759 = vpop.permute.xlu0 %758
      %762 = vset.pattern.permute.xlu0 0
      %763 = vperm.xlu0 %762, %v561
      %v764 = vpop.permute.xlu0 %763
      %767 = vset.pattern.permute.xlu0 0
      %768 = vperm.xlu0 %767, %v564
      %v769 = vpop.permute.xlu0 %768
      %772 = vset.pattern.permute.xlu0 0
      %773 = vperm.xlu0 %772, %v569
      %v774 = vpop.permute.xlu0 %773
      %777 = vset.pattern.permute.xlu0 0
      %778 = vperm.xlu0 %777, %v572
      %v779 = vpop.permute.xlu0 %778
      %782 = vset.pattern.permute.xlu0 0
      %783 = vperm.xlu0 %782, %v577
      %v784 = vpop.permute.xlu0 %783
      %787 = vset.pattern.permute.xlu0 0
      %788 = vperm.xlu0 %787, %v580
      %v789 = vpop.permute.xlu0 %788
      %792 = vset.pattern.permute.xlu0 0
      %793 = vperm.xlu0 %792, %v585
      %v794 = vpop.permute.xlu0 %793
      %797 = vset.pattern.permute.xlu0 0
      %798 = vperm.xlu0 %797, %v588
      %v799 = vpop.permute.xlu0 %798
      %802 = vset.pattern.permute.xlu0 0
      %803 = vperm.xlu0 %802, %v593
      %v804 = vpop.permute.xlu0 %803
      %807 = vset.pattern.permute.xlu0 0
      %808 = vperm.xlu0 %807, %v596
      %v809 = vpop.permute.xlu0 %808
      %812 = vset.pattern.permute.xlu0 0
      %813 = vperm.xlu0 %812, %v601
      %v814 = vpop.permute.xlu0 %813
      %817 = vset.pattern.permute.xlu0 0
      %818 = vperm.xlu0 %817, %v604
      %v819 = vpop.permute.xlu0 %818
      %822 = vset.pattern.permute.xlu0 0
      %823 = vperm.xlu0 %822, %v609
      %v824 = vpop.permute.xlu0 %823
      %827 = vset.pattern.permute.xlu0 0
      %828 = vperm.xlu0 %827, %v612
      %v829 = vpop.permute.xlu0 %828
      %832 = vset.pattern.permute.xlu0 0
      %833 = vperm.xlu0 %832, %v617
      %v834 = vpop.permute.xlu0 %833
      %837 = vset.pattern.permute.xlu0 0
      %838 = vperm.xlu0 %837, %v620
      %v839 = vpop.permute.xlu0 %838
      %842 = vset.pattern.permute.xlu0 0
      %843 = vperm.xlu0 %842, %v625
      %v844 = vpop.permute.xlu0 %843
      %847 = vset.pattern.permute.xlu0 0
      %848 = vperm.xlu0 %847, %v628
      %v849 = vpop.permute.xlu0 %848
      %852 = vset.pattern.permute.xlu0 0
      %853 = vperm.xlu0 %852, %v633
      %v854 = vpop.permute.xlu0 %853
      %857 = vset.pattern.permute.xlu0 0
      %858 = vperm.xlu0 %857, %v636
      %v859 = vpop.permute.xlu0 %858
      %862 = vset.pattern.permute.xlu0 0
      %863 = vperm.xlu0 %862, %v641
      %v864 = vpop.permute.xlu0 %863
      %867 = vset.pattern.permute.xlu0 0
      %868 = vperm.xlu0 %867, %v644
      %v869 = vpop.permute.xlu0 %868
      %v871 = vmul.f32 %v521, %v714
      %v872 = vmul.f32 %v524, %v719
      %v873 = vmul.f32 %v529, %v724
      %v874 = vmul.f32 %v532, %v729
      %v875 = vmul.f32 %v537, %v734
      %v876 = vmul.f32 %v540, %v739
      %v877 = vmul.f32 %v545, %v744
      %v878 = vmul.f32 %v548, %v749
      %v879 = vmul.f32 %v553, %v754
      %v880 = vmul.f32 %v556, %v759
      %v881 = vmul.f32 %v561, %v764
      %v882 = vmul.f32 %v564, %v769
      %v883 = vmul.f32 %v569, %v774
      %v884 = vmul.f32 %v572, %v779
      %v885 = vmul.f32 %v577, %v784
      %v886 = vmul.f32 %v580, %v789
      %v887 = vmul.f32 %v585, %v794
      %v888 = vmul.f32 %v588, %v799
      %v889 = vmul.f32 %v593, %v804
      %v890 = vmul.f32 %v596, %v809
      %v891 = vmul.f32 %v601, %v814
      %v892 = vmul.f32 %v604, %v819
      %v893 = vmul.f32 %v609, %v824
      %v894 = vmul.f32 %v612, %v829
      %v895 = vmul.f32 %v617, %v834
      %v896 = vmul.f32 %v620, %v839
      %v897 = vmul.f32 %v625, %v844
      %v898 = vmul.f32 %v628, %v849
      %v899 = vmul.f32 %v633, %v854
      %v900 = vmul.f32 %v636, %v859
      %v901 = vmul.f32 %v641, %v864
      %v902 = vmul.f32 %v644, %v869
      %903 = vset.pattern.permute.xlu0 1
      %904 = vperm.xlu0 %903, %v521
      %v905 = vpop.permute.xlu0 %904
      %907 = vset.pattern.permute.xlu0 1
      %908 = vperm.xlu0 %907, %v524
      %v909 = vpop.permute.xlu0 %908
      %911 = vset.pattern.permute.xlu0 1
      %912 = vperm.xlu0 %911, %v529
      %v913 = vpop.permute.xlu0 %912
      %915 = vset.pattern.permute.xlu0 1
      %916 = vperm.xlu0 %915, %v532
      %v917 = vpop.permute.xlu0 %916
      %919 = vset.pattern.permute.xlu0 1
      %920 = vperm.xlu0 %919, %v537
      %v921 = vpop.permute.xlu0 %920
      %923 = vset.pattern.permute.xlu0 1
      %924 = vperm.xlu0 %923, %v540
      %v925 = vpop.permute.xlu0 %924
      %927 = vset.pattern.permute.xlu0 1
      %928 = vperm.xlu0 %927, %v545
      %v929 = vpop.permute.xlu0 %928
      %931 = vset.pattern.permute.xlu0 1
      %932 = vperm.xlu0 %931, %v548
      %v933 = vpop.permute.xlu0 %932
      %935 = vset.pattern.permute.xlu0 1
      %936 = vperm.xlu0 %935, %v553
      %v937 = vpop.permute.xlu0 %936
      %939 = vset.pattern.permute.xlu0 1
      %940 = vperm.xlu0 %939, %v556
      %v941 = vpop.permute.xlu0 %940
      %943 = vset.pattern.permute.xlu0 1
      %944 = vperm.xlu0 %943, %v561
      %v945 = vpop.permute.xlu0 %944
      %947 = vset.pattern.permute.xlu0 1
      %948 = vperm.xlu0 %947, %v564
      %v949 = vpop.permute.xlu0 %948
      %951 = vset.pattern.permute.xlu0 1
      %952 = vperm.xlu0 %951, %v569
      %v953 = vpop.permute.xlu0 %952
      %955 = vset.pattern.permute.xlu0 1
      %956 = vperm.xlu0 %955, %v572
      %v957 = vpop.permute.xlu0 %956
      %959 = vset.pattern.permute.xlu0 1
      %960 = vperm.xlu0 %959, %v577
      %v961 = vpop.permute.xlu0 %960
      %963 = vset.pattern.permute.xlu0 1
      %964 = vperm.xlu0 %963, %v580
      %v965 = vpop.permute.xlu0 %964
      %967 = vset.pattern.permute.xlu0 1
      %968 = vperm.xlu0 %967, %v585
      %v969 = vpop.permute.xlu0 %968
      %971 = vset.pattern.permute.xlu0 1
      %972 = vperm.xlu0 %971, %v588
      %v973 = vpop.permute.xlu0 %972
      %975 = vset.pattern.permute.xlu0 1
      %976 = vperm.xlu0 %975, %v593
      %v977 = vpop.permute.xlu0 %976
      %979 = vset.pattern.permute.xlu0 1
      %980 = vperm.xlu0 %979, %v596
      %v981 = vpop.permute.xlu0 %980
      %983 = vset.pattern.permute.xlu0 1
      %984 = vperm.xlu0 %983, %v601
      %v985 = vpop.permute.xlu0 %984
      %987 = vset.pattern.permute.xlu0 1
      %988 = vperm.xlu0 %987, %v604
      %v989 = vpop.permute.xlu0 %988
      %991 = vset.pattern.permute.xlu0 1
      %992 = vperm.xlu0 %991, %v609
      %v993 = vpop.permute.xlu0 %992
      %995 = vset.pattern.permute.xlu0 1
      %996 = vperm.xlu0 %995, %v612
      %v997 = vpop.permute.xlu0 %996
      %999 = vset.pattern.permute.xlu0 1
      %1000 = vperm.xlu0 %999, %v617
      %v1001 = vpop.permute.xlu0 %1000
      %1003 = vset.pattern.permute.xlu0 1
      %1004 = vperm.xlu0 %1003, %v620
      %v1005 = vpop.permute.xlu0 %1004
      %1007 = vset.pattern.permute.xlu0 1
      %1008 = vperm.xlu0 %1007, %v625
      %v1009 = vpop.permute.xlu0 %1008
      %1011 = vset.pattern.permute.xlu0 1
      %1012 = vperm.xlu0 %1011, %v628
      %v1013 = vpop.permute.xlu0 %1012
      %1015 = vset.pattern.permute.xlu0 1
      %1016 = vperm.xlu0 %1015, %v633
      %v1017 = vpop.permute.xlu0 %1016
      %1019 = vset.pattern.permute.xlu0 1
      %1020 = vperm.xlu0 %1019, %v636
      %v1021 = vpop.permute.xlu0 %1020
      %1023 = vset.pattern.permute.xlu0 1
      %1024 = vperm.xlu0 %1023, %v641
      %v1025 = vpop.permute.xlu0 %1024
      %1027 = vset.pattern.permute.xlu0 1
      %1028 = vperm.xlu0 %1027, %v644
      %v1029 = vpop.permute.xlu0 %1028
      %v1031 = vmul.f32 %v679, %v905
      %v1032 = vmul.f32 %v680, %v909
      %v1033 = vmul.f32 %v681, %v913
      %v1034 = vmul.f32 %v682, %v917
      %v1035 = vmul.f32 %v683, %v921
      %v1036 = vmul.f32 %v684, %v925
      %v1037 = vmul.f32 %v685, %v929
      %v1038 = vmul.f32 %v686, %v933
      %v1039 = vmul.f32 %v687, %v937
      %v1040 = vmul.f32 %v688, %v941
      %v1041 = vmul.f32 %v689, %v945
      %v1042 = vmul.f32 %v690, %v949
      %v1043 = vmul.f32 %v691, %v953
      %v1044 = vmul.f32 %v692, %v957
      %v1045 = vmul.f32 %v693, %v961
      %v1046 = vmul.f32 %v694, %v965
      %v1047 = vmul.f32 %v695, %v969
      %v1048 = vmul.f32 %v696, %v973
      %v1049 = vmul.f32 %v697, %v977
      %v1050 = vmul.f32 %v698, %v981
      %v1051 = vmul.f32 %v699, %v985
      %v1052 = vmul.f32 %v700, %v989
      %v1053 = vmul.f32 %v701, %v993
      %v1054 = vmul.f32 %v702, %v997
      %v1055 = vmul.f32 %v703, %v1001
      %v1056 = vmul.f32 %v704, %v1005
      %v1057 = vmul.f32 %v705, %v1009
      %v1058 = vmul.f32 %v706, %v1013
      %v1059 = vmul.f32 %v707, %v1017
      %v1060 = vmul.f32 %v708, %v1021
      %v1061 = vmul.f32 %v709, %v1025
      %v1062 = vmul.f32 %v710, %v1029
      %v1063 = vadd.f32 %v871, %v1031
      %v1064 = vadd.f32 %v872, %v1032
      %v1065 = vadd.f32 %v873, %v1033
      %v1066 = vadd.f32 %v874, %v1034
      %v1067 = vadd.f32 %v875, %v1035
      %v1068 = vadd.f32 %v876, %v1036
      %v1069 = vadd.f32 %v877, %v1037
      %v1070 = vadd.f32 %v878, %v1038
      %v1071 = vadd.f32 %v879, %v1039
      %v1072 = vadd.f32 %v880, %v1040
      %v1073 = vadd.f32 %v881, %v1041
      %v1074 = vadd.f32 %v882, %v1042
      %v1075 = vadd.f32 %v883, %v1043
      %v1076 = vadd.f32 %v884, %v1044
      %v1077 = vadd.f32 %v885, %v1045
      %v1078 = vadd.f32 %v886, %v1046
      %v1079 = vadd.f32 %v887, %v1047
      %v1080 = vadd.f32 %v888, %v1048
      %v1081 = vadd.f32 %v889, %v1049
      %v1082 = vadd.f32 %v890, %v1050
      %v1083 = vadd.f32 %v891, %v1051
      %v1084 = vadd.f32 %v892, %v1052
      %v1085 = vadd.f32 %v893, %v1053
      %v1086 = vadd.f32 %v894, %v1054
      %v1087 = vadd.f32 %v895, %v1055
      %v1088 = vadd.f32 %v896, %v1056
      %v1089 = vadd.f32 %v897, %v1057
      %v1090 = vadd.f32 %v898, %v1058
      %v1091 = vadd.f32 %v899, %v1059
      %v1092 = vadd.f32 %v900, %v1060
      %v1093 = vadd.f32 %v901, %v1061
      %v1094 = vadd.f32 %v902, %v1062
      %vm1095 = vcmask 64512
      %1096 = vst.msk [vmem:[%s311] sm:$0xff] %vm1095, %v1063
      %1097 = vst.msk [vmem:[%s311 + $0x8] sm:$0xff] %vm1095, %v1064
      %1098 = vst.msk [vmem:[%s311 + $0x10] sm:$0xff] %vm1095, %v1065
      %1099 = vst.msk [vmem:[%s311 + $0x18] sm:$0xff] %vm1095, %v1066
      %1100 = vst.msk [vmem:[%s311 + $0x20] sm:$0xff] %vm1095, %v1067
      %1101 = vst.msk [vmem:[%s311 + $0x28] sm:$0xff] %vm1095, %v1068
      %1102 = vst.msk [vmem:[%s311 + $0x30] sm:$0xff] %vm1095, %v1069
      %1103 = vst.msk [vmem:[%s311 + $0x38] sm:$0xff] %vm1095, %v1070
      %1104 = vst.msk [vmem:[%s311 + $0x40] sm:$0xff] %vm1095, %v1071
      %1105 = vst.msk [vmem:[%s311 + $0x48] sm:$0xff] %vm1095, %v1072
      %1106 = vst.msk [vmem:[%s311 + $0x50] sm:$0xff] %vm1095, %v1073
      %1107 = vst.msk [vmem:[%s311 + $0x58] sm:$0xff] %vm1095, %v1074
      %1108 = vst.msk [vmem:[%s311 + $0x60] sm:$0xff] %vm1095, %v1075
      %1109 = vst.msk [vmem:[%s311 + $0x68] sm:$0xff] %vm1095, %v1076
      %1110 = vst.msk [vmem:[%s311 + $0x70] sm:$0xff] %vm1095, %v1077
      %1111 = vst.msk [vmem:[%s311 + $0x78] sm:$0xff] %vm1095, %v1078
      %1112 = vst.msk [vmem:[%s311 + $0x80] sm:$0xff] %vm1095, %v1079
      %1113 = vst.msk [vmem:[%s311 + $0x88] sm:$0xff] %vm1095, %v1080
      %1114 = vst.msk [vmem:[%s311 + $0x90] sm:$0xff] %vm1095, %v1081
      %1115 = vst.msk [vmem:[%s311 + $0x98] sm:$0xff] %vm1095, %v1082
      %1116 = vst.msk [vmem:[%s311 + $0xa0] sm:$0xff] %vm1095, %v1083
      %1117 = vst.msk [vmem:[%s311 + $0xa8] sm:$0xff] %vm1095, %v1084
      %1118 = vst.msk [vmem:[%s311 + $0xb0] sm:$0xff] %vm1095, %v1085
      %1119 = vst.msk [vmem:[%s311 + $0xb8] sm:$0xff] %vm1095, %v1086
      %1120 = vst.msk [vmem:[%s311 + $0xc0] sm:$0xff] %vm1095, %v1087
      %1121 = vst.msk [vmem:[%s311 + $0xc8] sm:$0xff] %vm1095, %v1088
      %1122 = vst.msk [vmem:[%s311 + $0xd0] sm:$0xff] %vm1095, %v1089
      %1123 = vst.msk [vmem:[%s311 + $0xd8] sm:$0xff] %vm1095, %v1090
      %1124 = vst.msk [vmem:[%s311 + $0xe0] sm:$0xff] %vm1095, %v1091
      %1125 = vst.msk [vmem:[%s311 + $0xe8] sm:$0xff] %vm1095, %v1092
      %1126 = vst.msk [vmem:[%s311 + $0xf0] sm:$0xff] %vm1095, %v1093
      %1127 = vst.msk [vmem:[%s311 + $0xf8] sm:$0xff] %vm1095, %v1094
      %v1128 = vpack.c.bf16 %v1064, %v1063
      %v1129 = vpack.c.bf16 %v1066, %v1065
      %v1130 = vpack.c.bf16 %v1068, %v1067
      %v1131 = vpack.c.bf16 %v1070, %v1069
      %v1132 = vpack.c.bf16 %v1072, %v1071
      %v1133 = vpack.c.bf16 %v1074, %v1073
      %v1134 = vpack.c.bf16 %v1076, %v1075
      %v1135 = vpack.c.bf16 %v1078, %v1077
      %v1136 = vpack.c.bf16 %v1080, %v1079
      %v1137 = vpack.c.bf16 %v1082, %v1081
      %v1138 = vpack.c.bf16 %v1084, %v1083
      %v1139 = vpack.c.bf16 %v1086, %v1085
      %v1140 = vpack.c.bf16 %v1088, %v1087
      %v1141 = vpack.c.bf16 %v1090, %v1089
      %v1142 = vpack.c.bf16 %v1092, %v1091
      %v1143 = vpack.c.bf16 %v1094, %v1093
      %1144 = vst [vmem:[#allocation2] sm:$0xff] 0
      %1145 = vst [vmem:[#allocation2 + $0x8] sm:$0xff] 0
      %1146 = vst [vmem:[#allocation2 + $0x10] sm:$0xff] 0
      %s1147 = scalar_lea.vmem [#allocation2], 408
      %1148 = vst [vmem:[%s1147] sm:$0xff] 0
      %1149 = vst [vmem:[%s1147 + $0x8] sm:$0xff] 0
      %1150 = vst [vmem:[%s1147 + $0x10] sm:$0xff] 0
      %s1151 = scalar_lea.vmem [#allocation2], 24
      %vm1152 = vcmask 57344
      %vm1153 = vsmask.f32 256
      %vm1154 = vmand %vm1152, %vm1153
      %v1155 = vld [vmem:[%s1151] sm:$0x1]
      %v1156 = vsel %vm1154, 0, %v1155
      %1157 = vst [vmem:[%s1151] sm:$0x1] %v1156
      %v1158 = vld [vmem:[%s1151 + $0x18] sm:$0x1]
      %v1159 = vsel %vm1154, 0, %v1158
      %1160 = vst [vmem:[%s1151 + $0x18] sm:$0x1] %v1159
      %v1161 = vld [vmem:[%s1151 + $0x30] sm:$0x1]
      %v1162 = vsel %vm1154, 0, %v1161
      %1163 = vst [vmem:[%s1151 + $0x30] sm:$0x1] %v1162
      %v1164 = vld [vmem:[%s1151 + $0x48] sm:$0x1]
      %v1165 = vsel %vm1154, 0, %v1164
      %1166 = vst [vmem:[%s1151 + $0x48] sm:$0x1] %v1165
      %v1167 = vld [vmem:[%s1151 + $0x60] sm:$0x1]
      %v1168 = vsel %vm1154, 0, %v1167
      %1169 = vst [vmem:[%s1151 + $0x60] sm:$0x1] %v1168
      %v1170 = vld [vmem:[%s1151 + $0x78] sm:$0x1]
      %v1171 = vsel %vm1154, 0, %v1170
      %1172 = vst [vmem:[%s1151 + $0x78] sm:$0x1] %v1171
      %v1173 = vld [vmem:[%s1151 + $0x90] sm:$0x1]
      %v1174 = vsel %vm1154, 0, %v1173
      %1175 = vst [vmem:[%s1151 + $0x90] sm:$0x1] %v1174
      %v1176 = vld [vmem:[%s1151 + $0xa8] sm:$0x1]
      %v1177 = vsel %vm1154, 0, %v1176
      %1178 = vst [vmem:[%s1151 + $0xa8] sm:$0x1] %v1177
      %v1179 = vld [vmem:[%s1151 + $0xc0] sm:$0x1]
      %v1180 = vsel %vm1154, 0, %v1179
      %1181 = vst [vmem:[%s1151 + $0xc0] sm:$0x1] %v1180
      %v1182 = vld [vmem:[%s1151 + $0xd8] sm:$0x1]
      %v1183 = vsel %vm1154, 0, %v1182
      %1184 = vst [vmem:[%s1151 + $0xd8] sm:$0x1] %v1183
      %v1185 = vld [vmem:[%s1151 + $0xf0] sm:$0x1]
      %v1186 = vsel %vm1154, 0, %v1185
      %1187 = vst [vmem:[%s1151 + $0xf0] sm:$0x1] %v1186
      %v1188 = vld [vmem:[%s1151 + $0x108] sm:$0x1]
      %v1189 = vsel %vm1154, 0, %v1188
      %1190 = vst [vmem:[%s1151 + $0x108] sm:$0x1] %v1189
      %v1191 = vld [vmem:[%s1151 + $0x120] sm:$0x1]
      %v1192 = vsel %vm1154, 0, %v1191
      %1193 = vst [vmem:[%s1151 + $0x120] sm:$0x1] %v1192
      %v1194 = vld [vmem:[%s1151 + $0x138] sm:$0x1]
      %v1195 = vsel %vm1154, 0, %v1194
      %1196 = vst [vmem:[%s1151 + $0x138] sm:$0x1] %v1195
      %v1197 = vld [vmem:[%s1151 + $0x150] sm:$0x1]
      %v1198 = vsel %vm1154, 0, %v1197
      %1199 = vst [vmem:[%s1151 + $0x150] sm:$0x1] %v1198
      %v1200 = vld [vmem:[%s1151 + $0x168] sm:$0x1]
      %v1201 = vsel %vm1154, 0, %v1200
      %1202 = vst [vmem:[%s1151 + $0x168] sm:$0x1] %v1201
      %vm1203 = vcmask 64519
      %vm1204 = vsmask.f32 7966
      %vm1205 = vmand %vm1203, %vm1204
      %v1206 = vld [vmem:[%s1151 + $0x10] sm:$0x80]
      %v1207 = vsel %vm1205, 0, %v1206
      %1208 = vst [vmem:[%s1151 + $0x10] sm:$0x80] %v1207
      %v1209 = vld [vmem:[%s1151 + $0x28] sm:$0x80]
      %v1210 = vsel %vm1205, 0, %v1209
      %1211 = vst [vmem:[%s1151 + $0x28] sm:$0x80] %v1210
      %v1212 = vld [vmem:[%s1151 + $0x40] sm:$0x80]
      %v1213 = vsel %vm1205, 0, %v1212
      %1214 = vst [vmem:[%s1151 + $0x40] sm:$0x80] %v1213
      %v1215 = vld [vmem:[%s1151 + $0x58] sm:$0x80]
      %v1216 = vsel %vm1205, 0, %v1215
      %1217 = vst [vmem:[%s1151 + $0x58] sm:$0x80] %v1216
      %v1218 = vld [vmem:[%s1151 + $0x70] sm:$0x80]
      %v1219 = vsel %vm1205, 0, %v1218
      %1220 = vst [vmem:[%s1151 + $0x70] sm:$0x80] %v1219
      %v1221 = vld [vmem:[%s1151 + $0x88] sm:$0x80]
      %v1222 = vsel %vm1205, 0, %v1221
      %1223 = vst [vmem:[%s1151 + $0x88] sm:$0x80] %v1222
      %v1224 = vld [vmem:[%s1151 + $0xa0] sm:$0x80]
      %v1225 = vsel %vm1205, 0, %v1224
      %1226 = vst [vmem:[%s1151 + $0xa0] sm:$0x80] %v1225
      %v1227 = vld [vmem:[%s1151 + $0xb8] sm:$0x80]
      %v1228 = vsel %vm1205, 0, %v1227
      %1229 = vst [vmem:[%s1151 + $0xb8] sm:$0x80] %v1228
      %v1230 = vld [vmem:[%s1151 + $0xd0] sm:$0x80]
      %v1231 = vsel %vm1205, 0, %v1230
      %1232 = vst [vmem:[%s1151 + $0xd0] sm:$0x80] %v1231
      %v1233 = vld [vmem:[%s1151 + $0xe8] sm:$0x80]
      %v1234 = vsel %vm1205, 0, %v1233
      %1235 = vst [vmem:[%s1151 + $0xe8] sm:$0x80] %v1234
      %v1236 = vld [vmem:[%s1151 + $0x100] sm:$0x80]
      %v1237 = vsel %vm1205, 0, %v1236
      %1238 = vst [vmem:[%s1151 + $0x100] sm:$0x80] %v1237
      %v1239 = vld [vmem:[%s1151 + $0x118] sm:$0x80]
      %v1240 = vsel %vm1205, 0, %v1239
      %1241 = vst [vmem:[%s1151 + $0x118] sm:$0x80] %v1240
      %v1242 = vld [vmem:[%s1151 + $0x130] sm:$0x80]
      %v1243 = vsel %vm1205, 0, %v1242
      %1244 = vst [vmem:[%s1151 + $0x130] sm:$0x80] %v1243
      %v1245 = vld [vmem:[%s1151 + $0x148] sm:$0x80]
      %v1246 = vsel %vm1205, 0, %v1245
      %1247 = vst [vmem:[%s1151 + $0x148] sm:$0x80] %v1246
      %v1248 = vld [vmem:[%s1151 + $0x160] sm:$0x80]
      %v1249 = vsel %vm1205, 0, %v1248
      %1250 = vst [vmem:[%s1151 + $0x160] sm:$0x80] %v1249
      %v1251 = vld [vmem:[%s1151 + $0x178] sm:$0x80]
      %v1252 = vsel %vm1205, 0, %v1251
      %1253 = vst [vmem:[%s1151 + $0x178] sm:$0x80] %v1252
      %vm1254 = vcmask 1047616
      %1255 = vst.msk [vmem:[%s1151] sm:$0xff] %vm1254, 0
      %1256 = vst.msk [vmem:[%s1151 + $0x18] sm:$0xff] %vm1254, 0
      %1257 = vst.msk [vmem:[%s1151 + $0x30] sm:$0xff] %vm1254, 0
      %1258 = vst.msk [vmem:[%s1151 + $0x48] sm:$0xff] %vm1254, 0
      %1259 = vst.msk [vmem:[%s1151 + $0x60] sm:$0xff] %vm1254, 0
      %1260 = vst.msk [vmem:[%s1151 + $0x78] sm:$0xff] %vm1254, 0
      %1261 = vst.msk [vmem:[%s1151 + $0x90] sm:$0xff] %vm1254, 0
      %1262 = vst.msk [vmem:[%s1151 + $0xa8] sm:$0xff] %vm1254, 0
      %1263 = vst.msk [vmem:[%s1151 + $0xc0] sm:$0xff] %vm1254, 0
      %1264 = vst.msk [vmem:[%s1151 + $0xd8] sm:$0xff] %vm1254, 0
      %1265 = vst.msk [vmem:[%s1151 + $0xf0] sm:$0xff] %vm1254, 0
      %1266 = vst.msk [vmem:[%s1151 + $0x108] sm:$0xff] %vm1254, 0
      %1267 = vst.msk [vmem:[%s1151 + $0x120] sm:$0xff] %vm1254, 0
      %1268 = vst.msk [vmem:[%s1151 + $0x138] sm:$0xff] %vm1254, 0
      %1269 = vst.msk [vmem:[%s1151 + $0x150] sm:$0xff] %vm1254, 0
      %1270 = vst.msk [vmem:[%s1151 + $0x168] sm:$0xff] %vm1254, 0
      %1271 = vst.msk [vmem:[%s1151 + $0x8] sm:$0xff] %vm1254, 0
      %1272 = vst.msk [vmem:[%s1151 + $0x20] sm:$0xff] %vm1254, 0
      %1273 = vst.msk [vmem:[%s1151 + $0x38] sm:$0xff] %vm1254, 0
      %1274 = vst.msk [vmem:[%s1151 + $0x50] sm:$0xff] %vm1254, 0
      %1275 = vst.msk [vmem:[%s1151 + $0x68] sm:$0xff] %vm1254, 0
      %1276 = vst.msk [vmem:[%s1151 + $0x80] sm:$0xff] %vm1254, 0
      %1277 = vst.msk [vmem:[%s1151 + $0x98] sm:$0xff] %vm1254, 0
      %1278 = vst.msk [vmem:[%s1151 + $0xb0] sm:$0xff] %vm1254, 0
      %1279 = vst.msk [vmem:[%s1151 + $0xc8] sm:$0xff] %vm1254, 0
      %1280 = vst.msk [vmem:[%s1151 + $0xe0] sm:$0xff] %vm1254, 0
      %1281 = vst.msk [vmem:[%s1151 + $0xf8] sm:$0xff] %vm1254, 0
      %1282 = vst.msk [vmem:[%s1151 + $0x110] sm:$0xff] %vm1254, 0
      %1283 = vst.msk [vmem:[%s1151 + $0x128] sm:$0xff] %vm1254, 0
      %1284 = vst.msk [vmem:[%s1151 + $0x140] sm:$0xff] %vm1254, 0
      %1285 = vst.msk [vmem:[%s1151 + $0x158] sm:$0xff] %vm1254, 0
      %1286 = vst.msk [vmem:[%s1151 + $0x170] sm:$0xff] %vm1254, 0
      %1287 = vst.msk [vmem:[%s1151 + $0x10] sm:$0xff] %vm1254, 0
      %1288 = vst.msk [vmem:[%s1151 + $0x28] sm:$0xff] %vm1254, 0
      %1289 = vst.msk [vmem:[%s1151 + $0x40] sm:$0xff] %vm1254, 0
      %1290 = vst.msk [vmem:[%s1151 + $0x58] sm:$0xff] %vm1254, 0
      %1291 = vst.msk [vmem:[%s1151 + $0x70] sm:$0xff] %vm1254, 0
      %1292 = vst.msk [vmem:[%s1151 + $0x88] sm:$0xff] %vm1254, 0
      %1293 = vst.msk [vmem:[%s1151 + $0xa0] sm:$0xff] %vm1254, 0
      %1294 = vst.msk [vmem:[%s1151 + $0xb8] sm:$0xff] %vm1254, 0
      %1295 = vst.msk [vmem:[%s1151 + $0xd0] sm:$0xff] %vm1254, 0
      %1296 = vst.msk [vmem:[%s1151 + $0xe8] sm:$0xff] %vm1254, 0
      %1297 = vst.msk [vmem:[%s1151 + $0x100] sm:$0xff] %vm1254, 0
      %1298 = vst.msk [vmem:[%s1151 + $0x118] sm:$0xff] %vm1254, 0
      %1299 = vst.msk [vmem:[%s1151 + $0x130] sm:$0xff] %vm1254, 0
      %1300 = vst.msk [vmem:[%s1151 + $0x148] sm:$0xff] %vm1254, 0
      %1301 = vst.msk [vmem:[%s1151 + $0x160] sm:$0xff] %vm1254, 0
      %1302 = vst.msk [vmem:[%s1151 + $0x178] sm:$0xff] %vm1254, 0
      %1303 = vst.msk [vmem:[%s1151 + $0x8] sm:$0xff] %vm1095, %v1128
      %1304 = vst.msk [vmem:[%s1151 + $0x20] sm:$0xff] %vm1095, %v1129
      %1305 = vst.msk [vmem:[%s1151 + $0x38] sm:$0xff] %vm1095, %v1130
      %1306 = vst.msk [vmem:[%s1151 + $0x50] sm:$0xff] %vm1095, %v1131
      %1307 = vst.msk [vmem:[%s1151 + $0x68] sm:$0xff] %vm1095, %v1132
      %1308 = vst.msk [vmem:[%s1151 + $0x80] sm:$0xff] %vm1095, %v1133
      %1309 = vst.msk [vmem:[%s1151 + $0x98] sm:$0xff] %vm1095, %v1134
      %1310 = vst.msk [vmem:[%s1151 + $0xb0] sm:$0xff] %vm1095, %v1135
      %1311 = vst.msk [vmem:[%s1151 + $0xc8] sm:$0xff] %vm1095, %v1136
      %1312 = vst.msk [vmem:[%s1151 + $0xe0] sm:$0xff] %vm1095, %v1137
      %1313 = vst.msk [vmem:[%s1151 + $0xf8] sm:$0xff] %vm1095, %v1138
      %1314 = vst.msk [vmem:[%s1151 + $0x110] sm:$0xff] %vm1095, %v1139
      %1315 = vst.msk [vmem:[%s1151 + $0x128] sm:$0xff] %vm1095, %v1140
      %1316 = vst.msk [vmem:[%s1151 + $0x140] sm:$0xff] %vm1095, %v1141
      %1317 = vst.msk [vmem:[%s1151 + $0x158] sm:$0xff] %vm1095, %v1142
      %1318 = vst.msk [vmem:[%s1151 + $0x170] sm:$0xff] %vm1095, %v1143
      %v1320 = vshrl.u32 %v1128, 16
      %v1322 = vrot.slane %v1320, 7
      %v1323 = vshll.u32 %v1128, 16
      %v1325 = vor.u32 %v1322, %v1323
      %v1327 = vshrl.u32 %v1129, 16
      %v1329 = vrot.slane %v1327, 7
      %v1330 = vshll.u32 %v1129, 16
      %v1332 = vor.u32 %v1329, %v1330
      %v1334 = vshrl.u32 %v1130, 16
      %v1336 = vrot.slane %v1334, 7
      %v1337 = vshll.u32 %v1130, 16
      %v1339 = vor.u32 %v1336, %v1337
      %v1341 = vshrl.u32 %v1131, 16
      %v1343 = vrot.slane %v1341, 7
      %v1344 = vshll.u32 %v1131, 16
      %v1346 = vor.u32 %v1343, %v1344
      %v1348 = vshrl.u32 %v1132, 16
      %v1350 = vrot.slane %v1348, 7
      %v1351 = vshll.u32 %v1132, 16
      %v1353 = vor.u32 %v1350, %v1351
      %v1355 = vshrl.u32 %v1133, 16
      %v1357 = vrot.slane %v1355, 7
      %v1358 = vshll.u32 %v1133, 16
      %v1360 = vor.u32 %v1357, %v1358
      %v1362 = vshrl.u32 %v1134, 16
      %v1364 = vrot.slane %v1362, 7
      %v1365 = vshll.u32 %v1134, 16
      %v1367 = vor.u32 %v1364, %v1365
      %v1369 = vshrl.u32 %v1135, 16
      %v1371 = vrot.slane %v1369, 7
      %v1372 = vshll.u32 %v1135, 16
      %v1374 = vor.u32 %v1371, %v1372
      %v1376 = vshrl.u32 %v1136, 16
      %v1378 = vrot.slane %v1376, 7
      %v1379 = vshll.u32 %v1136, 16
      %v1381 = vor.u32 %v1378, %v1379
      %v1383 = vshrl.u32 %v1137, 16
      %v1385 = vrot.slane %v1383, 7
      %v1386 = vshll.u32 %v1137, 16
      %v1388 = vor.u32 %v1385, %v1386
      %v1390 = vshrl.u32 %v1138, 16
      %v1392 = vrot.slane %v1390, 7
      %v1393 = vshll.u32 %v1138, 16
      %v1395 = vor.u32 %v1392, %v1393
      %v1397 = vshrl.u32 %v1139, 16
      %v1399 = vrot.slane %v1397, 7
      %v1400 = vshll.u32 %v1139, 16
      %v1402 = vor.u32 %v1399, %v1400
      %v1404 = vshrl.u32 %v1140, 16
      %v1406 = vrot.slane %v1404, 7
      %v1407 = vshll.u32 %v1140, 16
      %v1409 = vor.u32 %v1406, %v1407
      %v1411 = vshrl.u32 %v1141, 16
      %v1413 = vrot.slane %v1411, 7
      %v1414 = vshll.u32 %v1141, 16
      %v1416 = vor.u32 %v1413, %v1414
      %v1418 = vshrl.u32 %v1142, 16
      %v1420 = vrot.slane %v1418, 7
      %v1421 = vshll.u32 %v1142, 16
      %v1423 = vor.u32 %v1420, %v1421
      %v1425 = vshrl.u32 %v1143, 16
      %v1427 = vrot.slane %v1425, 7
      %v1428 = vshll.u32 %v1143, 16
      %v1430 = vor.u32 %v1427, %v1428
      %vm1447 = vcmask 64512
      %vm1448 = vsmask.f32 7938
      %vm1449 = vmand %vm1447, %vm1448
      %v1450 = vld [vmem:[%s1151] sm:$0xff]
      %v1451 = vsel %vm1449, %v1325, %v1450
      %1452 = vst [vmem:[%s1151] sm:$0xff] %v1451
      %v1453 = vld [vmem:[%s1151 + $0x18] sm:$0xff]
      %v1454 = vsel %vm1449, %v1332, %v1453
      %1455 = vst [vmem:[%s1151 + $0x18] sm:$0xff] %v1454
      %v1456 = vld [vmem:[%s1151 + $0x30] sm:$0xff]
      %v1457 = vsel %vm1449, %v1339, %v1456
      %1458 = vst [vmem:[%s1151 + $0x30] sm:$0xff] %v1457
      %v1459 = vld [vmem:[%s1151 + $0x48] sm:$0xff]
      %v1460 = vsel %vm1449, %v1346, %v1459
      %1461 = vst [vmem:[%s1151 + $0x48] sm:$0xff] %v1460
      %v1462 = vld [vmem:[%s1151 + $0x60] sm:$0xff]
      %v1463 = vsel %vm1449, %v1353, %v1462
      %1464 = vst [vmem:[%s1151 + $0x60] sm:$0xff] %v1463
      %v1465 = vld [vmem:[%s1151 + $0x78] sm:$0xff]
      %v1466 = vsel %vm1449, %v1360, %v1465
      %1467 = vst [vmem:[%s1151 + $0x78] sm:$0xff] %v1466
      %v1468 = vld [vmem:[%s1151 + $0x90] sm:$0xff]
      %v1469 = vsel %vm1449, %v1367, %v1468
      %1470 = vst [vmem:[%s1151 + $0x90] sm:$0xff] %v1469
      %v1471 = vld [vmem:[%s1151 + $0xa8] sm:$0xff]
      %v1472 = vsel %vm1449, %v1374, %v1471
      %1473 = vst [vmem:[%s1151 + $0xa8] sm:$0xff] %v1472
      %v1474 = vld [vmem:[%s1151 + $0xc0] sm:$0xff]
      %v1475 = vsel %vm1449, %v1381, %v1474
      %1476 = vst [vmem:[%s1151 + $0xc0] sm:$0xff] %v1475
      %v1477 = vld [vmem:[%s1151 + $0xd8] sm:$0xff]
      %v1478 = vsel %vm1449, %v1388, %v1477
      %1479 = vst [vmem:[%s1151 + $0xd8] sm:$0xff] %v1478
      %v1480 = vld [vmem:[%s1151 + $0xf0] sm:$0xff]
      %v1481 = vsel %vm1449, %v1395, %v1480
      %1482 = vst [vmem:[%s1151 + $0xf0] sm:$0xff] %v1481
      %v1483 = vld [vmem:[%s1151 + $0x108] sm:$0xff]
      %v1484 = vsel %vm1449, %v1402, %v1483
      %1485 = vst [vmem:[%s1151 + $0x108] sm:$0xff] %v1484
      %v1486 = vld [vmem:[%s1151 + $0x120] sm:$0xff]
      %v1487 = vsel %vm1449, %v1409, %v1486
      %1488 = vst [vmem:[%s1151 + $0x120] sm:$0xff] %v1487
      %v1489 = vld [vmem:[%s1151 + $0x138] sm:$0xff]
      %v1490 = vsel %vm1449, %v1416, %v1489
      %1491 = vst [vmem:[%s1151 + $0x138] sm:$0xff] %v1490
      %v1492 = vld [vmem:[%s1151 + $0x150] sm:$0xff]
      %v1493 = vsel %vm1449, %v1423, %v1492
      %1494 = vst [vmem:[%s1151 + $0x150] sm:$0xff] %v1493
      %v1495 = vld [vmem:[%s1151 + $0x168] sm:$0xff]
      %v1496 = vsel %vm1449, %v1430, %v1495
      %1497 = vst [vmem:[%s1151 + $0x168] sm:$0xff] %v1496
      %v1498 = vrot.slane %v1323, 1
      %v1499 = vor.u32 %v1320, %v1498
      %v1500 = vrot.slane %v1330, 1
      %v1501 = vor.u32 %v1327, %v1500
      %v1502 = vrot.slane %v1337, 1
      %v1503 = vor.u32 %v1334, %v1502
      %v1504 = vrot.slane %v1344, 1
      %v1505 = vor.u32 %v1341, %v1504
      %v1506 = vrot.slane %v1351, 1
      %v1507 = vor.u32 %v1348, %v1506
      %v1508 = vrot.slane %v1358, 1
      %v1509 = vor.u32 %v1355, %v1508
      %v1510 = vrot.slane %v1365, 1
      %v1511 = vor.u32 %v1362, %v1510
      %v1512 = vrot.slane %v1372, 1
      %v1513 = vor.u32 %v1369, %v1512
      %v1514 = vrot.slane %v1379, 1
      %v1515 = vor.u32 %v1376, %v1514
      %v1516 = vrot.slane %v1386, 1
      %v1517 = vor.u32 %v1383, %v1516
      %v1518 = vrot.slane %v1393, 1
      %v1519 = vor.u32 %v1390, %v1518
      %v1520 = vrot.slane %v1400, 1
      %v1521 = vor.u32 %v1397, %v1520
      %v1522 = vrot.slane %v1407, 1
      %v1523 = vor.u32 %v1404, %v1522
      %v1524 = vrot.slane %v1414, 1
      %v1525 = vor.u32 %v1411, %v1524
      %v1526 = vrot.slane %v1421, 1
      %v1527 = vor.u32 %v1418, %v1526
      %v1528 = vrot.slane %v1428, 1
      %v1529 = vor.u32 %v1425, %v1528
      %vm1546 = vsmask.f32 7424
      %vm1547 = vmand %vm1447, %vm1546
      %v1548 = vld [vmem:[%s1151 + $0x10] sm:$0xff]
      %v1549 = vsel %vm1547, %v1499, %v1548
      %1550 = vst [vmem:[%s1151 + $0x10] sm:$0xff] %v1549
      %v1551 = vld [vmem:[%s1151 + $0x28] sm:$0xff]
      %v1552 = vsel %vm1547, %v1501, %v1551
      %1553 = vst [vmem:[%s1151 + $0x28] sm:$0xff] %v1552
      %v1554 = vld [vmem:[%s1151 + $0x40] sm:$0xff]
      %v1555 = vsel %vm1547, %v1503, %v1554
      %1556 = vst [vmem:[%s1151 + $0x40] sm:$0xff] %v1555
      %v1557 = vld [vmem:[%s1151 + $0x58] sm:$0xff]
      %v1558 = vsel %vm1547, %v1505, %v1557
      %1559 = vst [vmem:[%s1151 + $0x58] sm:$0xff] %v1558
      %v1560 = vld [vmem:[%s1151 + $0x70] sm:$0xff]
      %v1561 = vsel %vm1547, %v1507, %v1560
      %1562 = vst [vmem:[%s1151 + $0x70] sm:$0xff] %v1561
      %v1563 = vld [vmem:[%s1151 + $0x88] sm:$0xff]
      %v1564 = vsel %vm1547, %v1509, %v1563
      %1565 = vst [vmem:[%s1151 + $0x88] sm:$0xff] %v1564
      %v1566 = vld [vmem:[%s1151 + $0xa0] sm:$0xff]
      %v1567 = vsel %vm1547, %v1511, %v1566
      %1568 = vst [vmem:[%s1151 + $0xa0] sm:$0xff] %v1567
      %v1569 = vld [vmem:[%s1151 + $0xb8] sm:$0xff]
      %v1570 = vsel %vm1547, %v1513, %v1569
      %1571 = vst [vmem:[%s1151 + $0xb8] sm:$0xff] %v1570
      %v1572 = vld [vmem:[%s1151 + $0xd0] sm:$0xff]
      %v1573 = vsel %vm1547, %v1515, %v1572
      %1574 = vst [vmem:[%s1151 + $0xd0] sm:$0xff] %v1573
      %v1575 = vld [vmem:[%s1151 + $0xe8] sm:$0xff]
      %v1576 = vsel %vm1547, %v1517, %v1575
      %1577 = vst [vmem:[%s1151 + $0xe8] sm:$0xff] %v1576
      %v1578 = vld [vmem:[%s1151 + $0x100] sm:$0xff]
      %v1579 = vsel %vm1547, %v1519, %v1578
      %1580 = vst [vmem:[%s1151 + $0x100] sm:$0xff] %v1579
      %v1581 = vld [vmem:[%s1151 + $0x118] sm:$0xff]
      %v1582 = vsel %vm1547, %v1521, %v1581
      %1583 = vst [vmem:[%s1151 + $0x118] sm:$0xff] %v1582
      %v1584 = vld [vmem:[%s1151 + $0x130] sm:$0xff]
      %v1585 = vsel %vm1547, %v1523, %v1584
      %1586 = vst [vmem:[%s1151 + $0x130] sm:$0xff] %v1585
      %v1587 = vld [vmem:[%s1151 + $0x148] sm:$0xff]
      %v1588 = vsel %vm1547, %v1525, %v1587
      %1589 = vst [vmem:[%s1151 + $0x148] sm:$0xff] %v1588
      %v1590 = vld [vmem:[%s1151 + $0x160] sm:$0xff]
      %v1591 = vsel %vm1547, %v1527, %v1590
      %1592 = vst [vmem:[%s1151 + $0x160] sm:$0xff] %v1591
      %v1593 = vld [vmem:[%s1151 + $0x178] sm:$0xff]
      %v1594 = vsel %vm1547, %v1529, %v1593
      %1595 = vst [vmem:[%s1151 + $0x178] sm:$0xff] %v1594
      %v1596 = vld [vmem:[#allocation2] sm:$0xff]
      %v1597 = vld [vmem:[#allocation2 + $0x8] sm:$0xff]
      %v1598 = vld [vmem:[#allocation2 + $0x10] sm:$0xff]
      %v1599 = vld [vmem:[#allocation2 + $0x18] sm:$0xff]
      %v1600 = vld [vmem:[#allocation2 + $0x20] sm:$0xff]
      %v1601 = vld [vmem:[#allocation2 + $0x28] sm:$0xff]
      %v1602 = vld [vmem:[#allocation2 + $0x30] sm:$0xff]
      %v1603 = vld [vmem:[#allocation2 + $0x38] sm:$0xff]
      %v1604 = vld [vmem:[#allocation2 + $0x40] sm:$0xff]
      %v1605 = vld [vmem:[#allocation2 + $0x48] sm:$0xff]
      %v1606 = vld [vmem:[#allocation2 + $0x50] sm:$0xff]
      %v1607 = vld [vmem:[#allocation2 + $0x58] sm:$0xff]
      %v1608 = vld [vmem:[#allocation2 + $0x60] sm:$0xff]
      %v1609 = vld [vmem:[#allocation2 + $0x68] sm:$0xff]
      %v1610 = vld [vmem:[#allocation2 + $0x70] sm:$0xff]
      %v1611 = vld [vmem:[#allocation2 + $0x78] sm:$0xff]
      %v1612 = vld [vmem:[#allocation2 + $0x80] sm:$0xff]
      %v1613 = vld [vmem:[#allocation2 + $0x88] sm:$0xff]
      %v1614 = vld [vmem:[#allocation2 + $0x90] sm:$0xff]
      %v1615 = vld [vmem:[#allocation2 + $0x98] sm:$0xff]
      %v1616 = vld [vmem:[#allocation2 + $0xa0] sm:$0xff]
      %v1617 = vld [vmem:[#allocation2 + $0xa8] sm:$0xff]
      %v1618 = vld [vmem:[#allocation2 + $0xb0] sm:$0xff]
      %v1619 = vld [vmem:[#allocation2 + $0xb8] sm:$0xff]
      %v1620 = vld [vmem:[#allocation2 + $0xc0] sm:$0xff]
      %v1621 = vld [vmem:[#allocation2 + $0xc8] sm:$0xff]
      %v1622 = vld [vmem:[#allocation2 + $0xd0] sm:$0xff]
      %v1623 = vld [vmem:[#allocation2 + $0xd8] sm:$0xff]
      %v1624 = vld [vmem:[#allocation2 + $0xe0] sm:$0xff]
      %v1625 = vld [vmem:[#allocation2 + $0xe8] sm:$0xff]
      %v1626 = vld [vmem:[#allocation2 + $0xf0] sm:$0xff]
      %v1627 = vld [vmem:[#allocation2 + $0xf8] sm:$0xff]
      %v1628 = vld [vmem:[#allocation2 + $0x100] sm:$0xff]
      %v1629 = vld [vmem:[#allocation2 + $0x108] sm:$0xff]
      %v1630 = vld [vmem:[#allocation2 + $0x110] sm:$0xff]
      %v1631 = vld [vmem:[#allocation2 + $0x118] sm:$0xff]
      %v1632 = vld [vmem:[#allocation2 + $0x120] sm:$0xff]
      %v1633 = vld [vmem:[#allocation2 + $0x128] sm:$0xff]
      %v1634 = vld [vmem:[#allocation2 + $0x130] sm:$0xff]
      %v1635 = vld [vmem:[#allocation2 + $0x138] sm:$0xff]
      %v1636 = vld [vmem:[#allocation2 + $0x140] sm:$0xff]
      %v1637 = vld [vmem:[#allocation2 + $0x148] sm:$0xff]
      %v1638 = vld [vmem:[#allocation2 + $0x150] sm:$0xff]
      %v1639 = vld [vmem:[#allocation2 + $0x158] sm:$0xff]
      %v1640 = vld [vmem:[#allocation2 + $0x160] sm:$0xff]
      %v1641 = vld [vmem:[#allocation2 + $0x168] sm:$0xff]
      %v1642 = vld [vmem:[#allocation2 + $0x170] sm:$0xff]
      %v1643 = vld [vmem:[#allocation2 + $0x178] sm:$0xff]
      %v1644 = vld [vmem:[%s4] sm:$0xf]
      %v1645 = vld [vmem:[%s4 + $0x4] sm:$0xf]
      %v1646 = vld [vmem:[%s4 + $0x8] sm:$0xf]
      %v1647 = vld [vmem:[%s4 + $0xc] sm:$0xf]
      %v1648 = vld [vmem:[%s4 + $0x10] sm:$0xf]
      %v1649 = vld [vmem:[%s4 + $0x14] sm:$0xf]
      %v1650 = vld [vmem:[%s4 + $0x18] sm:$0xf]
      %v1651 = vld [vmem:[%s4 + $0x1c] sm:$0xf]
      %v1652 = vld [vmem:[%s4 + $0x20] sm:$0xf]
      %v1653 = vld [vmem:[%s4 + $0x24] sm:$0xf]
      %v1654 = vld [vmem:[%s4 + $0x28] sm:$0xf]
      %v1655 = vld [vmem:[%s4 + $0x2c] sm:$0xf]
      %v1656 = vld [vmem:[%s4 + $0x30] sm:$0xf]
      %v1657 = vld [vmem:[%s4 + $0x34] sm:$0xf]
      %v1658 = vld [vmem:[%s4 + $0x38] sm:$0xf]
      %v1659 = vld [vmem:[%s4 + $0x3c] sm:$0xf]
      %v1660 = vld [vmem:[%s4 + $0x40] sm:$0xf]
      %v1661 = vld [vmem:[%s4 + $0x44] sm:$0xf]
      %v1662 = vld [vmem:[%s4 + $0x48] sm:$0xf]
      %v1663 = vld [vmem:[%s4 + $0x4c] sm:$0xf]
      %v1664 = vld [vmem:[%s4 + $0x50] sm:$0xf]
      %v1665 = vld [vmem:[%s4 + $0x54] sm:$0xf]
      %v1666 = vld [vmem:[%s4 + $0x58] sm:$0xf]
      %v1667 = vld [vmem:[%s4 + $0x5c] sm:$0xf]
      %v1668 = vld [vmem:[%s4 + $0x60] sm:$0xf]
      %v1669 = vld [vmem:[%s4 + $0x64] sm:$0xf]
      %v1670 = vld [vmem:[%s4 + $0x68] sm:$0xf]
      %v1671 = vld [vmem:[%s4 + $0x6c] sm:$0xf]
      %v1672 = vld [vmem:[%s4 + $0x70] sm:$0xf]
      %v1673 = vld [vmem:[%s4 + $0x74] sm:$0xf]
      %v1674 = vld [vmem:[%s4 + $0x78] sm:$0xf]
      %v1675 = vld [vmem:[%s4 + $0x7c] sm:$0xf]
      %v1676 = vld [vmem:[%s4 + $0x80] sm:$0xf]
      %v1677 = vld [vmem:[%s4 + $0x84] sm:$0xf]
      %v1678 = vld [vmem:[%s4 + $0x88] sm:$0xf]
      %v1679 = vld [vmem:[%s4 + $0x8c] sm:$0xf]
      %v1680 = vld [vmem:[%s4 + $0x90] sm:$0xf]
      %v1681 = vld [vmem:[%s4 + $0x94] sm:$0xf]
      %v1682 = vld [vmem:[%s4 + $0x98] sm:$0xf]
      %v1683 = vld [vmem:[%s4 + $0x9c] sm:$0xf]
      %v1684 = vld [vmem:[%s4 + $0xa0] sm:$0xf]
      %v1685 = vld [vmem:[%s4 + $0xa4] sm:$0xf]
      %v1686 = vld [vmem:[%s4 + $0xa8] sm:$0xf]
      %v1687 = vld [vmem:[%s4 + $0xac] sm:$0xf]
      %v1688 = vld [vmem:[%s4 + $0xb0] sm:$0xf]
      %v1689 = vld [vmem:[%s4 + $0xb4] sm:$0xf]
      %v1690 = vld [vmem:[%s4 + $0xb8] sm:$0xf]
      %v1691 = vld [vmem:[%s4 + $0xbc] sm:$0xf]
      %v1692 = vld [vmem:[%s1151] sm:$0xff]
      %v1693 = vld [vmem:[%s1151 + $0x8] sm:$0xff]
      %v1694 = vld [vmem:[%s1151 + $0x10] sm:$0xff]
      %v1695 = vld [vmem:[%s1151 + $0x18] sm:$0xff]
      %v1696 = vld [vmem:[%s1151 + $0x20] sm:$0xff]
      %v1697 = vld [vmem:[%s1151 + $0x28] sm:$0xff]
      %v1698 = vld [vmem:[%s1151 + $0x30] sm:$0xff]
      %v1699 = vld [vmem:[%s1151 + $0x38] sm:$0xff]
      %v1700 = vld [vmem:[%s1151 + $0x40] sm:$0xff]
      %v1701 = vld [vmem:[%s1151 + $0x48] sm:$0xff]
      %v1702 = vld [vmem:[%s1151 + $0x50] sm:$0xff]
      %v1703 = vld [vmem:[%s1151 + $0x58] sm:$0xff]
      %v1704 = vld [vmem:[%s1151 + $0x60] sm:$0xff]
      %v1705 = vld [vmem:[%s1151 + $0x68] sm:$0xff]
      %v1706 = vld [vmem:[%s1151 + $0x70] sm:$0xff]
      %v1707 = vld [vmem:[%s1151 + $0x78] sm:$0xff]
      %v1708 = vld [vmem:[%s1151 + $0x80] sm:$0xff]
      %v1709 = vld [vmem:[%s1151 + $0x88] sm:$0xff]
      %v1710 = vld [vmem:[%s1151 + $0x90] sm:$0xff]
      %v1711 = vld [vmem:[%s1151 + $0x98] sm:$0xff]
      %v1712 = vld [vmem:[%s1151 + $0xa0] sm:$0xff]
      %v1713 = vld [vmem:[%s1151 + $0xa8] sm:$0xff]
      %v1714 = vld [vmem:[%s1151 + $0xb0] sm:$0xff]
      %v1715 = vld [vmem:[%s1151 + $0xb8] sm:$0xff]
      %v1716 = vld [vmem:[%s1151 + $0xc0] sm:$0xff]
      %v1717 = vld [vmem:[%s1151 + $0xc8] sm:$0xff]
      %v1718 = vld [vmem:[%s1151 + $0xd0] sm:$0xff]
      %v1719 = vld [vmem:[%s1151 + $0xd8] sm:$0xff]
      %v1720 = vld [vmem:[%s1151 + $0xe0] sm:$0xff]
      %v1721 = vld [vmem:[%s1151 + $0xe8] sm:$0xff]
      %v1722 = vld [vmem:[%s1151 + $0xf0] sm:$0xff]
      %v1723 = vld [vmem:[%s1151 + $0xf8] sm:$0xff]
      %v1724 = vld [vmem:[%s1151 + $0x100] sm:$0xff]
      %v1725 = vld [vmem:[%s1151 + $0x108] sm:$0xff]
      %v1726 = vld [vmem:[%s1151 + $0x110] sm:$0xff]
      %v1727 = vld [vmem:[%s1151 + $0x118] sm:$0xff]
      %v1728 = vld [vmem:[%s1151 + $0x120] sm:$0xff]
      %v1729 = vld [vmem:[%s1151 + $0x128] sm:$0xff]
      %v1730 = vld [vmem:[%s1151 + $0x130] sm:$0xff]
      %v1731 = vld [vmem:[%s1151 + $0x138] sm:$0xff]
      %v1732 = vld [vmem:[%s1151 + $0x140] sm:$0xff]
      %v1733 = vld [vmem:[%s1151 + $0x148] sm:$0xff]
      %v1734 = vld [vmem:[%s1151 + $0x150] sm:$0xff]
      %v1735 = vld [vmem:[%s1151 + $0x158] sm:$0xff]
      %v1736 = vld [vmem:[%s1151 + $0x160] sm:$0xff]
      %v1737 = vld [vmem:[%s1151 + $0x168] sm:$0xff]
      %v1738 = vld [vmem:[%s1151 + $0x170] sm:$0xff]
      %v1739 = vld [vmem:[%s1151 + $0x178] sm:$0xff]
      %s1740 = scalar_lea.vmem %s4, 192
      %v1741 = vld [vmem:[%s1740] sm:$0xf]
      %v1742 = vld [vmem:[%s1740 + $0x4] sm:$0xf]
      %v1743 = vld [vmem:[%s1740 + $0x8] sm:$0xf]
      %v1744 = vld [vmem:[%s1740 + $0xc] sm:$0xf]
      %v1745 = vld [vmem:[%s1740 + $0x10] sm:$0xf]
      %v1746 = vld [vmem:[%s1740 + $0x14] sm:$0xf]
      %v1747 = vld [vmem:[%s1740 + $0x18] sm:$0xf]
      %v1748 = vld [vmem:[%s1740 + $0x1c] sm:$0xf]
      %v1749 = vld [vmem:[%s1740 + $0x20] sm:$0xf]
      %v1750 = vld [vmem:[%s1740 + $0x24] sm:$0xf]
      %v1751 = vld [vmem:[%s1740 + $0x28] sm:$0xf]
      %v1752 = vld [vmem:[%s1740 + $0x2c] sm:$0xf]
      %v1753 = vld [vmem:[%s1740 + $0x30] sm:$0xf]
      %v1754 = vld [vmem:[%s1740 + $0x34] sm:$0xf]
      %v1755 = vld [vmem:[%s1740 + $0x38] sm:$0xf]
      %v1756 = vld [vmem:[%s1740 + $0x3c] sm:$0xf]
      %v1757 = vld [vmem:[%s1740 + $0x40] sm:$0xf]
      %v1758 = vld [vmem:[%s1740 + $0x44] sm:$0xf]
      %v1759 = vld [vmem:[%s1740 + $0x48] sm:$0xf]
      %v1760 = vld [vmem:[%s1740 + $0x4c] sm:$0xf]
      %v1761 = vld [vmem:[%s1740 + $0x50] sm:$0xf]
      %v1762 = vld [vmem:[%s1740 + $0x54] sm:$0xf]
      %v1763 = vld [vmem:[%s1740 + $0x58] sm:$0xf]
      %v1764 = vld [vmem:[%s1740 + $0x5c] sm:$0xf]
      %v1765 = vld [vmem:[%s1740 + $0x60] sm:$0xf]
      %v1766 = vld [vmem:[%s1740 + $0x64] sm:$0xf]
      %v1767 = vld [vmem:[%s1740 + $0x68] sm:$0xf]
      %v1768 = vld [vmem:[%s1740 + $0x6c] sm:$0xf]
      %v1769 = vld [vmem:[%s1740 + $0x70] sm:$0xf]
      %v1770 = vld [vmem:[%s1740 + $0x74] sm:$0xf]
      %v1771 = vld [vmem:[%s1740 + $0x78] sm:$0xf]
      %v1772 = vld [vmem:[%s1740 + $0x7c] sm:$0xf]
      %v1773 = vld [vmem:[%s1740 + $0x80] sm:$0xf]
      %v1774 = vld [vmem:[%s1740 + $0x84] sm:$0xf]
      %v1775 = vld [vmem:[%s1740 + $0x88] sm:$0xf]
      %v1776 = vld [vmem:[%s1740 + $0x8c] sm:$0xf]
      %v1777 = vld [vmem:[%s1740 + $0x90] sm:$0xf]
      %v1778 = vld [vmem:[%s1740 + $0x94] sm:$0xf]
      %v1779 = vld [vmem:[%s1740 + $0x98] sm:$0xf]
      %v1780 = vld [vmem:[%s1740 + $0x9c] sm:$0xf]
      %v1781 = vld [vmem:[%s1740 + $0xa0] sm:$0xf]
      %v1782 = vld [vmem:[%s1740 + $0xa4] sm:$0xf]
      %v1783 = vld [vmem:[%s1740 + $0xa8] sm:$0xf]
      %v1784 = vld [vmem:[%s1740 + $0xac] sm:$0xf]
      %v1785 = vld [vmem:[%s1740 + $0xb0] sm:$0xf]
      %v1786 = vld [vmem:[%s1740 + $0xb4] sm:$0xf]
      %v1787 = vld [vmem:[%s1740 + $0xb8] sm:$0xf]
      %v1788 = vld [vmem:[%s1740 + $0xbc] sm:$0xf]
      %v1837 = vunpack.c.l.b16 %v1741
      %v1838 = vunpack.c.l.b16 %v1742
      %v1839 = vunpack.c.l.b16 %v1743
      %v1840 = vunpack.c.l.b16 %v1744
      %v1841 = vunpack.c.l.b16 %v1745
      %v1842 = vunpack.c.l.b16 %v1746
      %v1843 = vunpack.c.l.b16 %v1747
      %v1844 = vunpack.c.l.b16 %v1748
      %v1845 = vunpack.c.l.b16 %v1749
      %v1846 = vunpack.c.l.b16 %v1750
      %v1847 = vunpack.c.l.b16 %v1751
      %v1848 = vunpack.c.l.b16 %v1752
      %v1849 = vunpack.c.l.b16 %v1753
      %v1850 = vunpack.c.l.b16 %v1754
      %v1851 = vunpack.c.l.b16 %v1755
      %v1852 = vunpack.c.l.b16 %v1756
      %v1853 = vunpack.c.l.b16 %v1757
      %v1854 = vunpack.c.l.b16 %v1758
      %v1855 = vunpack.c.l.b16 %v1759
      %v1856 = vunpack.c.l.b16 %v1760
      %v1857 = vunpack.c.l.b16 %v1761
      %v1858 = vunpack.c.l.b16 %v1762
      %v1859 = vunpack.c.l.b16 %v1763
      %v1860 = vunpack.c.l.b16 %v1764
      %v1861 = vunpack.c.l.b16 %v1765
      %v1862 = vunpack.c.l.b16 %v1766
      %v1863 = vunpack.c.l.b16 %v1767
      %v1864 = vunpack.c.l.b16 %v1768
      %v1865 = vunpack.c.l.b16 %v1769
      %v1866 = vunpack.c.l.b16 %v1770
      %v1867 = vunpack.c.l.b16 %v1771
      %v1868 = vunpack.c.l.b16 %v1772
      %v1869 = vunpack.c.l.b16 %v1773
      %v1870 = vunpack.c.l.b16 %v1774
      %v1871 = vunpack.c.l.b16 %v1775
      %v1872 = vunpack.c.l.b16 %v1776
      %v1873 = vunpack.c.l.b16 %v1777
      %v1874 = vunpack.c.l.b16 %v1778
      %v1875 = vunpack.c.l.b16 %v1779
      %v1876 = vunpack.c.l.b16 %v1780
      %v1877 = vunpack.c.l.b16 %v1781
      %v1878 = vunpack.c.l.b16 %v1782
      %v1879 = vunpack.c.l.b16 %v1783
      %v1880 = vunpack.c.l.b16 %v1784
      %v1881 = vunpack.c.l.b16 %v1785
      %v1882 = vunpack.c.l.b16 %v1786
      %v1883 = vunpack.c.l.b16 %v1787
      %v1884 = vunpack.c.l.b16 %v1788
      %v1885 = vpack.c.b16 %v1838, %v1837
      %v1886 = vpack.c.b16 %v1840, %v1839
      %v1887 = vpack.c.b16 %v1842, %v1841
      %v1888 = vpack.c.b16 %v1844, %v1843
      %v1889 = vpack.c.b16 %v1846, %v1845
      %v1890 = vpack.c.b16 %v1848, %v1847
      %v1891 = vpack.c.b16 %v1850, %v1849
      %v1892 = vpack.c.b16 %v1852, %v1851
      %v1893 = vpack.c.b16 %v1854, %v1853
      %v1894 = vpack.c.b16 %v1856, %v1855
      %v1895 = vpack.c.b16 %v1858, %v1857
      %v1896 = vpack.c.b16 %v1860, %v1859
      %v1897 = vpack.c.b16 %v1862, %v1861
      %v1898 = vpack.c.b16 %v1864, %v1863
      %v1899 = vpack.c.b16 %v1866, %v1865
      %v1900 = vpack.c.b16 %v1868, %v1867
      %v1901 = vpack.c.b16 %v1870, %v1869
      %v1902 = vpack.c.b16 %v1872, %v1871
      %v1903 = vpack.c.b16 %v1874, %v1873
      %v1904 = vpack.c.b16 %v1876, %v1875
      %v1905 = vpack.c.b16 %v1878, %v1877
      %v1906 = vpack.c.b16 %v1880, %v1879
      %v1907 = vpack.c.b16 %v1882, %v1881
      %v1908 = vpack.c.b16 %v1884, %v1883
      %1933 = vmatprep.subr.bf16.mxu0 0
      %1934 = vmatpush1.bf16.msra.mxu0 %v1885
      %1935 = vmatprep.subr.bf16.mxu0 0
      %1936 = vmatpush1.bf16.msra.mxu0 %v1886
      %1937 = vmatprep.subr.bf16.mxu0 0
      %1938 = vmatpush1.bf16.msra.mxu0 %v1887
      %1939 = vmatprep.subr.bf16.mxu0 0
      %1940 = vmatpush1.bf16.msra.mxu0 %v1888
      %1941 = vmatprep.subr.bf16.mxu0 0
      %1942 = vmatpush1.bf16.msra.mxu0 %v1889
      %1943 = vmatprep.subr.bf16.mxu0 0
      %1944 = vmatpush1.bf16.msra.mxu0 %v1890
      %1945 = vmatprep.subr.bf16.mxu0 0
      %1946 = vmatpush1.bf16.msra.mxu0 %v1891
      %1947 = vmatprep.subr.bf16.mxu0 0
      %1948 = vmatpush1.bf16.msra.mxu0 %v1892
      %1949 = vmatprep.subr.bf16.mxu0 0
      %1950 = vmatpush1.bf16.msra.mxu0 %v1893
      %1951 = vmatprep.subr.bf16.mxu0 0
      %1952 = vmatpush1.bf16.msra.mxu0 %v1894
      %1953 = vmatprep.subr.bf16.mxu0 0
      %1954 = vmatpush1.bf16.msra.mxu0 %v1895
      %1955 = vmatprep.subr.bf16.mxu0 0
      %1956 = vmatpush1.bf16.msra.mxu0 %v1896
      %1957 = vmatprep.subr.bf16.mxu0 0
      %1958 = vmatpush1.bf16.msra.mxu0 %v1897
      %1959 = vmatprep.subr.bf16.mxu0 0
      %1960 = vmatpush1.bf16.msra.mxu0 %v1898
      %1961 = vmatprep.subr.bf16.mxu0 0
      %1962 = vmatpush1.bf16.msra.mxu0 %v1899
      %1963 = vmatprep.subr.bf16.mxu0 0
      %1964 = vmatpush1.bf16.msra.mxu0 %v1900
      %1965 = vmatprep.mubr.bf16.mxu0 %v1693
      %1966 = vmatmul.mubr.bf16.gmra.mrb[0].mxu0 %v1692
      %v1967 = vpop.f32.mrb[0].mxu0
      %v1968 = vadd.f32 0.0, %v1967
      %v1969 = vpop.f32.mrb[0].mxu0
      %v1970 = vpop.f32.mrb[0].mxu0
      %v1971 = vadd.f32 0.0, %v1970
      %v1972 = vpop.f32.mrb[0].mxu0
      %1973 = vmatprep.mubr.bf16.mxu0 %v1696
      %1974 = vmatmul.mubr.bf16.gmra.mrb[0].mxu0 %v1695
      %v1975 = vpop.f32.mrb[0].mxu0
      %v1976 = vadd.f32 0.0, %v1975
      %v1977 = vpop.f32.mrb[0].mxu0
      %v1978 = vpop.f32.mrb[0].mxu0
      %v1979 = vadd.f32 0.0, %v1978
      %v1980 = vpop.f32.mrb[0].mxu0
      %1981 = vmatprep.mubr.bf16.mxu0 %v1699
      %1982 = vmatmul.mubr.bf16.gmra.mrb[0].mxu0 %v1698
      %v1983 = vpop.f32.mrb[0].mxu0
      %v1984 = vadd.f32 0.0, %v1983
      %v1985 = vpop.f32.mrb[0].mxu0
      %v1986 = vpop.f32.mrb[0].mxu0
      %v1987 = vadd.f32 0.0, %v1986
      %v1988 = vpop.f32.mrb[0].mxu0
      %1989 = vmatprep.mubr.bf16.mxu0 %v1702
      %1990 = vmatmul.mubr.bf16.gmra.mrb[0].mxu0 %v1701
      %v1991 = vpop.f32.mrb[0].mxu0
      %v1992 = vadd.f32 0.0, %v1991
      %v1993 = vpop.f32.mrb[0].mxu0
      %v1994 = vpop.f32.mrb[0].mxu0
      %v1995 = vadd.f32 0.0, %v1994
      %v1996 = vpop.f32.mrb[0].mxu0
      %1997 = vmatprep.mubr.bf16.mxu0 %v1705
      %1998 = vmatmul.mubr.bf16.gmra.mrb[0].mxu0 %v1704
      %v1999 = vpop.f32.mrb[0].mxu0
      %v2000 = vadd.f32 0.0, %v1999
      %v2001 = vpop.f32.mrb[0].mxu0
      %v2002 = vpop.f32.mrb[0].mxu0
      %v2003 = vadd.f32 0.0, %v2002
      %v2004 = vpop.f32.mrb[0].mxu0
      %2005 = vmatprep.mubr.bf16.mxu0 %v1708
      %2006 = vmatmul.mubr.bf16.gmra.mrb[0].mxu0 %v1707
      %v2007 = vpop.f32.mrb[0].mxu0
      %v2008 = vadd.f32 0.0, %v2007
      %v2009 = vpop.f32.mrb[0].mxu0
      %v2010 = vpop.f32.mrb[0].mxu0
      %v2011 = vadd.f32 0.0, %v2010
      %v2012 = vpop.f32.mrb[0].mxu0
      %2013 = vmatprep.mubr.bf16.mxu0 %v1711
      %2014 = vmatmul.mubr.bf16.gmra.mrb[0].mxu0 %v1710
      %v2015 = vpop.f32.mrb[0].mxu0
      %v2016 = vadd.f32 0.0, %v2015
      %v2017 = vpop.f32.mrb[0].mxu0
      %v2018 = vpop.f32.mrb[0].mxu0
      %v2019 = vadd.f32 0.0, %v2018
      %v2020 = vpop.f32.mrb[0].mxu0
      %2021 = vmatprep.mubr.bf16.mxu0 %v1714
      %2022 = vmatmul.mubr.bf16.gmra.mrb[0].mxu0 %v1713
      %v2023 = vpop.f32.mrb[0].mxu0
      %v2024 = vadd.f32 0.0, %v2023
      %v2025 = vpop.f32.mrb[0].mxu0
      %v2026 = vpop.f32.mrb[0].mxu0
      %v2027 = vadd.f32 0.0, %v2026
      %v2028 = vpop.f32.mrb[0].mxu0
      %2029 = vmatprep.mubr.bf16.mxu0 %v1717
      %2030 = vmatmul.mubr.bf16.gmra.mrb[0].mxu0 %v1716
      %v2031 = vpop.f32.mrb[0].mxu0
      %v2032 = vadd.f32 0.0, %v2031
      %v2033 = vpop.f32.mrb[0].mxu0
      %v2034 = vpop.f32.mrb[0].mxu0
      %v2035 = vadd.f32 0.0, %v2034
      %v2036 = vpop.f32.mrb[0].mxu0
      %2037 = vmatprep.mubr.bf16.mxu0 %v1720
      %2038 = vmatmul.mubr.bf16.gmra.mrb[0].mxu0 %v1719
      %v2039 = vpop.f32.mrb[0].mxu0
      %v2040 = vadd.f32 0.0, %v2039
      %v2041 = vpop.f32.mrb[0].mxu0
      %v2042 = vpop.f32.mrb[0].mxu0
      %v2043 = vadd.f32 0.0, %v2042
      %v2044 = vpop.f32.mrb[0].mxu0
      %2045 = vmatprep.mubr.bf16.mxu0 %v1723
      %2046 = vmatmul.mubr.bf16.gmra.mrb[0].mxu0 %v1722
      %v2047 = vpop.f32.mrb[0].mxu0
      %v2048 = vadd.f32 0.0, %v2047
      %v2049 = vpop.f32.mrb[0].mxu0
      %v2050 = vpop.f32.mrb[0].mxu0
      %v2051 = vadd.f32 0.0, %v2050
      %v2052 = vpop.f32.mrb[0].mxu0
      %2053 = vmatprep.mubr.bf16.mxu0 %v1726
      %2054 = vmatmul.mubr.bf16.gmra.mrb[0].mxu0 %v1725
      %v2055 = vpop.f32.mrb[0].mxu0
      %v2056 = vadd.f32 0.0, %v2055
      %v2057 = vpop.f32.mrb[0].mxu0
      %v2058 = vpop.f32.mrb[0].mxu0
      %v2059 = vadd.f32 0.0, %v2058
      %v2060 = vpop.f32.mrb[0].mxu0
      %2061 = vmatprep.mubr.bf16.mxu0 %v1729
      %2062 = vmatmul.mubr.bf16.gmra.mrb[0].mxu0 %v1728
      %v2063 = vpop.f32.mrb[0].mxu0
      %v2064 = vadd.f32 0.0, %v2063
      %v2065 = vpop.f32.mrb[0].mxu0
      %v2066 = vpop.f32.mrb[0].mxu0
      %v2067 = vadd.f32 0.0, %v2066
      %v2068 = vpop.f32.mrb[0].mxu0
      %2069 = vmatprep.mubr.bf16.mxu0 %v1732
      %2070 = vmatmul.mubr.bf16.gmra.mrb[0].mxu0 %v1731
      %v2071 = vpop.f32.mrb[0].mxu0
      %v2072 = vadd.f32 0.0, %v2071
      %v2073 = vpop.f32.mrb[0].mxu0
      %v2074 = vpop.f32.mrb[0].mxu0
      %v2075 = vadd.f32 0.0, %v2074
      %v2076 = vpop.f32.mrb[0].mxu0
      %2077 = vmatprep.mubr.bf16.mxu0 %v1735
      %2078 = vmatmul.mubr.bf16.gmra.mrb[0].mxu0 %v1734
      %v2079 = vpop.f32.mrb[0].mxu0
      %v2080 = vadd.f32 0.0, %v2079
      %v2081 = vpop.f32.mrb[0].mxu0
      %v2082 = vpop.f32.mrb[0].mxu0
      %v2083 = vadd.f32 0.0, %v2082
      %v2084 = vpop.f32.mrb[0].mxu0
      %2085 = vmatprep.mubr.bf16.mxu0 %v1738
      %2086 = vmatmul.mubr.bf16.gmra.mrb[0].mxu0 %v1737
      %v2087 = vpop.f32.mrb[0].mxu0
      %v2088 = vadd.f32 0.0, %v2087
      %v2089 = vpop.f32.mrb[0].mxu0
      %v2090 = vpop.f32.mrb[0].mxu0
      %v2091 = vadd.f32 0.0, %v2090
      %v2092 = vpop.f32.mrb[0].mxu0
      %2093 = vdwg.mxu0
      %2094 = vmatprep.subr.bf16.mxu0 0
      %2095 = vmatpush1.bf16.msra.mxu0 %v1901
      %2096 = vmatprep.subr.bf16.mxu0 0
      %2097 = vmatpush1.bf16.msra.mxu0 %v1902
      %2098 = vmatprep.subr.bf16.mxu0 0
      %2099 = vmatpush1.bf16.msra.mxu0 %v1903
      %2100 = vmatprep.subr.bf16.mxu0 0
      %2101 = vmatpush1.bf16.msra.mxu0 %v1904
      %2102 = vmatprep.subr.bf16.mxu0 0
      %2103 = vmatpush1.bf16.msra.mxu0 %v1905
      %2104 = vmatprep.subr.bf16.mxu0 0
      %2105 = vmatpush1.bf16.msra.mxu0 %v1906
      %2106 = vmatprep.subr.bf16.mxu0 0
      %2107 = vmatpush1.bf16.msra.mxu0 %v1907
      %2108 = vmatprep.subr.bf16.mxu0 0
      %2109 = vmatpush1.bf16.msra.mxu0 %v1908
      %2110 = vmatprep.subr.bf16.mxu0 0
      %2111 = vmatpush1.bf16.msra.mxu0 0
      %2112 = vmatprep.subr.bf16.mxu0 0
      %2113 = vmatpush1.bf16.msra.mxu0 0
      %2114 = vmatprep.subr.bf16.mxu0 0
      %2115 = vmatpush1.bf16.msra.mxu0 0
      %2116 = vmatprep.subr.bf16.mxu0 0
      %2117 = vmatpush1.bf16.msra.mxu0 0
      %2118 = vmatprep.subr.bf16.mxu0 0
      %2119 = vmatpush1.bf16.msra.mxu0 0
      %2120 = vmatprep.subr.bf16.mxu0 0
      %2121 = vmatpush1.bf16.msra.mxu0 0
      %2122 = vmatprep.subr.bf16.mxu0 0
      %2123 = vmatpush1.bf16.msra.mxu0 0
      %2124 = vmatprep.subr.bf16.mxu0 0
      %2125 = vmatpush1.bf16.msra.mxu0 0
      %2126 = vmatprep.mubr.bf16.mxu0 0
      %2127 = vmatmul.mubr.bf16.gmra.mrb[0].mxu0 %v1694
      %v2128 = vpop.f32.mrb[0].mxu0
      %v2129 = vadd.f32 %v1968, %v2128
      %v2130 = vpop.f32.mrb[0].mxu0
      %v2131 = vpop.f32.mrb[0].mxu0
      %v2132 = vadd.f32 %v1971, %v2131
      %v2133 = vpop.f32.mrb[0].mxu0
      %2134 = vmatprep.mubr.bf16.mxu0 0
      %2135 = vmatmul.mubr.bf16.gmra.mrb[0].mxu0 %v1697
      %v2136 = vpop.f32.mrb[0].mxu0
      %v2137 = vadd.f32 %v1976, %v2136
      %v2138 = vpop.f32.mrb[0].mxu0
      %v2139 = vpop.f32.mrb[0].mxu0
      %v2140 = vadd.f32 %v1979, %v2139
      %v2141 = vpop.f32.mrb[0].mxu0
      %2142 = vmatprep.mubr.bf16.mxu0 0
      %2143 = vmatmul.mubr.bf16.gmra.mrb[0].mxu0 %v1700
      %v2144 = vpop.f32.mrb[0].mxu0
      %v2145 = vadd.f32 %v1984, %v2144
      %v2146 = vpop.f32.mrb[0].mxu0
      %v2147 = vpop.f32.mrb[0].mxu0
      %v2148 = vadd.f32 %v1987, %v2147
      %v2149 = vpop.f32.mrb[0].mxu0
      %2150 = vmatprep.mubr.bf16.mxu0 0
      %2151 = vmatmul.mubr.bf16.gmra.mrb[0].mxu0 %v1703
      %v2152 = vpop.f32.mrb[0].mxu0
      %v2153 = vadd.f32 %v1992, %v2152
      %v2154 = vpop.f32.mrb[0].mxu0
      %v2155 = vpop.f32.mrb[0].mxu0
      %v2156 = vadd.f32 %v1995, %v2155
      %v2157 = vpop.f32.mrb[0].mxu0
      %2158 = vmatprep.mubr.bf16.mxu0 0
      %2159 = vmatmul.mubr.bf16.gmra.mrb[0].mxu0 %v1706
      %v2160 = vpop.f32.mrb[0].mxu0
      %v2161 = vadd.f32 %v2000, %v2160
      %v2162 = vpop.f32.mrb[0].mxu0
      %v2163 = vpop.f32.mrb[0].mxu0
      %v2164 = vadd.f32 %v2003, %v2163
      %v2165 = vpop.f32.mrb[0].mxu0
      %2166 = vmatprep.mubr.bf16.mxu0 0
      %2167 = vmatmul.mubr.bf16.gmra.mrb[0].mxu0 %v1709
      %v2168 = vpop.f32.mrb[0].mxu0
      %v2169 = vadd.f32 %v2008, %v2168
      %v2170 = vpop.f32.mrb[0].mxu0
      %v2171 = vpop.f32.mrb[0].mxu0
      %v2172 = vadd.f32 %v2011, %v2171
      %v2173 = vpop.f32.mrb[0].mxu0
      %2174 = vmatprep.mubr.bf16.mxu0 0
      %2175 = vmatmul.mubr.bf16.gmra.mrb[0].mxu0 %v1712
      %v2176 = vpop.f32.mrb[0].mxu0
      %v2177 = vadd.f32 %v2016, %v2176
      %v2178 = vpop.f32.mrb[0].mxu0
      %v2179 = vpop.f32.mrb[0].mxu0
      %v2180 = vadd.f32 %v2019, %v2179
      %v2181 = vpop.f32.mrb[0].mxu0
      %2182 = vmatprep.mubr.bf16.mxu0 0
      %2183 = vmatmul.mubr.bf16.gmra.mrb[0].mxu0 %v1715
      %v2184 = vpop.f32.mrb[0].mxu0
      %v2185 = vadd.f32 %v2024, %v2184
      %v2186 = vpop.f32.mrb[0].mxu0
      %v2187 = vpop.f32.mrb[0].mxu0
      %v2188 = vadd.f32 %v2027, %v2187
      %v2189 = vpop.f32.mrb[0].mxu0
      %2190 = vmatprep.mubr.bf16.mxu0 0
      %2191 = vmatmul.mubr.bf16.gmra.mrb[0].mxu0 %v1718
      %v2192 = vpop.f32.mrb[0].mxu0
      %v2193 = vadd.f32 %v2032, %v2192
      %v2194 = vpop.f32.mrb[0].mxu0
      %v2195 = vpop.f32.mrb[0].mxu0
      %v2196 = vadd.f32 %v2035, %v2195
      %v2197 = vpop.f32.mrb[0].mxu0
      %2198 = vmatprep.mubr.bf16.mxu0 0
      %2199 = vmatmul.mubr.bf16.gmra.mrb[0].mxu0 %v1721
      %v2200 = vpop.f32.mrb[0].mxu0
      %v2201 = vadd.f32 %v2040, %v2200
      %v2202 = vpop.f32.mrb[0].mxu0
      %v2203 = vpop.f32.mrb[0].mxu0
      %v2204 = vadd.f32 %v2043, %v2203
      %v2205 = vpop.f32.mrb[0].mxu0
      %2206 = vmatprep.mubr.bf16.mxu0 0
      %2207 = vmatmul.mubr.bf16.gmra.mrb[0].mxu0 %v1724
      %v2208 = vpop.f32.mrb[0].mxu0
      %v2209 = vadd.f32 %v2048, %v2208
      %v2210 = vpop.f32.mrb[0].mxu0
      %v2211 = vpop.f32.mrb[0].mxu0
      %v2212 = vadd.f32 %v2051, %v2211
      %v2213 = vpop.f32.mrb[0].mxu0
      %2214 = vmatprep.mubr.bf16.mxu0 0
      %2215 = vmatmul.mubr.bf16.gmra.mrb[0].mxu0 %v1727
      %v2216 = vpop.f32.mrb[0].mxu0
      %v2217 = vadd.f32 %v2056, %v2216
      %v2218 = vpop.f32.mrb[0].mxu0
      %v2219 = vpop.f32.mrb[0].mxu0
      %v2220 = vadd.f32 %v2059, %v2219
      %v2221 = vpop.f32.mrb[0].mxu0
      %2222 = vmatprep.mubr.bf16.mxu0 0
      %2223 = vmatmul.mubr.bf16.gmra.mrb[0].mxu0 %v1730
      %v2224 = vpop.f32.mrb[0].mxu0
      %v2225 = vadd.f32 %v2064, %v2224
      %v2226 = vpop.f32.mrb[0].mxu0
      %v2227 = vpop.f32.mrb[0].mxu0
      %v2228 = vadd.f32 %v2067, %v2227
      %v2229 = vpop.f32.mrb[0].mxu0
      %2230 = vmatprep.mubr.bf16.mxu0 0
      %2231 = vmatmul.mubr.bf16.gmra.mrb[0].mxu0 %v1733
      %v2232 = vpop.f32.mrb[0].mxu0
      %v2233 = vadd.f32 %v2072, %v2232
      %v2234 = vpop.f32.mrb[0].mxu0
      %v2235 = vpop.f32.mrb[0].mxu0
      %v2236 = vadd.f32 %v2075, %v2235
      %v2237 = vpop.f32.mrb[0].mxu0
      %2238 = vmatprep.mubr.bf16.mxu0 0
      %2239 = vmatmul.mubr.bf16.gmra.mrb[0].mxu0 %v1736
      %v2240 = vpop.f32.mrb[0].mxu0
      %v2241 = vadd.f32 %v2080, %v2240
      %v2242 = vpop.f32.mrb[0].mxu0
      %v2243 = vpop.f32.mrb[0].mxu0
      %v2244 = vadd.f32 %v2083, %v2243
      %v2245 = vpop.f32.mrb[0].mxu0
      %2246 = vmatprep.mubr.bf16.mxu0 0
      %2247 = vmatmul.mubr.bf16.gmra.mrb[0].mxu0 %v1739
      %v2248 = vpop.f32.mrb[0].mxu0
      %v2249 = vadd.f32 %v2088, %v2248
      %v2250 = vpop.f32.mrb[0].mxu0
      %v2251 = vpop.f32.mrb[0].mxu0
      %v2252 = vadd.f32 %v2091, %v2251
      %v2253 = vpop.f32.mrb[0].mxu0
      %2254 = vdwg.mxu0
      %v2303 = vunpack.c.l.b16 %v1644
      %v2304 = vunpack.c.l.b16 %v1645
      %v2305 = vunpack.c.l.b16 %v1646
      %v2306 = vunpack.c.l.b16 %v1647
      %v2307 = vunpack.c.l.b16 %v1648
      %v2308 = vunpack.c.l.b16 %v1649
      %v2309 = vunpack.c.l.b16 %v1650
      %v2310 = vunpack.c.l.b16 %v1651
      %v2311 = vunpack.c.l.b16 %v1652
      %v2312 = vunpack.c.l.b16 %v1653
      %v2313 = vunpack.c.l.b16 %v1654
      %v2314 = vunpack.c.l.b16 %v1655
      %v2315 = vunpack.c.l.b16 %v1656
      %v2316 = vunpack.c.l.b16 %v1657
      %v2317 = vunpack.c.l.b16 %v1658
      %v2318 = vunpack.c.l.b16 %v1659
      %v2319 = vunpack.c.l.b16 %v1660
      %v2320 = vunpack.c.l.b16 %v1661
      %v2321 = vunpack.c.l.b16 %v1662
      %v2322 = vunpack.c.l.b16 %v1663
      %v2323 = vunpack.c.l.b16 %v1664
      %v2324 = vunpack.c.l.b16 %v1665
      %v2325 = vunpack.c.l.b16 %v1666
      %v2326 = vunpack.c.l.b16 %v1667
      %v2327 = vunpack.c.l.b16 %v1668
      %v2328 = vunpack.c.l.b16 %v1669
      %v2329 = vunpack.c.l.b16 %v1670
      %v2330 = vunpack.c.l.b16 %v1671
      %v2331 = vunpack.c.l.b16 %v1672
      %v2332 = vunpack.c.l.b16 %v1673
      %v2333 = vunpack.c.l.b16 %v1674
      %v2334 = vunpack.c.l.b16 %v1675
      %v2335 = vunpack.c.l.b16 %v1676
      %v2336 = vunpack.c.l.b16 %v1677
      %v2337 = vunpack.c.l.b16 %v1678
      %v2338 = vunpack.c.l.b16 %v1679
      %v2339 = vunpack.c.l.b16 %v1680
      %v2340 = vunpack.c.l.b16 %v1681
      %v2341 = vunpack.c.l.b16 %v1682
      %v2342 = vunpack.c.l.b16 %v1683
      %v2343 = vunpack.c.l.b16 %v1684
      %v2344 = vunpack.c.l.b16 %v1685
      %v2345 = vunpack.c.l.b16 %v1686
      %v2346 = vunpack.c.l.b16 %v1687
      %v2347 = vunpack.c.l.b16 %v1688
      %v2348 = vunpack.c.l.b16 %v1689
      %v2349 = vunpack.c.l.b16 %v1690
      %v2350 = vunpack.c.l.b16 %v1691
      %v2351 = vpack.c.b16 %v2304, %v2303
      %v2352 = vpack.c.b16 %v2306, %v2305
      %v2353 = vpack.c.b16 %v2308, %v2307
      %v2354 = vpack.c.b16 %v2310, %v2309
      %v2355 = vpack.c.b16 %v2312, %v2311
      %v2356 = vpack.c.b16 %v2314, %v2313
      %v2357 = vpack.c.b16 %v2316, %v2315
      %v2358 = vpack.c.b16 %v2318, %v2317
      %v2359 = vpack.c.b16 %v2320, %v2319
      %v2360 = vpack.c.b16 %v2322, %v2321
      %v2361 = vpack.c.b16 %v2324, %v2323
      %v2362 = vpack.c.b16 %v2326, %v2325
      %v2363 = vpack.c.b16 %v2328, %v2327
      %v2364 = vpack.c.b16 %v2330, %v2329
      %v2365 = vpack.c.b16 %v2332, %v2331
      %v2366 = vpack.c.b16 %v2334, %v2333
      %v2367 = vpack.c.b16 %v2336, %v2335
      %v2368 = vpack.c.b16 %v2338, %v2337
      %v2369 = vpack.c.b16 %v2340, %v2339
      %v2370 = vpack.c.b16 %v2342, %v2341
      %v2371 = vpack.c.b16 %v2344, %v2343
      %v2372 = vpack.c.b16 %v2346, %v2345
      %v2373 = vpack.c.b16 %v2348, %v2347
      %v2374 = vpack.c.b16 %v2350, %v2349
      %2399 = vmatprep.subr.bf16.mxu0 0
      %2400 = vmatpush1.bf16.msra.mxu0 %v2351
      %2401 = vmatprep.subr.bf16.mxu0 0
      %2402 = vmatpush1.bf16.msra.mxu0 %v2352
      %2403 = vmatprep.subr.bf16.mxu0 0
      %2404 = vmatpush1.bf16.msra.mxu0 %v2353
      %2405 = vmatprep.subr.bf16.mxu0 0
      %2406 = vmatpush1.bf16.msra.mxu0 %v2354
      %2407 = vmatprep.subr.bf16.mxu0 0
      %2408 = vmatpush1.bf16.msra.mxu0 %v2355
      %2409 = vmatprep.subr.bf16.mxu0 0
      %2410 = vmatpush1.bf16.msra.mxu0 %v2356
      %2411 = vmatprep.subr.bf16.mxu0 0
      %2412 = vmatpush1.bf16.msra.mxu0 %v2357
      %2413 = vmatprep.subr.bf16.mxu0 0
      %2414 = vmatpush1.bf16.msra.mxu0 %v2358
      %2415 = vmatprep.subr.bf16.mxu0 0
      %2416 = vmatpush1.bf16.msra.mxu0 %v2359
      %2417 = vmatprep.subr.bf16.mxu0 0
      %2418 = vmatpush1.bf16.msra.mxu0 %v2360
      %2419 = vmatprep.subr.bf16.mxu0 0
      %2420 = vmatpush1.bf16.msra.mxu0 %v2361
      %2421 = vmatprep.subr.bf16.mxu0 0
      %2422 = vmatpush1.bf16.msra.mxu0 %v2362
      %2423 = vmatprep.subr.bf16.mxu0 0
      %2424 = vmatpush1.bf16.msra.mxu0 %v2363
      %2425 = vmatprep.subr.bf16.mxu0 0
      %2426 = vmatpush1.bf16.msra.mxu0 %v2364
      %2427 = vmatprep.subr.bf16.mxu0 0
      %2428 = vmatpush1.bf16.msra.mxu0 %v2365
      %2429 = vmatprep.subr.bf16.mxu0 0
      %2430 = vmatpush1.bf16.msra.mxu0 %v2366
      %2431 = vmatprep.mubr.bf16.mxu0 %v1597
      %2432 = vmatmul.mubr.bf16.gmra.mrb[0].mxu0 %v1596
      %v2433 = vpop.f32.mrb[0].mxu0
      %v2434 = vadd.f32 %v2129, %v2433
      %v2435 = vpop.f32.mrb[0].mxu0
      %v2436 = vpop.f32.mrb[0].mxu0
      %v2437 = vadd.f32 %v2132, %v2436
      %v2438 = vpop.f32.mrb[0].mxu0
      %2439 = vmatprep.mubr.bf16.mxu0 %v1600
      %2440 = vmatmul.mubr.bf16.gmra.mrb[0].mxu0 %v1599
      %v2441 = vpop.f32.mrb[0].mxu0
      %v2442 = vadd.f32 %v2137, %v2441
      %v2443 = vpop.f32.mrb[0].mxu0
      %v2444 = vpop.f32.mrb[0].mxu0
      %v2445 = vadd.f32 %v2140, %v2444
      %v2446 = vpop.f32.mrb[0].mxu0
      %2447 = vmatprep.mubr.bf16.mxu0 %v1603
      %2448 = vmatmul.mubr.bf16.gmra.mrb[0].mxu0 %v1602
      %v2449 = vpop.f32.mrb[0].mxu0
      %v2450 = vadd.f32 %v2145, %v2449
      %v2451 = vpop.f32.mrb[0].mxu0
      %v2452 = vpop.f32.mrb[0].mxu0
      %v2453 = vadd.f32 %v2148, %v2452
      %v2454 = vpop.f32.mrb[0].mxu0
      %2455 = vmatprep.mubr.bf16.mxu0 %v1606
      %2456 = vmatmul.mubr.bf16.gmra.mrb[0].mxu0 %v1605
      %v2457 = vpop.f32.mrb[0].mxu0
      %v2458 = vadd.f32 %v2153, %v2457
      %v2459 = vpop.f32.mrb[0].mxu0
      %v2460 = vpop.f32.mrb[0].mxu0
      %v2461 = vadd.f32 %v2156, %v2460
      %v2462 = vpop.f32.mrb[0].mxu0
      %2463 = vmatprep.mubr.bf16.mxu0 %v1609
      %2464 = vmatmul.mubr.bf16.gmra.mrb[0].mxu0 %v1608
      %v2465 = vpop.f32.mrb[0].mxu0
      %v2466 = vadd.f32 %v2161, %v2465
      %v2467 = vpop.f32.mrb[0].mxu0
      %v2468 = vpop.f32.mrb[0].mxu0
      %v2469 = vadd.f32 %v2164, %v2468
      %v2470 = vpop.f32.mrb[0].mxu0
      %2471 = vmatprep.mubr.bf16.mxu0 %v1612
      %2472 = vmatmul.mubr.bf16.gmra.mrb[0].mxu0 %v1611
      %v2473 = vpop.f32.mrb[0].mxu0
      %v2474 = vadd.f32 %v2169, %v2473
      %v2475 = vpop.f32.mrb[0].mxu0
      %v2476 = vpop.f32.mrb[0].mxu0
      %v2477 = vadd.f32 %v2172, %v2476
      %v2478 = vpop.f32.mrb[0].mxu0
      %2479 = vmatprep.mubr.bf16.mxu0 %v1615
      %2480 = vmatmul.mubr.bf16.gmra.mrb[0].mxu0 %v1614
      %v2481 = vpop.f32.mrb[0].mxu0
      %v2482 = vadd.f32 %v2177, %v2481
      %v2483 = vpop.f32.mrb[0].mxu0
      %v2484 = vpop.f32.mrb[0].mxu0
      %v2485 = vadd.f32 %v2180, %v2484
      %v2486 = vpop.f32.mrb[0].mxu0
      %2487 = vmatprep.mubr.bf16.mxu0 %v1618
      %2488 = vmatmul.mubr.bf16.gmra.mrb[0].mxu0 %v1617
      %v2489 = vpop.f32.mrb[0].mxu0
      %v2490 = vadd.f32 %v2185, %v2489
      %v2491 = vpop.f32.mrb[0].mxu0
      %v2492 = vpop.f32.mrb[0].mxu0
      %v2493 = vadd.f32 %v2188, %v2492
      %v2494 = vpop.f32.mrb[0].mxu0
      %2495 = vmatprep.mubr.bf16.mxu0 %v1621
      %2496 = vmatmul.mubr.bf16.gmra.mrb[0].mxu0 %v1620
      %v2497 = vpop.f32.mrb[0].mxu0
      %v2498 = vadd.f32 %v2193, %v2497
      %v2499 = vpop.f32.mrb[0].mxu0
      %v2500 = vpop.f32.mrb[0].mxu0
      %v2501 = vadd.f32 %v2196, %v2500
      %v2502 = vpop.f32.mrb[0].mxu0
      %2503 = vmatprep.mubr.bf16.mxu0 %v1624
      %2504 = vmatmul.mubr.bf16.gmra.mrb[0].mxu0 %v1623
      %v2505 = vpop.f32.mrb[0].mxu0
      %v2506 = vadd.f32 %v2201, %v2505
      %v2507 = vpop.f32.mrb[0].mxu0
      %v2508 = vpop.f32.mrb[0].mxu0
      %v2509 = vadd.f32 %v2204, %v2508
      %v2510 = vpop.f32.mrb[0].mxu0
      %2511 = vmatprep.mubr.bf16.mxu0 %v1627
      %2512 = vmatmul.mubr.bf16.gmra.mrb[0].mxu0 %v1626
      %v2513 = vpop.f32.mrb[0].mxu0
      %v2514 = vadd.f32 %v2209, %v2513
      %v2515 = vpop.f32.mrb[0].mxu0
      %v2516 = vpop.f32.mrb[0].mxu0
      %v2517 = vadd.f32 %v2212, %v2516
      %v2518 = vpop.f32.mrb[0].mxu0
      %2519 = vmatprep.mubr.bf16.mxu0 %v1630
      %2520 = vmatmul.mubr.bf16.gmra.mrb[0].mxu0 %v1629
      %v2521 = vpop.f32.mrb[0].mxu0
      %v2522 = vadd.f32 %v2217, %v2521
      %v2523 = vpop.f32.mrb[0].mxu0
      %v2524 = vpop.f32.mrb[0].mxu0
      %v2525 = vadd.f32 %v2220, %v2524
      %v2526 = vpop.f32.mrb[0].mxu0
      %2527 = vmatprep.mubr.bf16.mxu0 %v1633
      %2528 = vmatmul.mubr.bf16.gmra.mrb[0].mxu0 %v1632
      %v2529 = vpop.f32.mrb[0].mxu0
      %v2530 = vadd.f32 %v2225, %v2529
      %v2531 = vpop.f32.mrb[0].mxu0
      %v2532 = vpop.f32.mrb[0].mxu0
      %v2533 = vadd.f32 %v2228, %v2532
      %v2534 = vpop.f32.mrb[0].mxu0
      %2535 = vmatprep.mubr.bf16.mxu0 %v1636
      %2536 = vmatmul.mubr.bf16.gmra.mrb[0].mxu0 %v1635
      %v2537 = vpop.f32.mrb[0].mxu0
      %v2538 = vadd.f32 %v2233, %v2537
      %v2539 = vpop.f32.mrb[0].mxu0
      %v2540 = vpop.f32.mrb[0].mxu0
      %v2541 = vadd.f32 %v2236, %v2540
      %v2542 = vpop.f32.mrb[0].mxu0
      %2543 = vmatprep.mubr.bf16.mxu0 %v1639
      %2544 = vmatmul.mubr.bf16.gmra.mrb[0].mxu0 %v1638
      %v2545 = vpop.f32.mrb[0].mxu0
      %v2546 = vadd.f32 %v2241, %v2545
      %v2547 = vpop.f32.mrb[0].mxu0
      %v2548 = vpop.f32.mrb[0].mxu0
      %v2549 = vadd.f32 %v2244, %v2548
      %v2550 = vpop.f32.mrb[0].mxu0
      %2551 = vmatprep.mubr.bf16.mxu0 %v1642
      %2552 = vmatmul.mubr.bf16.gmra.mrb[0].mxu0 %v1641
      %v2553 = vpop.f32.mrb[0].mxu0
      %v2554 = vadd.f32 %v2249, %v2553
      %v2555 = vpop.f32.mrb[0].mxu0
      %v2556 = vpop.f32.mrb[0].mxu0
      %v2557 = vadd.f32 %v2252, %v2556
      %v2558 = vpop.f32.mrb[0].mxu0
      %2559 = vdwg.mxu0
      %2560 = vmatprep.subr.bf16.mxu0 0
      %2561 = vmatpush1.bf16.msra.mxu0 %v2367
      %2562 = vmatprep.subr.bf16.mxu0 0
      %2563 = vmatpush1.bf16.msra.mxu0 %v2368
      %2564 = vmatprep.subr.bf16.mxu0 0
      %2565 = vmatpush1.bf16.msra.mxu0 %v2369
      %2566 = vmatprep.subr.bf16.mxu0 0
      %2567 = vmatpush1.bf16.msra.mxu0 %v2370
      %2568 = vmatprep.subr.bf16.mxu0 0
      %2569 = vmatpush1.bf16.msra.mxu0 %v2371
      %2570 = vmatprep.subr.bf16.mxu0 0
      %2571 = vmatpush1.bf16.msra.mxu0 %v2372
      %2572 = vmatprep.subr.bf16.mxu0 0
      %2573 = vmatpush1.bf16.msra.mxu0 %v2373
      %2574 = vmatprep.subr.bf16.mxu0 0
      %2575 = vmatpush1.bf16.msra.mxu0 %v2374
      %2576 = vmatprep.subr.bf16.mxu0 0
      %2577 = vmatpush1.bf16.msra.mxu0 0
      %2578 = vmatprep.subr.bf16.mxu0 0
      %2579 = vmatpush1.bf16.msra.mxu0 0
      %2580 = vmatprep.subr.bf16.mxu0 0
      %2581 = vmatpush1.bf16.msra.mxu0 0
      %2582 = vmatprep.subr.bf16.mxu0 0
      %2583 = vmatpush1.bf16.msra.mxu0 0
      %2584 = vmatprep.subr.bf16.mxu0 0
      %2585 = vmatpush1.bf16.msra.mxu0 0
      %2586 = vmatprep.subr.bf16.mxu0 0
      %2587 = vmatpush1.bf16.msra.mxu0 0
      %2588 = vmatprep.subr.bf16.mxu0 0
      %2589 = vmatpush1.bf16.msra.mxu0 0
      %2590 = vmatprep.subr.bf16.mxu0 0
      %2591 = vmatpush1.bf16.msra.mxu0 0
      %2592 = vmatprep.mubr.bf16.mxu0 0
      %2593 = vmatmul.mubr.bf16.gmra.mrb[0].mxu0 %v1598
      %v2594 = vpop.f32.mrb[0].mxu0
      %v2595 = vadd.f32 %v2434, %v2594
      %v2596 = vpop.f32.mrb[0].mxu0
      %v2597 = vpop.f32.mrb[0].mxu0
      %v2598 = vadd.f32 %v2437, %v2597
      %v2599 = vpop.f32.mrb[0].mxu0
      %2600 = vmatprep.mubr.bf16.mxu0 0
      %2601 = vmatmul.mubr.bf16.gmra.mrb[0].mxu0 %v1601
      %v2602 = vpop.f32.mrb[0].mxu0
      %v2603 = vadd.f32 %v2442, %v2602
      %v2604 = vpop.f32.mrb[0].mxu0
      %v2605 = vpop.f32.mrb[0].mxu0
      %v2606 = vadd.f32 %v2445, %v2605
      %v2607 = vpop.f32.mrb[0].mxu0
      %2608 = vmatprep.mubr.bf16.mxu0 0
      %2609 = vmatmul.mubr.bf16.gmra.mrb[0].mxu0 %v1604
      %v2610 = vpop.f32.mrb[0].mxu0
      %v2611 = vadd.f32 %v2450, %v2610
      %v2612 = vpop.f32.mrb[0].mxu0
      %v2613 = vpop.f32.mrb[0].mxu0
      %v2614 = vadd.f32 %v2453, %v2613
      %v2615 = vpop.f32.mrb[0].mxu0
      %2616 = vmatprep.mubr.bf16.mxu0 0
      %2617 = vmatmul.mubr.bf16.gmra.mrb[0].mxu0 %v1607
      %v2618 = vpop.f32.mrb[0].mxu0
      %v2619 = vadd.f32 %v2458, %v2618
      %v2620 = vpop.f32.mrb[0].mxu0
      %v2621 = vpop.f32.mrb[0].mxu0
      %v2622 = vadd.f32 %v2461, %v2621
      %v2623 = vpop.f32.mrb[0].mxu0
      %2624 = vmatprep.mubr.bf16.mxu0 0
      %2625 = vmatmul.mubr.bf16.gmra.mrb[0].mxu0 %v1610
      %v2626 = vpop.f32.mrb[0].mxu0
      %v2627 = vadd.f32 %v2466, %v2626
      %v2628 = vpop.f32.mrb[0].mxu0
      %v2629 = vpop.f32.mrb[0].mxu0
      %v2630 = vadd.f32 %v2469, %v2629
      %v2631 = vpop.f32.mrb[0].mxu0
      %2632 = vmatprep.mubr.bf16.mxu0 0
      %2633 = vmatmul.mubr.bf16.gmra.mrb[0].mxu0 %v1613
      %v2634 = vpop.f32.mrb[0].mxu0
      %v2635 = vadd.f32 %v2474, %v2634
      %v2636 = vpop.f32.mrb[0].mxu0
      %v2637 = vpop.f32.mrb[0].mxu0
      %v2638 = vadd.f32 %v2477, %v2637
      %v2639 = vpop.f32.mrb[0].mxu0
      %2640 = vmatprep.mubr.bf16.mxu0 0
      %2641 = vmatmul.mubr.bf16.gmra.mrb[0].mxu0 %v1616
      %v2642 = vpop.f32.mrb[0].mxu0
      %v2643 = vadd.f32 %v2482, %v2642
      %v2644 = vpop.f32.mrb[0].mxu0
      %v2645 = vpop.f32.mrb[0].mxu0
      %v2646 = vadd.f32 %v2485, %v2645
      %v2647 = vpop.f32.mrb[0].mxu0
      %2648 = vmatprep.mubr.bf16.mxu0 0
      %2649 = vmatmul.mubr.bf16.gmra.mrb[0].mxu0 %v1619
      %v2650 = vpop.f32.mrb[0].mxu0
      %v2651 = vadd.f32 %v2490, %v2650
      %v2652 = vpop.f32.mrb[0].mxu0
      %v2653 = vpop.f32.mrb[0].mxu0
      %v2654 = vadd.f32 %v2493, %v2653
      %v2655 = vpop.f32.mrb[0].mxu0
      %2656 = vmatprep.mubr.bf16.mxu0 0
      %2657 = vmatmul.mubr.bf16.gmra.mrb[0].mxu0 %v1622
      %v2658 = vpop.f32.mrb[0].mxu0
      %v2659 = vadd.f32 %v2498, %v2658
      %v2660 = vpop.f32.mrb[0].mxu0
      %v2661 = vpop.f32.mrb[0].mxu0
      %v2662 = vadd.f32 %v2501, %v2661
      %v2663 = vpop.f32.mrb[0].mxu0
      %2664 = vmatprep.mubr.bf16.mxu0 0
      %2665 = vmatmul.mubr.bf16.gmra.mrb[0].mxu0 %v1625
      %v2666 = vpop.f32.mrb[0].mxu0
      %v2667 = vadd.f32 %v2506, %v2666
      %v2668 = vpop.f32.mrb[0].mxu0
      %v2669 = vpop.f32.mrb[0].mxu0
      %v2670 = vadd.f32 %v2509, %v2669
      %v2671 = vpop.f32.mrb[0].mxu0
      %2672 = vmatprep.mubr.bf16.mxu0 0
      %2673 = vmatmul.mubr.bf16.gmra.mrb[0].mxu0 %v1628
      %v2674 = vpop.f32.mrb[0].mxu0
      %v2675 = vadd.f32 %v2514, %v2674
      %v2676 = vpop.f32.mrb[0].mxu0
      %v2677 = vpop.f32.mrb[0].mxu0
      %v2678 = vadd.f32 %v2517, %v2677
      %v2679 = vpop.f32.mrb[0].mxu0
      %2680 = vmatprep.mubr.bf16.mxu0 0
      %2681 = vmatmul.mubr.bf16.gmra.mrb[0].mxu0 %v1631
      %v2682 = vpop.f32.mrb[0].mxu0
      %v2683 = vadd.f32 %v2522, %v2682
      %v2684 = vpop.f32.mrb[0].mxu0
      %v2685 = vpop.f32.mrb[0].mxu0
      %v2686 = vadd.f32 %v2525, %v2685
      %v2687 = vpop.f32.mrb[0].mxu0
      %2688 = vmatprep.mubr.bf16.mxu0 0
      %2689 = vmatmul.mubr.bf16.gmra.mrb[0].mxu0 %v1634
      %v2690 = vpop.f32.mrb[0].mxu0
      %v2691 = vadd.f32 %v2530, %v2690
      %v2692 = vpop.f32.mrb[0].mxu0
      %v2693 = vpop.f32.mrb[0].mxu0
      %v2694 = vadd.f32 %v2533, %v2693
      %v2695 = vpop.f32.mrb[0].mxu0
      %2696 = vmatprep.mubr.bf16.mxu0 0
      %2697 = vmatmul.mubr.bf16.gmra.mrb[0].mxu0 %v1637
      %v2698 = vpop.f32.mrb[0].mxu0
      %v2699 = vadd.f32 %v2538, %v2698
      %v2700 = vpop.f32.mrb[0].mxu0
      %v2701 = vpop.f32.mrb[0].mxu0
      %v2702 = vadd.f32 %v2541, %v2701
      %v2703 = vpop.f32.mrb[0].mxu0
      %2704 = vmatprep.mubr.bf16.mxu0 0
      %2705 = vmatmul.mubr.bf16.gmra.mrb[0].mxu0 %v1640
      %v2706 = vpop.f32.mrb[0].mxu0
      %v2707 = vadd.f32 %v2546, %v2706
      %v2708 = vpop.f32.mrb[0].mxu0
      %v2709 = vpop.f32.mrb[0].mxu0
      %v2710 = vadd.f32 %v2549, %v2709
      %v2711 = vpop.f32.mrb[0].mxu0
      %2712 = vmatprep.mubr.bf16.mxu0 0
      %2713 = vmatmul.mubr.bf16.gmra.mrb[0].mxu0 %v1643
      %v2714 = vpop.f32.mrb[0].mxu0
      %v2715 = vadd.f32 %v2554, %v2714
      %v2716 = vpop.f32.mrb[0].mxu0
      %v2717 = vpop.f32.mrb[0].mxu0
      %v2718 = vadd.f32 %v2557, %v2717
      %v2719 = vpop.f32.mrb[0].mxu0
      %2720 = vdwg.mxu0
      %s2721 = scalar_lea.vmem [#allocation2], 48
      %v2722 = vld [vmem:[%s2721] sm:$0xff]
      %v2723 = vld [vmem:[%s2721 + $0x8] sm:$0xff]
      %v2724 = vld [vmem:[%s2721 + $0x10] sm:$0xff]
      %v2725 = vld [vmem:[%s2721 + $0x18] sm:$0xff]
      %v2726 = vld [vmem:[%s2721 + $0x20] sm:$0xff]
      %v2727 = vld [vmem:[%s2721 + $0x28] sm:$0xff]
      %v2728 = vld [vmem:[%s2721 + $0x30] sm:$0xff]
      %v2729 = vld [vmem:[%s2721 + $0x38] sm:$0xff]
      %v2730 = vld [vmem:[%s2721 + $0x40] sm:$0xff]
      %v2731 = vld [vmem:[%s2721 + $0x48] sm:$0xff]
      %v2732 = vld [vmem:[%s2721 + $0x50] sm:$0xff]
      %v2733 = vld [vmem:[%s2721 + $0x58] sm:$0xff]
      %v2734 = vld [vmem:[%s2721 + $0x60] sm:$0xff]
      %v2735 = vld [vmem:[%s2721 + $0x68] sm:$0xff]
      %v2736 = vld [vmem:[%s2721 + $0x70] sm:$0xff]
      %v2737 = vld [vmem:[%s2721 + $0x78] sm:$0xff]
      %v2738 = vld [vmem:[%s2721 + $0x80] sm:$0xff]
      %v2739 = vld [vmem:[%s2721 + $0x88] sm:$0xff]
      %v2740 = vld [vmem:[%s2721 + $0x90] sm:$0xff]
      %v2741 = vld [vmem:[%s2721 + $0x98] sm:$0xff]
      %v2742 = vld [vmem:[%s2721 + $0xa0] sm:$0xff]
      %v2743 = vld [vmem:[%s2721 + $0xa8] sm:$0xff]
      %v2744 = vld [vmem:[%s2721 + $0xb0] sm:$0xff]
      %v2745 = vld [vmem:[%s2721 + $0xb8] sm:$0xff]
      %v2746 = vld [vmem:[%s2721 + $0xc0] sm:$0xff]
      %v2747 = vld [vmem:[%s2721 + $0xc8] sm:$0xff]
      %v2748 = vld [vmem:[%s2721 + $0xd0] sm:$0xff]
      %v2749 = vld [vmem:[%s2721 + $0xd8] sm:$0xff]
      %v2750 = vld [vmem:[%s2721 + $0xe0] sm:$0xff]
      %v2751 = vld [vmem:[%s2721 + $0xe8] sm:$0xff]
      %v2752 = vld [vmem:[%s2721 + $0xf0] sm:$0xff]
      %v2753 = vld [vmem:[%s2721 + $0xf8] sm:$0xff]
      %v2754 = vld [vmem:[%s2721 + $0x100] sm:$0xff]
      %v2755 = vld [vmem:[%s2721 + $0x108] sm:$0xff]
      %v2756 = vld [vmem:[%s2721 + $0x110] sm:$0xff]
      %v2757 = vld [vmem:[%s2721 + $0x118] sm:$0xff]
      %v2758 = vld [vmem:[%s2721 + $0x120] sm:$0xff]
      %v2759 = vld [vmem:[%s2721 + $0x128] sm:$0xff]
      %v2760 = vld [vmem:[%s2721 + $0x130] sm:$0xff]
      %v2761 = vld [vmem:[%s2721 + $0x138] sm:$0xff]
      %v2762 = vld [vmem:[%s2721 + $0x140] sm:$0xff]
      %v2763 = vld [vmem:[%s2721 + $0x148] sm:$0xff]
      %v2764 = vld [vmem:[%s2721 + $0x150] sm:$0xff]
      %v2765 = vld [vmem:[%s2721 + $0x158] sm:$0xff]
      %v2766 = vld [vmem:[%s2721 + $0x160] sm:$0xff]
      %v2767 = vld [vmem:[%s2721 + $0x168] sm:$0xff]
      %v2768 = vld [vmem:[%s2721 + $0x170] sm:$0xff]
      %v2769 = vld [vmem:[%s2721 + $0x178] sm:$0xff]
      %s2770 = scalar_lea.vmem %s4, 384
      %v2771 = vld [vmem:[%s2770] sm:$0xf]
      %v2772 = vld [vmem:[%s2770 + $0x4] sm:$0xf]
      %v2773 = vld [vmem:[%s2770 + $0x8] sm:$0xf]
      %v2774 = vld [vmem:[%s2770 + $0xc] sm:$0xf]
      %v2775 = vld [vmem:[%s2770 + $0x10] sm:$0xf]
      %v2776 = vld [vmem:[%s2770 + $0x14] sm:$0xf]
      %v2777 = vld [vmem:[%s2770 + $0x18] sm:$0xf]
      %v2778 = vld [vmem:[%s2770 + $0x1c] sm:$0xf]
      %v2779 = vld [vmem:[%s2770 + $0x20] sm:$0xf]
      %v2780 = vld [vmem:[%s2770 + $0x24] sm:$0xf]
      %v2781 = vld [vmem:[%s2770 + $0x28] sm:$0xf]
      %v2782 = vld [vmem:[%s2770 + $0x2c] sm:$0xf]
      %v2783 = vld [vmem:[%s2770 + $0x30] sm:$0xf]
      %v2784 = vld [vmem:[%s2770 + $0x34] sm:$0xf]
      %v2785 = vld [vmem:[%s2770 + $0x38] sm:$0xf]
      %v2786 = vld [vmem:[%s2770 + $0x3c] sm:$0xf]
      %v2787 = vld [vmem:[%s2770 + $0x40] sm:$0xf]
      %v2788 = vld [vmem:[%s2770 + $0x44] sm:$0xf]
      %v2789 = vld [vmem:[%s2770 + $0x48] sm:$0xf]
      %v2790 = vld [vmem:[%s2770 + $0x4c] sm:$0xf]
      %v2791 = vld [vmem:[%s2770 + $0x50] sm:$0xf]
      %v2792 = vld [vmem:[%s2770 + $0x54] sm:$0xf]
      %v2793 = vld [vmem:[%s2770 + $0x58] sm:$0xf]
      %v2794 = vld [vmem:[%s2770 + $0x5c] sm:$0xf]
      %v2795 = vld [vmem:[%s2770 + $0x60] sm:$0xf]
      %v2796 = vld [vmem:[%s2770 + $0x64] sm:$0xf]
      %v2797 = vld [vmem:[%s2770 + $0x68] sm:$0xf]
      %v2798 = vld [vmem:[%s2770 + $0x6c] sm:$0xf]
      %v2799 = vld [vmem:[%s2770 + $0x70] sm:$0xf]
      %v2800 = vld [vmem:[%s2770 + $0x74] sm:$0xf]
      %v2801 = vld [vmem:[%s2770 + $0x78] sm:$0xf]
      %v2802 = vld [vmem:[%s2770 + $0x7c] sm:$0xf]
      %v2803 = vld [vmem:[%s2770 + $0x80] sm:$0xf]
      %v2804 = vld [vmem:[%s2770 + $0x84] sm:$0xf]
      %v2805 = vld [vmem:[%s2770 + $0x88] sm:$0xf]
      %v2806 = vld [vmem:[%s2770 + $0x8c] sm:$0xf]
      %v2807 = vld [vmem:[%s2770 + $0x90] sm:$0xf]
      %v2808 = vld [vmem:[%s2770 + $0x94] sm:$0xf]
      %v2809 = vld [vmem:[%s2770 + $0x98] sm:$0xf]
      %v2810 = vld [vmem:[%s2770 + $0x9c] sm:$0xf]
      %v2811 = vld [vmem:[%s2770 + $0xa0] sm:$0xf]
      %v2812 = vld [vmem:[%s2770 + $0xa4] sm:$0xf]
      %v2813 = vld [vmem:[%s2770 + $0xa8] sm:$0xf]
      %v2814 = vld [vmem:[%s2770 + $0xac] sm:$0xf]
      %v2815 = vld [vmem:[%s2770 + $0xb0] sm:$0xf]
      %v2816 = vld [vmem:[%s2770 + $0xb4] sm:$0xf]
      %v2817 = vld [vmem:[%s2770 + $0xb8] sm:$0xf]
      %v2818 = vld [vmem:[%s2770 + $0xbc] sm:$0xf]
      %v2867 = vunpack.c.l.b16 %v2771
      %v2868 = vunpack.c.l.b16 %v2772
      %v2869 = vunpack.c.l.b16 %v2773
      %v2870 = vunpack.c.l.b16 %v2774
      %v2871 = vunpack.c.l.b16 %v2775
      %v2872 = vunpack.c.l.b16 %v2776
      %v2873 = vunpack.c.l.b16 %v2777
      %v2874 = vunpack.c.l.b16 %v2778
      %v2875 = vunpack.c.l.b16 %v2779
      %v2876 = vunpack.c.l.b16 %v2780
      %v2877 = vunpack.c.l.b16 %v2781
      %v2878 = vunpack.c.l.b16 %v2782
      %v2879 = vunpack.c.l.b16 %v2783
      %v2880 = vunpack.c.l.b16 %v2784
      %v2881 = vunpack.c.l.b16 %v2785
      %v2882 = vunpack.c.l.b16 %v2786
      %v2883 = vunpack.c.l.b16 %v2787
      %v2884 = vunpack.c.l.b16 %v2788
      %v2885 = vunpack.c.l.b16 %v2789
      %v2886 = vunpack.c.l.b16 %v2790
      %v2887 = vunpack.c.l.b16 %v2791
      %v2888 = vunpack.c.l.b16 %v2792
      %v2889 = vunpack.c.l.b16 %v2793
      %v2890 = vunpack.c.l.b16 %v2794
      %v2891 = vunpack.c.l.b16 %v2795
      %v2892 = vunpack.c.l.b16 %v2796
      %v2893 = vunpack.c.l.b16 %v2797
      %v2894 = vunpack.c.l.b16 %v2798
      %v2895 = vunpack.c.l.b16 %v2799
      %v2896 = vunpack.c.l.b16 %v2800
      %v2897 = vunpack.c.l.b16 %v2801
      %v2898 = vunpack.c.l.b16 %v2802
      %v2899 = vunpack.c.l.b16 %v2803
      %v2900 = vunpack.c.l.b16 %v2804
      %v2901 = vunpack.c.l.b16 %v2805
      %v2902 = vunpack.c.l.b16 %v2806
      %v2903 = vunpack.c.l.b16 %v2807
      %v2904 = vunpack.c.l.b16 %v2808
      %v2905 = vunpack.c.l.b16 %v2809
      %v2906 = vunpack.c.l.b16 %v2810
      %v2907 = vunpack.c.l.b16 %v2811
      %v2908 = vunpack.c.l.b16 %v2812
      %v2909 = vunpack.c.l.b16 %v2813
      %v2910 = vunpack.c.l.b16 %v2814
      %v2911 = vunpack.c.l.b16 %v2815
      %v2912 = vunpack.c.l.b16 %v2816
      %v2913 = vunpack.c.l.b16 %v2817
      %v2914 = vunpack.c.l.b16 %v2818
      %v2915 = vpack.c.b16 %v2868, %v2867
      %v2916 = vpack.c.b16 %v2870, %v2869
      %v2917 = vpack.c.b16 %v2872, %v2871
      %v2918 = vpack.c.b16 %v2874, %v2873
      %v2919 = vpack.c.b16 %v2876, %v2875
      %v2920 = vpack.c.b16 %v2878, %v2877
      %v2921 = vpack.c.b16 %v2880, %v2879
      %v2922 = vpack.c.b16 %v2882, %v2881
      %v2923 = vpack.c.b16 %v2884, %v2883
      %v2924 = vpack.c.b16 %v2886, %v2885
      %v2925 = vpack.c.b16 %v2888, %v2887
      %v2926 = vpack.c.b16 %v2890, %v2889
      %v2927 = vpack.c.b16 %v2892, %v2891
      %v2928 = vpack.c.b16 %v2894, %v2893
      %v2929 = vpack.c.b16 %v2896, %v2895
      %v2930 = vpack.c.b16 %v2898, %v2897
      %v2931 = vpack.c.b16 %v2900, %v2899
      %v2932 = vpack.c.b16 %v2902, %v2901
      %v2933 = vpack.c.b16 %v2904, %v2903
      %v2934 = vpack.c.b16 %v2906, %v2905
      %v2935 = vpack.c.b16 %v2908, %v2907
      %v2936 = vpack.c.b16 %v2910, %v2909
      %v2937 = vpack.c.b16 %v2912, %v2911
      %v2938 = vpack.c.b16 %v2914, %v2913
      %2963 = vmatprep.subr.bf16.mxu0 0
      %2964 = vmatpush1.bf16.msra.mxu0 %v2915
      %2965 = vmatprep.subr.bf16.mxu0 0
      %2966 = vmatpush1.bf16.msra.mxu0 %v2916
      %2967 = vmatprep.subr.bf16.mxu0 0
      %2968 = vmatpush1.bf16.msra.mxu0 %v2917
      %2969 = vmatprep.subr.bf16.mxu0 0
      %2970 = vmatpush1.bf16.msra.mxu0 %v2918
      %2971 = vmatprep.subr.bf16.mxu0 0
      %2972 = vmatpush1.bf16.msra.mxu0 %v2919
      %2973 = vmatprep.subr.bf16.mxu0 0
      %2974 = vmatpush1.bf16.msra.mxu0 %v2920
      %2975 = vmatprep.subr.bf16.mxu0 0
      %2976 = vmatpush1.bf16.msra.mxu0 %v2921
      %2977 = vmatprep.subr.bf16.mxu0 0
      %2978 = vmatpush1.bf16.msra.mxu0 %v2922
      %2979 = vmatprep.subr.bf16.mxu0 0
      %2980 = vmatpush1.bf16.msra.mxu0 %v2923
      %2981 = vmatprep.subr.bf16.mxu0 0
      %2982 = vmatpush1.bf16.msra.mxu0 %v2924
      %2983 = vmatprep.subr.bf16.mxu0 0
      %2984 = vmatpush1.bf16.msra.mxu0 %v2925
      %2985 = vmatprep.subr.bf16.mxu0 0
      %2986 = vmatpush1.bf16.msra.mxu0 %v2926
      %2987 = vmatprep.subr.bf16.mxu0 0
      %2988 = vmatpush1.bf16.msra.mxu0 %v2927
      %2989 = vmatprep.subr.bf16.mxu0 0
      %2990 = vmatpush1.bf16.msra.mxu0 %v2928
      %2991 = vmatprep.subr.bf16.mxu0 0
      %2992 = vmatpush1.bf16.msra.mxu0 %v2929
      %2993 = vmatprep.subr.bf16.mxu0 0
      %2994 = vmatpush1.bf16.msra.mxu0 %v2930
      %2995 = vmatprep.mubr.bf16.mxu0 %v2723
      %2996 = vmatmul.mubr.bf16.gmra.mrb[0].mxu0 %v2722
      %v2997 = vpop.f32.mrb[0].mxu0
      %v2998 = vadd.f32 0.0, %v2997
      %v2999 = vpop.f32.mrb[0].mxu0
      %v3000 = vpop.f32.mrb[0].mxu0
      %v3001 = vadd.f32 0.0, %v3000
      %v3002 = vpop.f32.mrb[0].mxu0
      %3003 = vmatprep.mubr.bf16.mxu0 %v2726
      %3004 = vmatmul.mubr.bf16.gmra.mrb[0].mxu0 %v2725
      %v3005 = vpop.f32.mrb[0].mxu0
      %v3006 = vadd.f32 0.0, %v3005
      %v3007 = vpop.f32.mrb[0].mxu0
      %v3008 = vpop.f32.mrb[0].mxu0
      %v3009 = vadd.f32 0.0, %v3008
      %v3010 = vpop.f32.mrb[0].mxu0
      %3011 = vmatprep.mubr.bf16.mxu0 %v2729
      %3012 = vmatmul.mubr.bf16.gmra.mrb[0].mxu0 %v2728
      %v3013 = vpop.f32.mrb[0].mxu0
      %v3014 = vadd.f32 0.0, %v3013
      %v3015 = vpop.f32.mrb[0].mxu0
      %v3016 = vpop.f32.mrb[0].mxu0
      %v3017 = vadd.f32 0.0, %v3016
      %v3018 = vpop.f32.mrb[0].mxu0
      %3019 = vmatprep.mubr.bf16.mxu0 %v2732
      %3020 = vmatmul.mubr.bf16.gmra.mrb[0].mxu0 %v2731
      %v3021 = vpop.f32.mrb[0].mxu0
      %v3022 = vadd.f32 0.0, %v3021
      %v3023 = vpop.f32.mrb[0].mxu0
      %v3024 = vpop.f32.mrb[0].mxu0
      %v3025 = vadd.f32 0.0, %v3024
      %v3026 = vpop.f32.mrb[0].mxu0
      %3027 = vmatprep.mubr.bf16.mxu0 %v2735
      %3028 = vmatmul.mubr.bf16.gmra.mrb[0].mxu0 %v2734
      %v3029 = vpop.f32.mrb[0].mxu0
      %v3030 = vadd.f32 0.0, %v3029
      %v3031 = vpop.f32.mrb[0].mxu0
      %v3032 = vpop.f32.mrb[0].mxu0
      %v3033 = vadd.f32 0.0, %v3032
      %v3034 = vpop.f32.mrb[0].mxu0
      %3035 = vmatprep.mubr.bf16.mxu0 %v2738
      %3036 = vmatmul.mubr.bf16.gmra.mrb[0].mxu0 %v2737
      %v3037 = vpop.f32.mrb[0].mxu0
      %v3038 = vadd.f32 0.0, %v3037
      %v3039 = vpop.f32.mrb[0].mxu0
      %v3040 = vpop.f32.mrb[0].mxu0
      %v3041 = vadd.f32 0.0, %v3040
      %v3042 = vpop.f32.mrb[0].mxu0
      %3043 = vmatprep.mubr.bf16.mxu0 %v2741
      %3044 = vmatmul.mubr.bf16.gmra.mrb[0].mxu0 %v2740
      %v3045 = vpop.f32.mrb[0].mxu0
      %v3046 = vadd.f32 0.0, %v3045
      %v3047 = vpop.f32.mrb[0].mxu0
      %v3048 = vpop.f32.mrb[0].mxu0
      %v3049 = vadd.f32 0.0, %v3048
      %v3050 = vpop.f32.mrb[0].mxu0
      %3051 = vmatprep.mubr.bf16.mxu0 %v2744
      %3052 = vmatmul.mubr.bf16.gmra.mrb[0].mxu0 %v2743
      %v3053 = vpop.f32.mrb[0].mxu0
      %v3054 = vadd.f32 0.0, %v3053
      %v3055 = vpop.f32.mrb[0].mxu0
      %v3056 = vpop.f32.mrb[0].mxu0
      %v3057 = vadd.f32 0.0, %v3056
      %v3058 = vpop.f32.mrb[0].mxu0
      %3059 = vmatprep.mubr.bf16.mxu0 %v2747
      %3060 = vmatmul.mubr.bf16.gmra.mrb[0].mxu0 %v2746
      %v3061 = vpop.f32.mrb[0].mxu0
      %v3062 = vadd.f32 0.0, %v3061
      %v3063 = vpop.f32.mrb[0].mxu0
      %v3064 = vpop.f32.mrb[0].mxu0
      %v3065 = vadd.f32 0.0, %v3064
      %v3066 = vpop.f32.mrb[0].mxu0
      %3067 = vmatprep.mubr.bf16.mxu0 %v2750
      %3068 = vmatmul.mubr.bf16.gmra.mrb[0].mxu0 %v2749
      %v3069 = vpop.f32.mrb[0].mxu0
      %v3070 = vadd.f32 0.0, %v3069
      %v3071 = vpop.f32.mrb[0].mxu0
      %v3072 = vpop.f32.mrb[0].mxu0
      %v3073 = vadd.f32 0.0, %v3072
      %v3074 = vpop.f32.mrb[0].mxu0
      %3075 = vmatprep.mubr.bf16.mxu0 %v2753
      %3076 = vmatmul.mubr.bf16.gmra.mrb[0].mxu0 %v2752
      %v3077 = vpop.f32.mrb[0].mxu0
      %v3078 = vadd.f32 0.0, %v3077
      %v3079 = vpop.f32.mrb[0].mxu0
      %v3080 = vpop.f32.mrb[0].mxu0
      %v3081 = vadd.f32 0.0, %v3080
      %v3082 = vpop.f32.mrb[0].mxu0
      %3083 = vmatprep.mubr.bf16.mxu0 %v2756
      %3084 = vmatmul.mubr.bf16.gmra.mrb[0].mxu0 %v2755
      %v3085 = vpop.f32.mrb[0].mxu0
      %v3086 = vadd.f32 0.0, %v3085
      %v3087 = vpop.f32.mrb[0].mxu0
      %v3088 = vpop.f32.mrb[0].mxu0
      %v3089 = vadd.f32 0.0, %v3088
      %v3090 = vpop.f32.mrb[0].mxu0
      %3091 = vmatprep.mubr.bf16.mxu0 %v2759
      %3092 = vmatmul.mubr.bf16.gmra.mrb[0].mxu0 %v2758
      %v3093 = vpop.f32.mrb[0].mxu0
      %v3094 = vadd.f32 0.0, %v3093
      %v3095 = vpop.f32.mrb[0].mxu0
      %v3096 = vpop.f32.mrb[0].mxu0
      %v3097 = vadd.f32 0.0, %v3096
      %v3098 = vpop.f32.mrb[0].mxu0
      %3099 = vmatprep.mubr.bf16.mxu0 %v2762
      %3100 = vmatmul.mubr.bf16.gmra.mrb[0].mxu0 %v2761
      %v3101 = vpop.f32.mrb[0].mxu0
      %v3102 = vadd.f32 0.0, %v3101
      %v3103 = vpop.f32.mrb[0].mxu0
      %v3104 = vpop.f32.mrb[0].mxu0
      %v3105 = vadd.f32 0.0, %v3104
      %v3106 = vpop.f32.mrb[0].mxu0
      %3107 = vmatprep.mubr.bf16.mxu0 %v2765
      %3108 = vmatmul.mubr.bf16.gmra.mrb[0].mxu0 %v2764
      %v3109 = vpop.f32.mrb[0].mxu0
      %v3110 = vadd.f32 0.0, %v3109
      %v3111 = vpop.f32.mrb[0].mxu0
      %v3112 = vpop.f32.mrb[0].mxu0
      %v3113 = vadd.f32 0.0, %v3112
      %v3114 = vpop.f32.mrb[0].mxu0
      %3115 = vmatprep.mubr.bf16.mxu0 %v2768
      %3116 = vmatmul.mubr.bf16.gmra.mrb[0].mxu0 %v2767
      %v3117 = vpop.f32.mrb[0].mxu0
      %v3118 = vadd.f32 0.0, %v3117
      %v3119 = vpop.f32.mrb[0].mxu0
      %v3120 = vpop.f32.mrb[0].mxu0
      %v3121 = vadd.f32 0.0, %v3120
      %v3122 = vpop.f32.mrb[0].mxu0
      %3123 = vdwg.mxu0
      %3124 = vmatprep.subr.bf16.mxu0 0
      %3125 = vmatpush1.bf16.msra.mxu0 %v2931
      %3126 = vmatprep.subr.bf16.mxu0 0
      %3127 = vmatpush1.bf16.msra.mxu0 %v2932
      %3128 = vmatprep.subr.bf16.mxu0 0
      %3129 = vmatpush1.bf16.msra.mxu0 %v2933
      %3130 = vmatprep.subr.bf16.mxu0 0
      %3131 = vmatpush1.bf16.msra.mxu0 %v2934
      %3132 = vmatprep.subr.bf16.mxu0 0
      %3133 = vmatpush1.bf16.msra.mxu0 %v2935
      %3134 = vmatprep.subr.bf16.mxu0 0
      %3135 = vmatpush1.bf16.msra.mxu0 %v2936
      %3136 = vmatprep.subr.bf16.mxu0 0
      %3137 = vmatpush1.bf16.msra.mxu0 %v2937
      %3138 = vmatprep.subr.bf16.mxu0 0
      %3139 = vmatpush1.bf16.msra.mxu0 %v2938
      %3140 = vmatprep.subr.bf16.mxu0 0
      %3141 = vmatpush1.bf16.msra.mxu0 0
      %3142 = vmatprep.subr.bf16.mxu0 0
      %3143 = vmatpush1.bf16.msra.mxu0 0
      %3144 = vmatprep.subr.bf16.mxu0 0
      %3145 = vmatpush1.bf16.msra.mxu0 0
      %3146 = vmatprep.subr.bf16.mxu0 0
      %3147 = vmatpush1.bf16.msra.mxu0 0
      %3148 = vmatprep.subr.bf16.mxu0 0
      %3149 = vmatpush1.bf16.msra.mxu0 0
      %3150 = vmatprep.subr.bf16.mxu0 0
      %3151 = vmatpush1.bf16.msra.mxu0 0
      %3152 = vmatprep.subr.bf16.mxu0 0
      %3153 = vmatpush1.bf16.msra.mxu0 0
      %3154 = vmatprep.subr.bf16.mxu0 0
      %3155 = vmatpush1.bf16.msra.mxu0 0
      %3156 = vmatprep.mubr.bf16.mxu0 0
      %3157 = vmatmul.mubr.bf16.gmra.mrb[0].mxu0 %v2724
      %v3158 = vpop.f32.mrb[0].mxu0
      %v3159 = vadd.f32 %v2998, %v3158
      %v3160 = vpop.f32.mrb[0].mxu0
      %v3161 = vpop.f32.mrb[0].mxu0
      %v3162 = vadd.f32 %v3001, %v3161
      %v3163 = vpop.f32.mrb[0].mxu0
      %3164 = vmatprep.mubr.bf16.mxu0 0
      %3165 = vmatmul.mubr.bf16.gmra.mrb[0].mxu0 %v2727
      %v3166 = vpop.f32.mrb[0].mxu0
      %v3167 = vadd.f32 %v3006, %v3166
      %v3168 = vpop.f32.mrb[0].mxu0
      %v3169 = vpop.f32.mrb[0].mxu0
      %v3170 = vadd.f32 %v3009, %v3169
      %v3171 = vpop.f32.mrb[0].mxu0
      %3172 = vmatprep.mubr.bf16.mxu0 0
      %3173 = vmatmul.mubr.bf16.gmra.mrb[0].mxu0 %v2730
      %v3174 = vpop.f32.mrb[0].mxu0
      %v3175 = vadd.f32 %v3014, %v3174
      %v3176 = vpop.f32.mrb[0].mxu0
      %v3177 = vpop.f32.mrb[0].mxu0
      %v3178 = vadd.f32 %v3017, %v3177
      %v3179 = vpop.f32.mrb[0].mxu0
      %3180 = vmatprep.mubr.bf16.mxu0 0
      %3181 = vmatmul.mubr.bf16.gmra.mrb[0].mxu0 %v2733
      %v3182 = vpop.f32.mrb[0].mxu0
      %v3183 = vadd.f32 %v3022, %v3182
      %v3184 = vpop.f32.mrb[0].mxu0
      %v3185 = vpop.f32.mrb[0].mxu0
      %v3186 = vadd.f32 %v3025, %v3185
      %v3187 = vpop.f32.mrb[0].mxu0
      %3188 = vmatprep.mubr.bf16.mxu0 0
      %3189 = vmatmul.mubr.bf16.gmra.mrb[0].mxu0 %v2736
      %v3190 = vpop.f32.mrb[0].mxu0
      %v3191 = vadd.f32 %v3030, %v3190
      %v3192 = vpop.f32.mrb[0].mxu0
      %v3193 = vpop.f32.mrb[0].mxu0
      %v3194 = vadd.f32 %v3033, %v3193
      %v3195 = vpop.f32.mrb[0].mxu0
      %3196 = vmatprep.mubr.bf16.mxu0 0
      %3197 = vmatmul.mubr.bf16.gmra.mrb[0].mxu0 %v2739
      %v3198 = vpop.f32.mrb[0].mxu0
      %v3199 = vadd.f32 %v3038, %v3198
      %v3200 = vpop.f32.mrb[0].mxu0
      %v3201 = vpop.f32.mrb[0].mxu0
      %v3202 = vadd.f32 %v3041, %v3201
      %v3203 = vpop.f32.mrb[0].mxu0
      %3204 = vmatprep.mubr.bf16.mxu0 0
      %3205 = vmatmul.mubr.bf16.gmra.mrb[0].mxu0 %v2742
      %v3206 = vpop.f32.mrb[0].mxu0
      %v3207 = vadd.f32 %v3046, %v3206
      %v3208 = vpop.f32.mrb[0].mxu0
      %v3209 = vpop.f32.mrb[0].mxu0
      %v3210 = vadd.f32 %v3049, %v3209
      %v3211 = vpop.f32.mrb[0].mxu0
      %3212 = vmatprep.mubr.bf16.mxu0 0
      %3213 = vmatmul.mubr.bf16.gmra.mrb[0].mxu0 %v2745
      %v3214 = vpop.f32.mrb[0].mxu0
      %v3215 = vadd.f32 %v3054, %v3214
      %v3216 = vpop.f32.mrb[0].mxu0
      %v3217 = vpop.f32.mrb[0].mxu0
      %v3218 = vadd.f32 %v3057, %v3217
      %v3219 = vpop.f32.mrb[0].mxu0
      %3220 = vmatprep.mubr.bf16.mxu0 0
      %3221 = vmatmul.mubr.bf16.gmra.mrb[0].mxu0 %v2748
      %v3222 = vpop.f32.mrb[0].mxu0
      %v3223 = vadd.f32 %v3062, %v3222
      %v3224 = vpop.f32.mrb[0].mxu0
      %v3225 = vpop.f32.mrb[0].mxu0
      %v3226 = vadd.f32 %v3065, %v3225
      %v3227 = vpop.f32.mrb[0].mxu0
      %3228 = vmatprep.mubr.bf16.mxu0 0
      %3229 = vmatmul.mubr.bf16.gmra.mrb[0].mxu0 %v2751
      %v3230 = vpop.f32.mrb[0].mxu0
      %v3231 = vadd.f32 %v3070, %v3230
      %v3232 = vpop.f32.mrb[0].mxu0
      %v3233 = vpop.f32.mrb[0].mxu0
      %v3234 = vadd.f32 %v3073, %v3233
      %v3235 = vpop.f32.mrb[0].mxu0
      %3236 = vmatprep.mubr.bf16.mxu0 0
      %3237 = vmatmul.mubr.bf16.gmra.mrb[0].mxu0 %v2754
      %v3238 = vpop.f32.mrb[0].mxu0
      %v3239 = vadd.f32 %v3078, %v3238
      %v3240 = vpop.f32.mrb[0].mxu0
      %v3241 = vpop.f32.mrb[0].mxu0
      %v3242 = vadd.f32 %v3081, %v3241
      %v3243 = vpop.f32.mrb[0].mxu0
      %3244 = vmatprep.mubr.bf16.mxu0 0
      %3245 = vmatmul.mubr.bf16.gmra.mrb[0].mxu0 %v2757
      %v3246 = vpop.f32.mrb[0].mxu0
      %v3247 = vadd.f32 %v3086, %v3246
      %v3248 = vpop.f32.mrb[0].mxu0
      %v3249 = vpop.f32.mrb[0].mxu0
      %v3250 = vadd.f32 %v3089, %v3249
      %v3251 = vpop.f32.mrb[0].mxu0
      %3252 = vmatprep.mubr.bf16.mxu0 0
      %3253 = vmatmul.mubr.bf16.gmra.mrb[0].mxu0 %v2760
      %v3254 = vpop.f32.mrb[0].mxu0
      %v3255 = vadd.f32 %v3094, %v3254
      %v3256 = vpop.f32.mrb[0].mxu0
      %v3257 = vpop.f32.mrb[0].mxu0
      %v3258 = vadd.f32 %v3097, %v3257
      %v3259 = vpop.f32.mrb[0].mxu0
      %3260 = vmatprep.mubr.bf16.mxu0 0
      %3261 = vmatmul.mubr.bf16.gmra.mrb[0].mxu0 %v2763
      %v3262 = vpop.f32.mrb[0].mxu0
      %v3263 = vadd.f32 %v3102, %v3262
      %v3264 = vpop.f32.mrb[0].mxu0
      %v3265 = vpop.f32.mrb[0].mxu0
      %v3266 = vadd.f32 %v3105, %v3265
      %v3267 = vpop.f32.mrb[0].mxu0
      %3268 = vmatprep.mubr.bf16.mxu0 0
      %3269 = vmatmul.mubr.bf16.gmra.mrb[0].mxu0 %v2766
      %v3270 = vpop.f32.mrb[0].mxu0
      %v3271 = vadd.f32 %v3110, %v3270
      %v3272 = vpop.f32.mrb[0].mxu0
      %v3273 = vpop.f32.mrb[0].mxu0
      %v3274 = vadd.f32 %v3113, %v3273
      %v3275 = vpop.f32.mrb[0].mxu0
      %3276 = vmatprep.mubr.bf16.mxu0 0
      %3277 = vmatmul.mubr.bf16.gmra.mrb[0].mxu0 %v2769
      %v3278 = vpop.f32.mrb[0].mxu0
      %v3279 = vadd.f32 %v3118, %v3278
      %v3280 = vpop.f32.mrb[0].mxu0
      %v3281 = vpop.f32.mrb[0].mxu0
      %v3282 = vadd.f32 %v3121, %v3281
      %v3283 = vpop.f32.mrb[0].mxu0
      %3284 = vdwg.mxu0
      %v3285 = vadd.f32 %v2595, %v3159
      %v3286 = vadd.f32 %v2598, %v3162
      %v3287 = vadd.f32 %v2603, %v3167
      %v3288 = vadd.f32 %v2606, %v3170
      %v3289 = vadd.f32 %v2611, %v3175
      %v3290 = vadd.f32 %v2614, %v3178
      %v3291 = vadd.f32 %v2619, %v3183
      %v3292 = vadd.f32 %v2622, %v3186
      %v3293 = vadd.f32 %v2627, %v3191
      %v3294 = vadd.f32 %v2630, %v3194
      %v3295 = vadd.f32 %v2635, %v3199
      %v3296 = vadd.f32 %v2638, %v3202
      %v3297 = vadd.f32 %v2643, %v3207
      %v3298 = vadd.f32 %v2646, %v3210
      %v3299 = vadd.f32 %v2651, %v3215
      %v3300 = vadd.f32 %v2654, %v3218
      %v3301 = vadd.f32 %v2659, %v3223
      %v3302 = vadd.f32 %v2662, %v3226
      %v3303 = vadd.f32 %v2667, %v3231
      %v3304 = vadd.f32 %v2670, %v3234
      %v3305 = vadd.f32 %v2675, %v3239
      %v3306 = vadd.f32 %v2678, %v3242
      %v3307 = vadd.f32 %v2683, %v3247
      %v3308 = vadd.f32 %v2686, %v3250
      %v3309 = vadd.f32 %v2691, %v3255
      %v3310 = vadd.f32 %v2694, %v3258
      %v3311 = vadd.f32 %v2699, %v3263
      %v3312 = vadd.f32 %v2702, %v3266
      %v3313 = vadd.f32 %v2707, %v3271
      %v3314 = vadd.f32 %v2710, %v3274
      %v3315 = vadd.f32 %v2715, %v3279
      %v3316 = vadd.f32 %v2718, %v3282
      %v3317 = vld [vmem:[%s5] sm:$0x1]
      %v3319 = vlaneseq
      %v3320 = vshrl.u32 %v3319, 7
      %v3321 = vsub.s32 0, %v3320
      %v3322 = vrot.slane %v3317, %v3321
      %v3324 = vadd.f32 %v3285, %v3322
      %v3325 = vadd.f32 %v3286, %v3322
      %v3326 = vadd.f32 %v3287, %v3322
      %v3327 = vadd.f32 %v3288, %v3322
      %v3328 = vadd.f32 %v3289, %v3322
      %v3329 = vadd.f32 %v3290, %v3322
      %v3330 = vadd.f32 %v3291, %v3322
      %v3331 = vadd.f32 %v3292, %v3322
      %v3332 = vadd.f32 %v3293, %v3322
      %v3333 = vadd.f32 %v3294, %v3322
      %v3334 = vadd.f32 %v3295, %v3322
      %v3335 = vadd.f32 %v3296, %v3322
      %v3336 = vadd.f32 %v3297, %v3322
      %v3337 = vadd.f32 %v3298, %v3322
      %v3338 = vadd.f32 %v3299, %v3322
      %v3339 = vadd.f32 %v3300, %v3322
      %v3340 = vadd.f32 %v3301, %v3322
      %v3341 = vadd.f32 %v3302, %v3322
      %v3342 = vadd.f32 %v3303, %v3322
      %v3343 = vadd.f32 %v3304, %v3322
      %v3344 = vadd.f32 %v3305, %v3322
      %v3345 = vadd.f32 %v3306, %v3322
      %v3346 = vadd.f32 %v3307, %v3322
      %v3347 = vadd.f32 %v3308, %v3322
      %v3348 = vadd.f32 %v3309, %v3322
      %v3349 = vadd.f32 %v3310, %v3322
      %v3350 = vadd.f32 %v3311, %v3322
      %v3351 = vadd.f32 %v3312, %v3322
      %v3352 = vadd.f32 %v3313, %v3322
      %v3353 = vadd.f32 %v3314, %v3322
      %v3354 = vadd.f32 %v3315, %v3322
      %v3355 = vadd.f32 %v3316, %v3322
      %3356 = vst.msk [vmem:[%s306] sm:$0xff] %vm433, %v3324
      %3357 = vst.msk [vmem:[%s306 + $0x8] sm:$0xff] %vm433, %v3325
      %3358 = vst.msk [vmem:[%s306 + $0x10] sm:$0xff] %vm433, %v3326
      %3359 = vst.msk [vmem:[%s306 + $0x18] sm:$0xff] %vm433, %v3327
      %3360 = vst.msk [vmem:[%s306 + $0x20] sm:$0xff] %vm433, %v3328
      %3361 = vst.msk [vmem:[%s306 + $0x28] sm:$0xff] %vm433, %v3329
      %3362 = vst.msk [vmem:[%s306 + $0x30] sm:$0xff] %vm433, %v3330
      %3363 = vst.msk [vmem:[%s306 + $0x38] sm:$0xff] %vm433, %v3331
      %3364 = vst.msk [vmem:[%s306 + $0x40] sm:$0xff] %vm433, %v3332
      %3365 = vst.msk [vmem:[%s306 + $0x48] sm:$0xff] %vm433, %v3333
      %3366 = vst.msk [vmem:[%s306 + $0x50] sm:$0xff] %vm433, %v3334
      %3367 = vst.msk [vmem:[%s306 + $0x58] sm:$0xff] %vm433, %v3335
      %3368 = vst.msk [vmem:[%s306 + $0x60] sm:$0xff] %vm433, %v3336
      %3369 = vst.msk [vmem:[%s306 + $0x68] sm:$0xff] %vm433, %v3337
      %3370 = vst.msk [vmem:[%s306 + $0x70] sm:$0xff] %vm433, %v3338
      %3371 = vst.msk [vmem:[%s306 + $0x78] sm:$0xff] %vm433, %v3339
      %3372 = vst.msk [vmem:[%s306 + $0x80] sm:$0xff] %vm433, %v3340
      %3373 = vst.msk [vmem:[%s306 + $0x88] sm:$0xff] %vm433, %v3341
      %3374 = vst.msk [vmem:[%s306 + $0x90] sm:$0xff] %vm433, %v3342
      %3375 = vst.msk [vmem:[%s306 + $0x98] sm:$0xff] %vm433, %v3343
      %3376 = vst.msk [vmem:[%s306 + $0xa0] sm:$0xff] %vm433, %v3344
      %3377 = vst.msk [vmem:[%s306 + $0xa8] sm:$0xff] %vm433, %v3345
      %3378 = vst.msk [vmem:[%s306 + $0xb0] sm:$0xff] %vm433, %v3346
      %3379 = vst.msk [vmem:[%s306 + $0xb8] sm:$0xff] %vm433, %v3347
      %3380 = vst.msk [vmem:[%s306 + $0xc0] sm:$0xff] %vm433, %v3348
      %3381 = vst.msk [vmem:[%s306 + $0xc8] sm:$0xff] %vm433, %v3349
      %3382 = vst.msk [vmem:[%s306 + $0xd0] sm:$0xff] %vm433, %v3350
      %3383 = vst.msk [vmem:[%s306 + $0xd8] sm:$0xff] %vm433, %v3351
      %3384 = vst.msk [vmem:[%s306 + $0xe0] sm:$0xff] %vm433, %v3352
      %3385 = vst.msk [vmem:[%s306 + $0xe8] sm:$0xff] %vm433, %v3353
      %3386 = vst.msk [vmem:[%s306 + $0xf0] sm:$0xff] %vm433, %v3354
      %3387 = vst.msk [vmem:[%s306 + $0xf8] sm:$0xff] %vm433, %v3355
      %p3388 = scmp.lt.s32.totalorder %s19, 1
      %s3389 = scalar_select %p3388, %s19, 1
      %s3390 = smul.addr %s3389, 32
      %s3391 = smul.addr %s3390, 8
      %s3392 = scalar_lea.vmem %s6, %s3391
      %p3393 = scmp.lt.s32.totalorder %s19, 1
      %s3394 = scalar_select %p3393, %s19, 1
      %s3395 = smul.addr %s3394, 32
      %s3396 = smul.addr %s3395, 8
      %s3397 = scalar_lea.vmem %s7, %s3396
      // Predicated region
      $region45: #{tpu_custom_call.1} parent=43 // pred_check
        %p3398 = pneg %p173
      $region46: #{tpu_custom_call.1} parent=43 // pred_check_branch
        %3400 = sbr.rel (%p3398) target = $region48
      $region47: #{tpu_custom_call.1} parent=43 // pred_region
        _
      $region48: #{tpu_custom_call.1} parent=43 // pred_fallthru
        _
      // Predicated region
      $region49: #{tpu_custom_call.1} parent=43 // pred_check
        %p3401 = pneg %p199
      $region50: #{tpu_custom_call.1} parent=43 // pred_check_branch
        %3403 = sbr.rel (%p3401) target = $region52
      $region51: #{tpu_custom_call.1} parent=43 // pred_region
        _
      $region52: #{tpu_custom_call.1} parent=43 // pred_fallthru
        _
    $region44: #{tpu_custom_call.1} parent=5 // pred_fallthru
      _
    %p3404 = scmp.le.s32.totalorder 2, %s14
    // Predicated region
    $region53: #{tpu_custom_call.1} parent=5 // pred_check
      %p3405 = pneg %p3404
    $region54: #{tpu_custom_call.1} parent=5 // pred_check_branch
      %3407 = sbr.rel (%p3405) target = $region56
    $region55: #{tpu_custom_call.1} parent=5 // pred_region
      %s3408 = ssub.s32 %s14, 2
      // Predicated region
      $region57: #{tpu_custom_call.1} parent=55 // pred_check
        %p3409 = pneg %p179
      $region58: #{tpu_custom_call.1} parent=55 // pred_check_branch
        %3411 = sbr.rel (%p3409) target = $region60
      $region59: #{tpu_custom_call.1} parent=55 // pred_region
        %p3412 = scmp.lt.s32.totalorder %s20, 1
        %s3413 = scalar_select %p3412, %s20, 1
        %s3414 = smul.addr %s3413, 32
        %s3415 = smul.addr %s3414, 8
        %s3416 = scalar_lea.vmem %s6, %s3415
      $region60: #{tpu_custom_call.1} parent=55 // pred_fallthru
        _
      // Predicated region
      $region61: #{tpu_custom_call.1} parent=55 // pred_check
        %p3417 = pneg %p205
      $region62: #{tpu_custom_call.1} parent=55 // pred_check_branch
        %3419 = sbr.rel (%p3417) target = $region64
      $region63: #{tpu_custom_call.1} parent=55 // pred_region
        %p3420 = scmp.lt.s32.totalorder %s20, 1
        %s3421 = scalar_select %p3420, %s20, 1
        %s3422 = smul.addr %s3421, 32
        %s3423 = smul.addr %s3422, 8
        %s3424 = scalar_lea.vmem %s7, %s3423
      $region64: #{tpu_custom_call.1} parent=55 // pred_fallthru
        _
    $region56: #{tpu_custom_call.1} parent=5 // pred_fallthru
      _
  $region6: #{tpu_custom_call.1} parent=0 // loop_footer
    %s18 = sadd.s32 1, %s14
  $region7: #{tpu_custom_call.1} parent=0 // loop_footer_branch
    %13 = sbr.rel target = $region3
  $region8: #{tpu_custom_call.1} parent=0 // loop_exit
    _

</llo_original>
